<compile_context>
chip_gen: v7x
topology: tpu7x:2x2x1
jax: 0.10.0
libtpu: 0.0.40
codegen_flags: <defaults>
</compile_context>

<pallas_src>
import functools
import math

import jax
import jax.numpy as jnp
import numpy as np
from jax.experimental import pallas as pl
from jax.experimental.pallas import tpu as pltpu

_SQRT2_INV = 1.0 / math.sqrt(2.0)


# ----------------------------------------------------------------------------- in-kernel helpers
def _gelu_exact(h):
    """Exact (erf-based) GELU matching nn.GELU(); erf via Abramowitz&Stegun 7.1.26
    (|err| <= 1.5e-7), built only from abs/exp/where so it lowers on every TPU gen."""
    z = h * _SQRT2_INV
    az = jnp.abs(z)
    t = 1.0 / (1.0 + 0.3275911 * az)
    poly = ((((1.061405429 * t - 1.453152027) * t + 1.421413741) * t
             - 0.284496736) * t + 0.254829592) * t
    e = 1.0 - poly * jnp.exp(-az * az)
    erf = jnp.where(z >= 0.0, e, -e)
    return 0.5 * h * (1.0 + erf)


def _shift_rows(a):
    """prev[l] = a[l-1] (row 0 zero), nxt[l] = a[l+1] (last row zero): the zero-padded
    k=3 conv neighbours, built in-register (no VMEM scratch round trip)."""
    zrow = jnp.zeros((1, a.shape[1]), a.dtype)
    prev = jnp.concatenate([zrow, a[:-1, :]], axis=0)
    nxt = jnp.concatenate([a[1:, :], zrow], axis=0)
    return prev, nxt


# ----------------------------------------------------------------------------- fused kernel
def _dc_attention_kernel(x_ref,
                         w_qkv_ref, b_qkv_ref,
                         w_conv_ref, b_conv_ref,
                         w_proj_ref, b_proj_ref,
                         w_dw_ref, b_dw_ref,
                         w_pw_tau_ref, b_pw_tau_ref,
                         w_pw_delta_ref, b_pw_delta_ref,
                         w_out_ref, b_out_ref,
                         o_ref, *, n_heads, d_k):
    D = x_ref.shape[2]
    f32 = jnp.float32
    x = x_ref[0]                                              # (L, D)

    # ---- raw Q/K/V in one lane-stacked matmul: x @ [Wq.T | Wk.T | Wv.T] -> (L, 3D)
    w_qkv = w_qkv_ref[...]
    raw = (jnp.dot(x.astype(w_qkv.dtype), w_qkv, preferred_element_type=f32)
           + b_qkv_ref[...])
    v_all = raw[:, 2 * D:]

    # ---- Q / K branches: Conv1d(k=3, pad=1) over seq, then [raw | conv] @ proj
    qk = []
    for br in range(2):                                       # 0: Q, 1: K
        raw_b = raw[:, br * D:(br + 1) * D]
        prev, nxt = _shift_rows(raw_b)
        w0 = w_conv_ref[3 * br + 0]
        w1 = w_conv_ref[3 * br + 1]
        w2 = w_conv_ref[3 * br + 2]
        conv = (jnp.dot(prev.astype(w0.dtype), w0, preferred_element_type=f32)
                + jnp.dot(raw_b.astype(w1.dtype), w1, preferred_element_type=f32)
                + jnp.dot(nxt.astype(w2.dtype), w2, preferred_element_type=f32)
                + b_conv_ref[br])
        pr = w_proj_ref[2 * br + 0]                           # raw half of proj weight
        pc = w_proj_ref[2 * br + 1]                           # conv half of proj weight
        proj = (jnp.dot(raw_b.astype(pr.dtype), pr, preferred_element_type=f32)
                + jnp.dot(conv.astype(pc.dtype), pc, preferred_element_type=f32)
                + b_proj_ref[br])
        qk.append(proj)
    q_all, k_all = qk                                         # each (L, D)

    # ---- tau / delta gate nets: depthwise k=3 (even/odd channel split) -> GELU -> 1x1 -> sigmoid
    x_prev, x_nxt = _shift_rows(x)

    def depthwise(idx):
        taps = w_dw_ref[idx]                                  # (3, D)
        h = (x_prev * taps[0:1, :] + x * taps[1:2, :] + x_nxt * taps[2:3, :]
             + b_dw_ref[idx])
        return _gelu_exact(h)

    tau_acc = None
    for par in range(2):                                      # tau gate = depthwise slots 0,1
        h = depthwise(par)
        wp = w_pw_tau_ref[par]                                # (D, H)
        d = jnp.dot(h.astype(wp.dtype), wp, preferred_element_type=f32)
        tau_acc = d if tau_acc is None else tau_acc + d
    tau = jax.nn.sigmoid(tau_acc + b_pw_tau_ref[...])         # (L, H) per-query scale

    del_acc = None
    for par in range(2):                                      # delta gate = depthwise slots 2,3
        h = depthwise(2 + par)
        wp = w_pw_delta_ref[par]                              # (H, D), pre-transposed on host
        d = jax.lax.dot_general(wp, h.astype(wp.dtype), (((1,), (1,)), ((), ())),
                                preferred_element_type=f32)   # (H, L)
        del_acc = d if del_acc is None else del_acc + d
    delta_t = jax.nn.sigmoid(del_acc + b_pw_delta_ref[...])   # (H, L) per-key bias

    # ---- attention per head; out_proj folded into the head loop (no concat of heads)
    inv_sqrt_dk = 1.0 / math.sqrt(d_k)
    w_out = w_out_ref[...]
    acc = None
    for h in range(n_heads):
        lo, hi = h * d_k, (h + 1) * d_k
        qh = q_all[:, lo:hi]
        kh = k_all[:, lo:hi]
        vh = v_all[:, lo:hi]
        s = jax.lax.dot_general(qh, kh, (((1,), (1,)), ((), ())),
                                preferred_element_type=f32) * inv_sqrt_dk
        s = s * tau[:, h:h + 1] + delta_t[h:h + 1, :]
        s = s - jnp.max(s, axis=-1, keepdims=True)
        p = jnp.exp(s)
        p = p * pl.reciprocal(jnp.sum(p, axis=-1, keepdims=True), approx=True)
        # TODO(synk): mask branch not implemented (mask=None); dropout(attn) identity at inference.
        oh = jnp.dot(p, vh, preferred_element_type=f32)       # (L, d_k)
        contrib = jnp.dot(oh.astype(w_out.dtype), w_out[lo:hi, :],
                          preferred_element_type=f32)         # (L, D)
        acc = contrib if acc is None else acc + contrib
    o_ref[0] = (acc + b_out_ref[...]).astype(o_ref.dtype)


# ----------------------------------------------------------------------------- wrapper
def _const_spec(arr):
    nd = arr.ndim
    return pl.BlockSpec(arr.shape, lambda b, nd=nd: (0,) * nd)


def dc_attention_forward(x, pp, n_heads):
    """Entire DCAttention forward as a single pallas_call with grid=(B,).

    Per-batch working set (x block + all weights + activations) is a few hundred KB —
    comfortably inside VMEM on v5e/v6e (128 MiB) and v7x (64 MiB); all intermediates stay
    on-chip.  The batch axis is 'parallel' so v7x's 2 TensorCores split the grid.
    """
    B, L, D = x.shape
    d_k = D // n_heads
    kern = functools.partial(_dc_attention_kernel, n_heads=n_heads, d_k=d_k)

    weight_order = ('w_qkv', 'b_qkv', 'w_conv', 'b_conv', 'w_proj', 'b_proj',
                    'w_dw', 'b_dw', 'w_pw_tau', 'b_pw_tau',
                    'w_pw_delta', 'b_pw_delta', 'w_out', 'b_out')
    weights = [pp[k] for k in weight_order]

    return pl.pallas_call(
        kern,
        out_shape=jax.ShapeDtypeStruct((B, L, D), jnp.float32),
        grid=(B,),
        in_specs=[pl.BlockSpec((1, L, D), lambda b: (b, 0, 0))]
                 + [_const_spec(w) for w in weights],
        out_specs=pl.BlockSpec((1, L, D), lambda b: (b, 0, 0)),
        compiler_params=pltpu.CompilerParams(dimension_semantics=("parallel",)),
    )(x, *weights)


# ----------------------------------------------------------------------------- param prep (hoisted)
def prepare_params(p, compute_dtype=jnp.float32):
    """Pre-transpose / stack / split all weights ONCE (out of the forward path).
    Matmul weights are cast to compute_dtype (use jnp.bfloat16 on v6e/v7x); biases and
    depthwise taps stay f32 (applied after f32 accumulation)."""
    cm = lambda a: jnp.asarray(a, compute_dtype)
    f32 = lambda a: jnp.asarray(a, jnp.float32)
    D = p['Wq_w'].shape[0]
    H = p['tau_pw_w'].shape[0]

    # stacked raw projection: x @ [Wq.T | Wk.T | Wv.T]
    w_qkv = jnp.concatenate([p['Wq_w'].T, p['Wk_w'].T, p['Wv_w'].T], axis=1)          # (D, 3D)
    b_qkv = jnp.concatenate([p['Wq_b'], p['Wk_b'], p['Wv_b']]).reshape(1, -1)

    def conv_taps(w):                               # (D_out, D_in, 3) -> (3, D_in, D_out)
        return jnp.stack([w[:, :, t].T for t in range(3)], axis=0)

    w_conv = jnp.concatenate([conv_taps(p['conv_q3_w']), conv_taps(p['conv_k3_w'])], 0)  # (6,D,D)
    b_conv = jnp.stack([p['conv_q3_b'], p['conv_k3_b']], 0).reshape(2, 1, D)

    def proj_halves(w):                             # (D, 2D) -> (2, D, D): [raw.T, conv.T]
        return jnp.stack([w[:, :D].T, w[:, D:].T], axis=0)

    w_proj = jnp.concatenate([proj_halves(p['q_proj_w']), proj_halves(p['k_proj_w'])], 0)  # (4,D,D)
    b_proj = jnp.stack([p['q_proj_b'], p['k_proj_b']], 0).reshape(2, 1, D)

    def gate_dw(wd, bd):                            # (2D,1,3),(2D,) -> (2,3,D),(2,1,D) even/odd
        taps = jnp.stack([wd[0::2, 0, :].T, wd[1::2, 0, :].T], axis=0)
        bias = jnp.stack([bd[0::2], bd[1::2]], axis=0).reshape(2, 1, D)
        return taps, bias

    tau_taps, tau_bdw = gate_dw(p['tau_dw_w'], p['tau_dw_b'])
    del_taps, del_bdw = gate_dw(p['delta_dw_w'], p['delta_dw_b'])
    w_dw = jnp.concatenate([tau_taps, del_taps], axis=0)        # (4,3,D): tau even/odd, delta even/odd
    b_dw = jnp.concatenate([tau_bdw, del_bdw], axis=0)          # (4,1,D)

    tau_w1 = p['tau_pw_w'][:, :, 0].T                           # (2D, H)
    w_pw_tau = jnp.stack([tau_w1[0::2, :], tau_w1[1::2, :]], 0)  # (2, D, H)
    del_w1 = p['delta_pw_w'][:, :, 0]                           # (H, 2D)
    w_pw_delta = jnp.stack([del_w1[:, 0::2], del_w1[:, 1::2]], 0)  # (2, H, D) pre-transposed

    return {
        'w_qkv': cm(w_qkv), 'b_qkv': f32(b_qkv),
        'w_conv': cm(w_conv), 'b_conv': f32(b_conv),
        'w_proj': cm(w_proj), 'b_proj': f32(b_proj),
        'w_dw': f32(w_dw), 'b_dw': f32(b_dw),
        'w_pw_tau': cm(w_pw_tau), 'b_pw_tau': f32(p['tau_pw_b']).reshape(1, H),
        'w_pw_delta': cm(w_pw_delta), 'b_pw_delta': f32(p['delta_pw_b']).reshape(H, 1),
        'w_out': cm(p['out_w'].T), 'b_out': f32(p['out_b']).reshape(1, -1),
    }


# ----------------------------------------------------------------------------- reference (pure JAX)
def reference_forward(x, p, n_heads):
    B, L, D = x.shape
    dk = D // n_heads
    hp = jax.lax.Precision.HIGHEST

    def lin(z, w, b):
        return jnp.einsum('...i,oi->...o', z, w, precision=hp) + b

    def conv1d(z_ncl, w, b, groups=1, pad=1):
        y = jax.lax.conv_general_dilated(
            z_ncl, w, window_strides=(1,), padding=[(pad, pad)],
            dimension_numbers=('NCH', 'OIH', 'NCH'),
            feature_group_count=groups, precision=hp)
        return y + b[None, :, None]

    raw_Q = lin(x, p['Wq_w'], p['Wq_b'])
    q_in = raw_Q.transpose(0, 2, 1)
    Q3 = conv1d(q_in, p['conv_q3_w'], p['conv_q3_b'])
    Q_cat = jnp.concatenate([q_in, Q3], axis=1).transpose(0, 2, 1)
    Q = lin(Q_cat, p['q_proj_w'], p['q_proj_b']).reshape(B, L, n_heads, dk).transpose(0, 2, 1, 3)

    raw_K = lin(x, p['Wk_w'], p['Wk_b'])
    k_in = raw_K.transpose(0, 2, 1)
    K3 = conv1d(k_in, p['conv_k3_w'], p['conv_k3_b'])
    K_cat = jnp.concatenate([k_in, K3], axis=1).transpose(0, 2, 1)
    K = lin(K_cat, p['k_proj_w'], p['k_proj_b']).reshape(B, L, n_heads, dk).transpose(0, 2, 1, 3)

    V = lin(x, p['Wv_w'], p['Wv_b']).reshape(B, L, n_heads, dk).transpose(0, 2, 1, 3)

    xc = x.transpose(0, 2, 1)

    def gate(dw_w, dw_b, pw_w, pw_b):
        h = conv1d(xc, dw_w, dw_b, groups=D, pad=1)
        h = 0.5 * h * (1.0 + jax.lax.erf(h * _SQRT2_INV))
        g = conv1d(h, pw_w, pw_b, groups=1, pad=0)
        return jax.nn.sigmoid(g)                               # (B, H, L)

    tau = gate(p['tau_dw_w'], p['tau_dw_b'], p['tau_pw_w'], p['tau_pw_b'])
    delta = gate(p['delta_dw_w'], p['delta_dw_b'], p['delta_pw_w'], p['delta_pw_b'])

    s = jnp.einsum('bhld,bhmd->bhlm', Q, K, precision=hp) / math.sqrt(dk)
    s = s * tau[..., None] + delta[:, :, None, :]
    attn = jax.nn.softmax(s, axis=-1)
    out = jnp.einsum('bhlm,bhmd->bhld', attn, V, precision=hp)
    out = out.transpose(0, 2, 1, 3).reshape(B, L, D)
    return lin(out, p['out_w'], p['out_b'])


# ----------------------------------------------------------------------------- params
def init_params(key, d_model, n_heads, scale=0.1):
    D, H = d_model, n_heads
    shapes = {
        'Wq_w': (D, D), 'Wq_b': (D,),
        'Wk_w': (D, D), 'Wk_b': (D,),
        'Wv_w': (D, D), 'Wv_b': (D,),
        'conv_q3_w': (D, D, 3), 'conv_q3_b': (D,),
        'conv_k3_w': (D, D, 3), 'conv_k3_b': (D,),
        'q_proj_w': (D, 2 * D), 'q_proj_b': (D,),
        'k_proj_w': (D, 2 * D), 'k_proj_b': (D,),
        'tau_dw_w': (2 * D, 1, 3), 'tau_dw_b': (2 * D,),
        'tau_pw_w': (H, 2 * D, 1), 'tau_pw_b': (H,),
        'delta_dw_w': (2 * D, 1, 3), 'delta_dw_b': (2 * D,),
        'delta_pw_w': (H, 2 * D, 1), 'delta_pw_b': (H,),
        'out_w': (D, D), 'out_b': (D,),
    }
    keys = jax.random.split(key, len(shapes))
    return {n: scale * jax.random.normal(k, s, jnp.float32)
            for (n, s), k in zip(shapes.items(), keys)}


if __name__ == "__main__":
    B, L, D, H = 2, 8, 32, 4            # batch, seq, d_model, n_heads (d_k = 8)
    key = jax.random.PRNGKey(0)
    kx, kp = jax.random.split(key)
    x = jax.random.normal(kx, (B, L, D), jnp.float32)
    params = init_params(kp, D, H)
    pp = prepare_params(params)         # pass compute_dtype=jnp.bfloat16 on v6e/v7x

    fwd = jax.jit(functools.partial(dc_attention_forward, n_heads=H))
    out = jax.block_until_ready(fwd(x, pp))

    ref = reference_forward(x, params, H)
    assert out.shape == (B, L, D)
    # tolerance covers default (non-HIGHEST) in-kernel matmul precision, the approx
    # softmax reciprocal (EUP), and the 1.5e-7 erf polynomial.
    np.testing.assert_allclose(np.asarray(out), np.asarray(ref), rtol=2e-2, atol=2e-2)
    print("KERNEL_OK")
</pallas_src>

<mosaic_0001>
module attributes {stable_mosaic.version = 11 : i64} {
  func.func @_dc_attention_kernel(%arg0: i32, %arg1: memref<1x8x32xf32, #tpu.memory_space<vmem>>, %arg2: memref<32x96xf32, #tpu.memory_space<vmem>>, %arg3: memref<1x96xf32, #tpu.memory_space<vmem>>, %arg4: memref<6x32x32xf32, #tpu.memory_space<vmem>>, %arg5: memref<2x1x32xf32, #tpu.memory_space<vmem>>, %arg6: memref<4x32x32xf32, #tpu.memory_space<vmem>>, %arg7: memref<2x1x32xf32, #tpu.memory_space<vmem>>, %arg8: memref<4x3x32xf32, #tpu.memory_space<vmem>>, %arg9: memref<4x1x32xf32, #tpu.memory_space<vmem>>, %arg10: memref<2x32x4xf32, #tpu.memory_space<vmem>>, %arg11: memref<1x4xf32, #tpu.memory_space<vmem>>, %arg12: memref<2x4x32xf32, #tpu.memory_space<vmem>>, %arg13: memref<4x1xf32, #tpu.memory_space<vmem>>, %arg14: memref<32x32xf32, #tpu.memory_space<vmem>>, %arg15: memref<1x32xf32, #tpu.memory_space<vmem>>, %arg16: memref<1x8x32xf32, #tpu.memory_space<vmem>>) attributes {dimension_semantics = [#tpu.dimension_semantics<parallel>], iteration_bounds = array<i64: 2>, scalar_prefetch = 0 : i64, scratch_operands = 0 : i64, tpu.core_type = #tpu.core_type<tc>, window_params = [{transform_indices = @transform_0, window_bounds = array<i64: 1, 8, 32>}, {pipeline_mode = #tpu.pipeline_mode<synchronous>, transform_indices = @transform_1, window_bounds = array<i64: 32, 96>}, {pipeline_mode = #tpu.pipeline_mode<synchronous>, transform_indices = @transform_2, window_bounds = array<i64: 1, 96>}, {pipeline_mode = #tpu.pipeline_mode<synchronous>, transform_indices = @transform_3, window_bounds = array<i64: 6, 32, 32>}, {pipeline_mode = #tpu.pipeline_mode<synchronous>, transform_indices = @transform_4, window_bounds = array<i64: 2, 1, 32>}, {pipeline_mode = #tpu.pipeline_mode<synchronous>, transform_indices = @transform_5, window_bounds = array<i64: 4, 32, 32>}, {pipeline_mode = #tpu.pipeline_mode<synchronous>, transform_indices = @transform_6, window_bounds = array<i64: 2, 1, 32>}, {pipeline_mode = #tpu.pipeline_mode<synchronous>, transform_indices = @transform_7, window_bounds = array<i64: 4, 3, 32>}, {pipeline_mode = #tpu.pipeline_mode<synchronous>, transform_indices = @transform_8, window_bounds = array<i64: 4, 1, 32>}, {pipeline_mode = #tpu.pipeline_mode<synchronous>, transform_indices = @transform_9, window_bounds = array<i64: 2, 32, 4>}, {pipeline_mode = #tpu.pipeline_mode<synchronous>, transform_indices = @transform_10, window_bounds = array<i64: 1, 4>}, {pipeline_mode = #tpu.pipeline_mode<synchronous>, transform_indices = @transform_11, window_bounds = array<i64: 2, 4, 32>}, {pipeline_mode = #tpu.pipeline_mode<synchronous>, transform_indices = @transform_12, window_bounds = array<i64: 4, 1>}, {pipeline_mode = #tpu.pipeline_mode<synchronous>, transform_indices = @transform_13, window_bounds = array<i64: 32, 32>}, {pipeline_mode = #tpu.pipeline_mode<synchronous>, transform_indices = @transform_14, window_bounds = array<i64: 1, 32>}, {transform_indices = @transform_15, window_bounds = array<i64: 1, 8, 32>}]} {
    %c0 = arith.constant 0 : index
    %c0_0 = arith.constant 0 : index
    %c0_1 = arith.constant 0 : index
    %0 = vector.load %arg1[%c0, %c0_0, %c0_1] : memref<1x8x32xf32, #tpu.memory_space<vmem>>, vector<1x8x32xf32>
    %1 = vector.shape_cast %0 : vector<1x8x32xf32> to vector<8x32xf32>
    %c0_2 = arith.constant 0 : index
    %c0_3 = arith.constant 0 : index
    %2 = vector.load %arg2[%c0_2, %c0_3] : memref<32x96xf32, #tpu.memory_space<vmem>>, vector<32x96xf32>
    %cst = arith.constant dense<0.000000e+00> : vector<8x96xf32>
    %3 = tpu.matmul %1, %2, %cst {dimension_numbers = #tpu.dot_dimension_numbers<[1], [0], [0], [1], [0, 0, 1, 1], [], []>} : vector<8x32xf32>, vector<32x96xf32>, vector<8x96xf32> -> vector<8x96xf32>
    %c0_4 = arith.constant 0 : index
    %c0_5 = arith.constant 0 : index
    %4 = vector.load %arg3[%c0_4, %c0_5] : memref<1x96xf32, #tpu.memory_space<vmem>>, vector<1x96xf32>
    %5 = vector.broadcast %4 : vector<1x96xf32> to vector<8x96xf32>
    %6 = arith.addf %3, %5 : vector<8x96xf32>
    %7 = vector.extract_strided_slice %6 {offsets = [0, 64], sizes = [8, 32], strides = [1, 1]} : vector<8x96xf32> to vector<8x32xf32>
    %8 = vector.extract_strided_slice %6 {offsets = [0, 0], sizes = [8, 32], strides = [1, 1]} : vector<8x96xf32> to vector<8x32xf32>
    %cst_6 = arith.constant 0.000000e+00 : f32
    %9 = vector.broadcast %cst_6 : f32 to vector<1x32xf32>
    %10 = vector.extract_strided_slice %8 {offsets = [0, 0], sizes = [7, 32], strides = [1, 1]} : vector<8x32xf32> to vector<7x32xf32>
    %11 = tpu.concatenate %9, %10 in 0 : vector<1x32xf32>, vector<7x32xf32> -> vector<8x32xf32>
    %12 = vector.extract_strided_slice %8 {offsets = [1, 0], sizes = [7, 32], strides = [1, 1]} : vector<8x32xf32> to vector<7x32xf32>
    %13 = tpu.concatenate %12, %9 in 0 : vector<7x32xf32>, vector<1x32xf32> -> vector<8x32xf32>
    %c0_7 = arith.constant 0 : index
    %c0_8 = arith.constant 0 : index
    %c0_9 = arith.constant 0 : index
    %14 = vector.load %arg4[%c0_7, %c0_8, %c0_9] : memref<6x32x32xf32, #tpu.memory_space<vmem>>, vector<1x32x32xf32>
    %15 = vector.shape_cast %14 : vector<1x32x32xf32> to vector<32x32xf32>
    %c1 = arith.constant 1 : index
    %c0_10 = arith.constant 0 : index
    %c0_11 = arith.constant 0 : index
    %16 = vector.load %arg4[%c1, %c0_10, %c0_11] : memref<6x32x32xf32, #tpu.memory_space<vmem>>, vector<1x32x32xf32>
    %17 = vector.shape_cast %16 : vector<1x32x32xf32> to vector<32x32xf32>
    %c2 = arith.constant 2 : index
    %c0_12 = arith.constant 0 : index
    %c0_13 = arith.constant 0 : index
    %18 = vector.load %arg4[%c2, %c0_12, %c0_13] : memref<6x32x32xf32, #tpu.memory_space<vmem>>, vector<1x32x32xf32>
    %19 = vector.shape_cast %18 : vector<1x32x32xf32> to vector<32x32xf32>
    %cst_14 = arith.constant dense<0.000000e+00> : vector<8x32xf32>
    %20 = tpu.matmul %11, %15, %cst_14 {dimension_numbers = #tpu.dot_dimension_numbers<[1], [0], [0], [1], [0, 0, 1, 1], [], []>} : vector<8x32xf32>, vector<32x32xf32>, vector<8x32xf32> -> vector<8x32xf32>
    %cst_15 = arith.constant dense<0.000000e+00> : vector<8x32xf32>
    %21 = tpu.matmul %8, %17, %cst_15 {dimension_numbers = #tpu.dot_dimension_numbers<[1], [0], [0], [1], [0, 0, 1, 1], [], []>} : vector<8x32xf32>, vector<32x32xf32>, vector<8x32xf32> -> vector<8x32xf32>
    %22 = arith.addf %20, %21 : vector<8x32xf32>
    %cst_16 = arith.constant dense<0.000000e+00> : vector<8x32xf32>
    %23 = tpu.matmul %13, %19, %cst_16 {dimension_numbers = #tpu.dot_dimension_numbers<[1], [0], [0], [1], [0, 0, 1, 1], [], []>} : vector<8x32xf32>, vector<32x32xf32>, vector<8x32xf32> -> vector<8x32xf32>
    %24 = arith.addf %22, %23 : vector<8x32xf32>
    %c0_17 = arith.constant 0 : index
    %c0_18 = arith.constant 0 : index
    %c0_19 = arith.constant 0 : index
    %25 = vector.load %arg5[%c0_17, %c0_18, %c0_19] : memref<2x1x32xf32, #tpu.memory_space<vmem>>, vector<1x1x32xf32>
    %26 = vector.shape_cast %25 : vector<1x1x32xf32> to vector<1x32xf32>
    %27 = vector.broadcast %26 : vector<1x32xf32> to vector<8x32xf32>
    %28 = arith.addf %24, %27 : vector<8x32xf32>
    %c0_20 = arith.constant 0 : index
    %c0_21 = arith.constant 0 : index
    %c0_22 = arith.constant 0 : index
    %29 = vector.load %arg6[%c0_20, %c0_21, %c0_22] : memref<4x32x32xf32, #tpu.memory_space<vmem>>, vector<1x32x32xf32>
    %30 = vector.shape_cast %29 : vector<1x32x32xf32> to vector<32x32xf32>
    %c1_23 = arith.constant 1 : index
    %c0_24 = arith.constant 0 : index
    %c0_25 = arith.constant 0 : index
    %31 = vector.load %arg6[%c1_23, %c0_24, %c0_25] : memref<4x32x32xf32, #tpu.memory_space<vmem>>, vector<1x32x32xf32>
    %32 = vector.shape_cast %31 : vector<1x32x32xf32> to vector<32x32xf32>
    %cst_26 = arith.constant dense<0.000000e+00> : vector<8x32xf32>
    %33 = tpu.matmul %8, %30, %cst_26 {dimension_numbers = #tpu.dot_dimension_numbers<[1], [0], [0], [1], [0, 0, 1, 1], [], []>} : vector<8x32xf32>, vector<32x32xf32>, vector<8x32xf32> -> vector<8x32xf32>
    %cst_27 = arith.constant dense<0.000000e+00> : vector<8x32xf32>
    %34 = tpu.matmul %28, %32, %cst_27 {dimension_numbers = #tpu.dot_dimension_numbers<[1], [0], [0], [1], [0, 0, 1, 1], [], []>} : vector<8x32xf32>, vector<32x32xf32>, vector<8x32xf32> -> vector<8x32xf32>
    %35 = arith.addf %33, %34 : vector<8x32xf32>
    %c0_28 = arith.constant 0 : index
    %c0_29 = arith.constant 0 : index
    %c0_30 = arith.constant 0 : index
    %36 = vector.load %arg7[%c0_28, %c0_29, %c0_30] : memref<2x1x32xf32, #tpu.memory_space<vmem>>, vector<1x1x32xf32>
    %37 = vector.shape_cast %36 : vector<1x1x32xf32> to vector<1x32xf32>
    %38 = vector.broadcast %37 : vector<1x32xf32> to vector<8x32xf32>
    %39 = arith.addf %35, %38 : vector<8x32xf32>
    %40 = vector.extract_strided_slice %6 {offsets = [0, 32], sizes = [8, 32], strides = [1, 1]} : vector<8x96xf32> to vector<8x32xf32>
    %cst_31 = arith.constant 0.000000e+00 : f32
    %41 = vector.broadcast %cst_31 : f32 to vector<1x32xf32>
    %42 = vector.extract_strided_slice %40 {offsets = [0, 0], sizes = [7, 32], strides = [1, 1]} : vector<8x32xf32> to vector<7x32xf32>
    %43 = tpu.concatenate %41, %42 in 0 : vector<1x32xf32>, vector<7x32xf32> -> vector<8x32xf32>
    %44 = vector.extract_strided_slice %40 {offsets = [1, 0], sizes = [7, 32], strides = [1, 1]} : vector<8x32xf32> to vector<7x32xf32>
    %45 = tpu.concatenate %44, %41 in 0 : vector<7x32xf32>, vector<1x32xf32> -> vector<8x32xf32>
    %c3 = arith.constant 3 : index
    %c0_32 = arith.constant 0 : index
    %c0_33 = arith.constant 0 : index
    %46 = vector.load %arg4[%c3, %c0_32, %c0_33] : memref<6x32x32xf32, #tpu.memory_space<vmem>>, vector<1x32x32xf32>
    %47 = vector.shape_cast %46 : vector<1x32x32xf32> to vector<32x32xf32>
    %c4 = arith.constant 4 : index
    %c0_34 = arith.constant 0 : index
    %c0_35 = arith.constant 0 : index
    %48 = vector.load %arg4[%c4, %c0_34, %c0_35] : memref<6x32x32xf32, #tpu.memory_space<vmem>>, vector<1x32x32xf32>
    %49 = vector.shape_cast %48 : vector<1x32x32xf32> to vector<32x32xf32>
    %c5 = arith.constant 5 : index
    %c0_36 = arith.constant 0 : index
    %c0_37 = arith.constant 0 : index
    %50 = vector.load %arg4[%c5, %c0_36, %c0_37] : memref<6x32x32xf32, #tpu.memory_space<vmem>>, vector<1x32x32xf32>
    %51 = vector.shape_cast %50 : vector<1x32x32xf32> to vector<32x32xf32>
    %cst_38 = arith.constant dense<0.000000e+00> : vector<8x32xf32>
    %52 = tpu.matmul %43, %47, %cst_38 {dimension_numbers = #tpu.dot_dimension_numbers<[1], [0], [0], [1], [0, 0, 1, 1], [], []>} : vector<8x32xf32>, vector<32x32xf32>, vector<8x32xf32> -> vector<8x32xf32>
    %cst_39 = arith.constant dense<0.000000e+00> : vector<8x32xf32>
    %53 = tpu.matmul %40, %49, %cst_39 {dimension_numbers = #tpu.dot_dimension_numbers<[1], [0], [0], [1], [0, 0, 1, 1], [], []>} : vector<8x32xf32>, vector<32x32xf32>, vector<8x32xf32> -> vector<8x32xf32>
    %54 = arith.addf %52, %53 : vector<8x32xf32>
    %cst_40 = arith.constant dense<0.000000e+00> : vector<8x32xf32>
    %55 = tpu.matmul %45, %51, %cst_40 {dimension_numbers = #tpu.dot_dimension_numbers<[1], [0], [0], [1], [0, 0, 1, 1], [], []>} : vector<8x32xf32>, vector<32x32xf32>, vector<8x32xf32> -> vector<8x32xf32>
    %56 = arith.addf %54, %55 : vector<8x32xf32>
    %c1_41 = arith.constant 1 : index
    %c0_42 = arith.constant 0 : index
    %c0_43 = arith.constant 0 : index
    %57 = vector.load %arg5[%c1_41, %c0_42, %c0_43] : memref<2x1x32xf32, #tpu.memory_space<vmem>>, vector<1x1x32xf32>
    %58 = vector.shape_cast %57 : vector<1x1x32xf32> to vector<1x32xf32>
    %59 = vector.broadcast %58 : vector<1x32xf32> to vector<8x32xf32>
    %60 = arith.addf %56, %59 : vector<8x32xf32>
    %c2_44 = arith.constant 2 : index
    %c0_45 = arith.constant 0 : index
    %c0_46 = arith.constant 0 : index
    %61 = vector.load %arg6[%c2_44, %c0_45, %c0_46] : memref<4x32x32xf32, #tpu.memory_space<vmem>>, vector<1x32x32xf32>
    %62 = vector.shape_cast %61 : vector<1x32x32xf32> to vector<32x32xf32>
    %c3_47 = arith.constant 3 : index
    %c0_48 = arith.constant 0 : index
    %c0_49 = arith.constant 0 : index
    %63 = vector.load %arg6[%c3_47, %c0_48, %c0_49] : memref<4x32x32xf32, #tpu.memory_space<vmem>>, vector<1x32x32xf32>
    %64 = vector.shape_cast %63 : vector<1x32x32xf32> to vector<32x32xf32>
    %cst_50 = arith.constant dense<0.000000e+00> : vector<8x32xf32>
    %65 = tpu.matmul %40, %62, %cst_50 {dimension_numbers = #tpu.dot_dimension_numbers<[1], [0], [0], [1], [0, 0, 1, 1], [], []>} : vector<8x32xf32>, vector<32x32xf32>, vector<8x32xf32> -> vector<8x32xf32>
    %cst_51 = arith.constant dense<0.000000e+00> : vector<8x32xf32>
    %66 = tpu.matmul %60, %64, %cst_51 {dimension_numbers = #tpu.dot_dimension_numbers<[1], [0], [0], [1], [0, 0, 1, 1], [], []>} : vector<8x32xf32>, vector<32x32xf32>, vector<8x32xf32> -> vector<8x32xf32>
    %67 = arith.addf %65, %66 : vector<8x32xf32>
    %c1_52 = arith.constant 1 : index
    %c0_53 = arith.constant 0 : index
    %c0_54 = arith.constant 0 : index
    %68 = vector.load %arg7[%c1_52, %c0_53, %c0_54] : memref<2x1x32xf32, #tpu.memory_space<vmem>>, vector<1x1x32xf32>
    %69 = vector.shape_cast %68 : vector<1x1x32xf32> to vector<1x32xf32>
    %70 = vector.broadcast %69 : vector<1x32xf32> to vector<8x32xf32>
    %71 = arith.addf %67, %70 : vector<8x32xf32>
    %cst_55 = arith.constant 0.000000e+00 : f32
    %72 = vector.broadcast %cst_55 : f32 to vector<1x32xf32>
    %73 = vector.extract_strided_slice %1 {offsets = [0, 0], sizes = [7, 32], strides = [1, 1]} : vector<8x32xf32> to vector<7x32xf32>
    %74 = tpu.concatenate %72, %73 in 0 : vector<1x32xf32>, vector<7x32xf32> -> vector<8x32xf32>
    %75 = vector.extract_strided_slice %1 {offsets = [1, 0], sizes = [7, 32], strides = [1, 1]} : vector<8x32xf32> to vector<7x32xf32>
    %76 = tpu.concatenate %75, %72 in 0 : vector<7x32xf32>, vector<1x32xf32> -> vector<8x32xf32>
    %c0_56 = arith.constant 0 : index
    %c0_57 = arith.constant 0 : index
    %c0_58 = arith.constant 0 : index
    %77 = vector.load %arg8[%c0_56, %c0_57, %c0_58] : memref<4x3x32xf32, #tpu.memory_space<vmem>>, vector<1x3x32xf32>
    %78 = vector.shape_cast %77 : vector<1x3x32xf32> to vector<3x32xf32>
    %79 = vector.extract_strided_slice %78 {offsets = [0, 0], sizes = [1, 32], strides = [1, 1]} : vector<3x32xf32> to vector<1x32xf32>
    %80 = vector.broadcast %79 : vector<1x32xf32> to vector<8x32xf32>
    %81 = arith.mulf %74, %80 : vector<8x32xf32>
    %82 = vector.extract_strided_slice %78 {offsets = [1, 0], sizes = [1, 32], strides = [1, 1]} : vector<3x32xf32> to vector<1x32xf32>
    %83 = vector.broadcast %82 : vector<1x32xf32> to vector<8x32xf32>
    %84 = arith.mulf %1, %83 : vector<8x32xf32>
    %85 = arith.addf %81, %84 : vector<8x32xf32>
    %86 = vector.extract_strided_slice %78 {offsets = [2, 0], sizes = [1, 32], strides = [1, 1]} : vector<3x32xf32> to vector<1x32xf32>
    %87 = vector.broadcast %86 : vector<1x32xf32> to vector<8x32xf32>
    %88 = arith.mulf %76, %87 : vector<8x32xf32>
    %89 = arith.addf %85, %88 : vector<8x32xf32>
    %c0_59 = arith.constant 0 : index
    %c0_60 = arith.constant 0 : index
    %c0_61 = arith.constant 0 : index
    %90 = vector.load %arg9[%c0_59, %c0_60, %c0_61] : memref<4x1x32xf32, #tpu.memory_space<vmem>>, vector<1x1x32xf32>
    %91 = vector.shape_cast %90 : vector<1x1x32xf32> to vector<1x32xf32>
    %92 = vector.broadcast %91 : vector<1x32xf32> to vector<8x32xf32>
    %93 = arith.addf %89, %92 : vector<8x32xf32>
    %cst_62 = arith.constant 0.707106769 : f32
    %94 = vector.broadcast %cst_62 : f32 to vector<8x32xf32>
    %95 = arith.mulf %93, %94 : vector<8x32xf32>
    %96 = math.absf %95 : vector<8x32xf32>
    %cst_63 = arith.constant 0.327591091 : f32
    %97 = vector.broadcast %cst_63 : f32 to vector<8x32xf32>
    %98 = arith.mulf %97, %96 : vector<8x32xf32>
    %cst_64 = arith.constant 1.000000e+00 : f32
    %99 = vector.broadcast %cst_64 : f32 to vector<8x32xf32>
    %100 = arith.addf %99, %98 : vector<8x32xf32>
    %cst_65 = arith.constant 1.000000e+00 : f32
    %101 = vector.broadcast %cst_65 : f32 to vector<8x32xf32>
    %102 = arith.divf %101, %100 : vector<8x32xf32>
    %cst_66 = arith.constant 1.06140542 : f32
    %103 = vector.broadcast %cst_66 : f32 to vector<8x32xf32>
    %104 = arith.mulf %103, %102 : vector<8x32xf32>
    %cst_67 = arith.constant 1.45315206 : f32
    %105 = vector.broadcast %cst_67 : f32 to vector<8x32xf32>
    %106 = arith.subf %104, %105 : vector<8x32xf32>
    %107 = arith.mulf %106, %102 : vector<8x32xf32>
    %cst_68 = arith.constant 1.42141378 : f32
    %108 = vector.broadcast %cst_68 : f32 to vector<8x32xf32>
    %109 = arith.addf %107, %108 : vector<8x32xf32>
    %110 = arith.mulf %109, %102 : vector<8x32xf32>
    %cst_69 = arith.constant 0.284496725 : f32
    %111 = vector.broadcast %cst_69 : f32 to vector<8x32xf32>
    %112 = arith.subf %110, %111 : vector<8x32xf32>
    %113 = arith.mulf %112, %102 : vector<8x32xf32>
    %cst_70 = arith.constant 0.254829586 : f32
    %114 = vector.broadcast %cst_70 : f32 to vector<8x32xf32>
    %115 = arith.addf %113, %114 : vector<8x32xf32>
    %116 = arith.mulf %115, %102 : vector<8x32xf32>
    %cst_71 = arith.constant 0.000000e+00 : f32
    %117 = vector.broadcast %cst_71 : f32 to vector<8x32xf32>
    %118 = arith.subf %117, %96 : vector<8x32xf32>
    %119 = arith.mulf %118, %96 : vector<8x32xf32>
    %120 = math.exp %119 : vector<8x32xf32>
    %121 = arith.mulf %116, %120 : vector<8x32xf32>
    %cst_72 = arith.constant 1.000000e+00 : f32
    %122 = vector.broadcast %cst_72 : f32 to vector<8x32xf32>
    %123 = arith.subf %122, %121 : vector<8x32xf32>
    %cst_73 = arith.constant 0.000000e+00 : f32
    %124 = vector.broadcast %cst_73 : f32 to vector<8x32xf32>
    %125 = arith.cmpf oge, %95, %124 : vector<8x32xf32>
    %cst_74 = arith.constant 0.000000e+00 : f32
    %126 = vector.broadcast %cst_74 : f32 to vector<8x32xf32>
    %127 = arith.subf %126, %123 : vector<8x32xf32>
    %128 = arith.select %125, %123, %127 : vector<8x32xi1>, vector<8x32xf32>
    %cst_75 = arith.constant 5.000000e-01 : f32
    %129 = vector.broadcast %cst_75 : f32 to vector<8x32xf32>
    %130 = arith.mulf %129, %93 : vector<8x32xf32>
    %cst_76 = arith.constant 1.000000e+00 : f32
    %131 = vector.broadcast %cst_76 : f32 to vector<8x32xf32>
    %132 = arith.addf %131, %128 : vector<8x32xf32>
    %133 = arith.mulf %130, %132 : vector<8x32xf32>
    %c0_77 = arith.constant 0 : index
    %c0_78 = arith.constant 0 : index
    %c0_79 = arith.constant 0 : index
    %134 = vector.load %arg10[%c0_77, %c0_78, %c0_79] : memref<2x32x4xf32, #tpu.memory_space<vmem>>, vector<1x32x4xf32>
    %135 = vector.shape_cast %134 : vector<1x32x4xf32> to vector<32x4xf32>
    %cst_80 = arith.constant dense<0.000000e+00> : vector<8x4xf32>
    %136 = tpu.matmul %133, %135, %cst_80 {dimension_numbers = #tpu.dot_dimension_numbers<[1], [0], [0], [1], [0, 0, 1, 1], [], []>} : vector<8x32xf32>, vector<32x4xf32>, vector<8x4xf32> -> vector<8x4xf32>
    %c1_81 = arith.constant 1 : index
    %c0_82 = arith.constant 0 : index
    %c0_83 = arith.constant 0 : index
    %137 = vector.load %arg8[%c1_81, %c0_82, %c0_83] : memref<4x3x32xf32, #tpu.memory_space<vmem>>, vector<1x3x32xf32>
    %138 = vector.shape_cast %137 : vector<1x3x32xf32> to vector<3x32xf32>
    %139 = vector.extract_strided_slice %138 {offsets = [0, 0], sizes = [1, 32], strides = [1, 1]} : vector<3x32xf32> to vector<1x32xf32>
    %140 = vector.broadcast %139 : vector<1x32xf32> to vector<8x32xf32>
    %141 = arith.mulf %74, %140 : vector<8x32xf32>
    %142 = vector.extract_strided_slice %138 {offsets = [1, 0], sizes = [1, 32], strides = [1, 1]} : vector<3x32xf32> to vector<1x32xf32>
    %143 = vector.broadcast %142 : vector<1x32xf32> to vector<8x32xf32>
    %144 = arith.mulf %1, %143 : vector<8x32xf32>
    %145 = arith.addf %141, %144 : vector<8x32xf32>
    %146 = vector.extract_strided_slice %138 {offsets = [2, 0], sizes = [1, 32], strides = [1, 1]} : vector<3x32xf32> to vector<1x32xf32>
    %147 = vector.broadcast %146 : vector<1x32xf32> to vector<8x32xf32>
    %148 = arith.mulf %76, %147 : vector<8x32xf32>
    %149 = arith.addf %145, %148 : vector<8x32xf32>
    %c1_84 = arith.constant 1 : index
    %c0_85 = arith.constant 0 : index
    %c0_86 = arith.constant 0 : index
    %150 = vector.load %arg9[%c1_84, %c0_85, %c0_86] : memref<4x1x32xf32, #tpu.memory_space<vmem>>, vector<1x1x32xf32>
    %151 = vector.shape_cast %150 : vector<1x1x32xf32> to vector<1x32xf32>
    %152 = vector.broadcast %151 : vector<1x32xf32> to vector<8x32xf32>
    %153 = arith.addf %149, %152 : vector<8x32xf32>
    %cst_87 = arith.constant 0.707106769 : f32
    %154 = vector.broadcast %cst_87 : f32 to vector<8x32xf32>
    %155 = arith.mulf %153, %154 : vector<8x32xf32>
    %156 = math.absf %155 : vector<8x32xf32>
    %cst_88 = arith.constant 0.327591091 : f32
    %157 = vector.broadcast %cst_88 : f32 to vector<8x32xf32>
    %158 = arith.mulf %157, %156 : vector<8x32xf32>
    %cst_89 = arith.constant 1.000000e+00 : f32
    %159 = vector.broadcast %cst_89 : f32 to vector<8x32xf32>
    %160 = arith.addf %159, %158 : vector<8x32xf32>
    %cst_90 = arith.constant 1.000000e+00 : f32
    %161 = vector.broadcast %cst_90 : f32 to vector<8x32xf32>
    %162 = arith.divf %161, %160 : vector<8x32xf32>
    %cst_91 = arith.constant 1.06140542 : f32
    %163 = vector.broadcast %cst_91 : f32 to vector<8x32xf32>
    %164 = arith.mulf %163, %162 : vector<8x32xf32>
    %cst_92 = arith.constant 1.45315206 : f32
    %165 = vector.broadcast %cst_92 : f32 to vector<8x32xf32>
    %166 = arith.subf %164, %165 : vector<8x32xf32>
    %167 = arith.mulf %166, %162 : vector<8x32xf32>
    %cst_93 = arith.constant 1.42141378 : f32
    %168 = vector.broadcast %cst_93 : f32 to vector<8x32xf32>
    %169 = arith.addf %167, %168 : vector<8x32xf32>
    %170 = arith.mulf %169, %162 : vector<8x32xf32>
    %cst_94 = arith.constant 0.284496725 : f32
    %171 = vector.broadcast %cst_94 : f32 to vector<8x32xf32>
    %172 = arith.subf %170, %171 : vector<8x32xf32>
    %173 = arith.mulf %172, %162 : vector<8x32xf32>
    %cst_95 = arith.constant 0.254829586 : f32
    %174 = vector.broadcast %cst_95 : f32 to vector<8x32xf32>
    %175 = arith.addf %173, %174 : vector<8x32xf32>
    %176 = arith.mulf %175, %162 : vector<8x32xf32>
    %cst_96 = arith.constant 0.000000e+00 : f32
    %177 = vector.broadcast %cst_96 : f32 to vector<8x32xf32>
    %178 = arith.subf %177, %156 : vector<8x32xf32>
    %179 = arith.mulf %178, %156 : vector<8x32xf32>
    %180 = math.exp %179 : vector<8x32xf32>
    %181 = arith.mulf %176, %180 : vector<8x32xf32>
    %cst_97 = arith.constant 1.000000e+00 : f32
    %182 = vector.broadcast %cst_97 : f32 to vector<8x32xf32>
    %183 = arith.subf %182, %181 : vector<8x32xf32>
    %cst_98 = arith.constant 0.000000e+00 : f32
    %184 = vector.broadcast %cst_98 : f32 to vector<8x32xf32>
    %185 = arith.cmpf oge, %155, %184 : vector<8x32xf32>
    %cst_99 = arith.constant 0.000000e+00 : f32
    %186 = vector.broadcast %cst_99 : f32 to vector<8x32xf32>
    %187 = arith.subf %186, %183 : vector<8x32xf32>
    %188 = arith.select %185, %183, %187 : vector<8x32xi1>, vector<8x32xf32>
    %cst_100 = arith.constant 5.000000e-01 : f32
    %189 = vector.broadcast %cst_100 : f32 to vector<8x32xf32>
    %190 = arith.mulf %189, %153 : vector<8x32xf32>
    %cst_101 = arith.constant 1.000000e+00 : f32
    %191 = vector.broadcast %cst_101 : f32 to vector<8x32xf32>
    %192 = arith.addf %191, %188 : vector<8x32xf32>
    %193 = arith.mulf %190, %192 : vector<8x32xf32>
    %c1_102 = arith.constant 1 : index
    %c0_103 = arith.constant 0 : index
    %c0_104 = arith.constant 0 : index
    %194 = vector.load %arg10[%c1_102, %c0_103, %c0_104] : memref<2x32x4xf32, #tpu.memory_space<vmem>>, vector<1x32x4xf32>
    %195 = vector.shape_cast %194 : vector<1x32x4xf32> to vector<32x4xf32>
    %cst_105 = arith.constant dense<0.000000e+00> : vector<8x4xf32>
    %196 = tpu.matmul %193, %195, %cst_105 {dimension_numbers = #tpu.dot_dimension_numbers<[1], [0], [0], [1], [0, 0, 1, 1], [], []>} : vector<8x32xf32>, vector<32x4xf32>, vector<8x4xf32> -> vector<8x4xf32>
    %197 = arith.addf %136, %196 : vector<8x4xf32>
    %c0_106 = arith.constant 0 : index
    %c0_107 = arith.constant 0 : index
    %198 = vector.load %arg11[%c0_106, %c0_107] : memref<1x4xf32, #tpu.memory_space<vmem>>, vector<1x4xf32>
    %199 = vector.broadcast %198 : vector<1x4xf32> to vector<8x4xf32>
    %200 = arith.addf %197, %199 : vector<8x4xf32>
    %201 = arith.negf %200 : vector<8x4xf32>
    %202 = math.exp %201 : vector<8x4xf32>
    %cst_108 = arith.constant 1.000000e+00 : f32
    %203 = vector.broadcast %cst_108 : f32 to vector<8x4xf32>
    %204 = arith.addf %203, %202 : vector<8x4xf32>
    %205 = arith.divf %203, %204 : vector<8x4xf32>
    %c2_109 = arith.constant 2 : index
    %c0_110 = arith.constant 0 : index
    %c0_111 = arith.constant 0 : index
    %206 = vector.load %arg8[%c2_109, %c0_110, %c0_111] : memref<4x3x32xf32, #tpu.memory_space<vmem>>, vector<1x3x32xf32>
    %207 = vector.shape_cast %206 : vector<1x3x32xf32> to vector<3x32xf32>
    %208 = vector.extract_strided_slice %207 {offsets = [0, 0], sizes = [1, 32], strides = [1, 1]} : vector<3x32xf32> to vector<1x32xf32>
    %209 = vector.broadcast %208 : vector<1x32xf32> to vector<8x32xf32>
    %210 = arith.mulf %74, %209 : vector<8x32xf32>
    %211 = vector.extract_strided_slice %207 {offsets = [1, 0], sizes = [1, 32], strides = [1, 1]} : vector<3x32xf32> to vector<1x32xf32>
    %212 = vector.broadcast %211 : vector<1x32xf32> to vector<8x32xf32>
    %213 = arith.mulf %1, %212 : vector<8x32xf32>
    %214 = arith.addf %210, %213 : vector<8x32xf32>
    %215 = vector.extract_strided_slice %207 {offsets = [2, 0], sizes = [1, 32], strides = [1, 1]} : vector<3x32xf32> to vector<1x32xf32>
    %216 = vector.broadcast %215 : vector<1x32xf32> to vector<8x32xf32>
    %217 = arith.mulf %76, %216 : vector<8x32xf32>
    %218 = arith.addf %214, %217 : vector<8x32xf32>
    %c2_112 = arith.constant 2 : index
    %c0_113 = arith.constant 0 : index
    %c0_114 = arith.constant 0 : index
    %219 = vector.load %arg9[%c2_112, %c0_113, %c0_114] : memref<4x1x32xf32, #tpu.memory_space<vmem>>, vector<1x1x32xf32>
    %220 = vector.shape_cast %219 : vector<1x1x32xf32> to vector<1x32xf32>
    %221 = vector.broadcast %220 : vector<1x32xf32> to vector<8x32xf32>
    %222 = arith.addf %218, %221 : vector<8x32xf32>
    %cst_115 = arith.constant 0.707106769 : f32
    %223 = vector.broadcast %cst_115 : f32 to vector<8x32xf32>
    %224 = arith.mulf %222, %223 : vector<8x32xf32>
    %225 = math.absf %224 : vector<8x32xf32>
    %cst_116 = arith.constant 0.327591091 : f32
    %226 = vector.broadcast %cst_116 : f32 to vector<8x32xf32>
    %227 = arith.mulf %226, %225 : vector<8x32xf32>
    %cst_117 = arith.constant 1.000000e+00 : f32
    %228 = vector.broadcast %cst_117 : f32 to vector<8x32xf32>
    %229 = arith.addf %228, %227 : vector<8x32xf32>
    %cst_118 = arith.constant 1.000000e+00 : f32
    %230 = vector.broadcast %cst_118 : f32 to vector<8x32xf32>
    %231 = arith.divf %230, %229 : vector<8x32xf32>
    %cst_119 = arith.constant 1.06140542 : f32
    %232 = vector.broadcast %cst_119 : f32 to vector<8x32xf32>
    %233 = arith.mulf %232, %231 : vector<8x32xf32>
    %cst_120 = arith.constant 1.45315206 : f32
    %234 = vector.broadcast %cst_120 : f32 to vector<8x32xf32>
    %235 = arith.subf %233, %234 : vector<8x32xf32>
    %236 = arith.mulf %235, %231 : vector<8x32xf32>
    %cst_121 = arith.constant 1.42141378 : f32
    %237 = vector.broadcast %cst_121 : f32 to vector<8x32xf32>
    %238 = arith.addf %236, %237 : vector<8x32xf32>
    %239 = arith.mulf %238, %231 : vector<8x32xf32>
    %cst_122 = arith.constant 0.284496725 : f32
    %240 = vector.broadcast %cst_122 : f32 to vector<8x32xf32>
    %241 = arith.subf %239, %240 : vector<8x32xf32>
    %242 = arith.mulf %241, %231 : vector<8x32xf32>
    %cst_123 = arith.constant 0.254829586 : f32
    %243 = vector.broadcast %cst_123 : f32 to vector<8x32xf32>
    %244 = arith.addf %242, %243 : vector<8x32xf32>
    %245 = arith.mulf %244, %231 : vector<8x32xf32>
    %cst_124 = arith.constant 0.000000e+00 : f32
    %246 = vector.broadcast %cst_124 : f32 to vector<8x32xf32>
    %247 = arith.subf %246, %225 : vector<8x32xf32>
    %248 = arith.mulf %247, %225 : vector<8x32xf32>
    %249 = math.exp %248 : vector<8x32xf32>
    %250 = arith.mulf %245, %249 : vector<8x32xf32>
    %cst_125 = arith.constant 1.000000e+00 : f32
    %251 = vector.broadcast %cst_125 : f32 to vector<8x32xf32>
    %252 = arith.subf %251, %250 : vector<8x32xf32>
    %cst_126 = arith.constant 0.000000e+00 : f32
    %253 = vector.broadcast %cst_126 : f32 to vector<8x32xf32>
    %254 = arith.cmpf oge, %224, %253 : vector<8x32xf32>
    %cst_127 = arith.constant 0.000000e+00 : f32
    %255 = vector.broadcast %cst_127 : f32 to vector<8x32xf32>
    %256 = arith.subf %255, %252 : vector<8x32xf32>
    %257 = arith.select %254, %252, %256 : vector<8x32xi1>, vector<8x32xf32>
    %cst_128 = arith.constant 5.000000e-01 : f32
    %258 = vector.broadcast %cst_128 : f32 to vector<8x32xf32>
    %259 = arith.mulf %258, %222 : vector<8x32xf32>
    %cst_129 = arith.constant 1.000000e+00 : f32
    %260 = vector.broadcast %cst_129 : f32 to vector<8x32xf32>
    %261 = arith.addf %260, %257 : vector<8x32xf32>
    %262 = arith.mulf %259, %261 : vector<8x32xf32>
    %c0_130 = arith.constant 0 : index
    %c0_131 = arith.constant 0 : index
    %c0_132 = arith.constant 0 : index
    %263 = vector.load %arg12[%c0_130, %c0_131, %c0_132] : memref<2x4x32xf32, #tpu.memory_space<vmem>>, vector<1x4x32xf32>
    %264 = vector.shape_cast %263 : vector<1x4x32xf32> to vector<4x32xf32>
    %cst_133 = arith.constant dense<0.000000e+00> : vector<4x8xf32>
    %265 = tpu.matmul %264, %262, %cst_133 {dimension_numbers = #tpu.dot_dimension_numbers<[1], [1], [0], [0], [0, 0, 1, 0], [], []>} : vector<4x32xf32>, vector<8x32xf32>, vector<4x8xf32> -> vector<4x8xf32>
    %c3_134 = arith.constant 3 : index
    %c0_135 = arith.constant 0 : index
    %c0_136 = arith.constant 0 : index
    %266 = vector.load %arg8[%c3_134, %c0_135, %c0_136] : memref<4x3x32xf32, #tpu.memory_space<vmem>>, vector<1x3x32xf32>
    %267 = vector.shape_cast %266 : vector<1x3x32xf32> to vector<3x32xf32>
    %268 = vector.extract_strided_slice %267 {offsets = [0, 0], sizes = [1, 32], strides = [1, 1]} : vector<3x32xf32> to vector<1x32xf32>
    %269 = vector.broadcast %268 : vector<1x32xf32> to vector<8x32xf32>
    %270 = arith.mulf %74, %269 : vector<8x32xf32>
    %271 = vector.extract_strided_slice %267 {offsets = [1, 0], sizes = [1, 32], strides = [1, 1]} : vector<3x32xf32> to vector<1x32xf32>
    %272 = vector.broadcast %271 : vector<1x32xf32> to vector<8x32xf32>
    %273 = arith.mulf %1, %272 : vector<8x32xf32>
    %274 = arith.addf %270, %273 : vector<8x32xf32>
    %275 = vector.extract_strided_slice %267 {offsets = [2, 0], sizes = [1, 32], strides = [1, 1]} : vector<3x32xf32> to vector<1x32xf32>
    %276 = vector.broadcast %275 : vector<1x32xf32> to vector<8x32xf32>
    %277 = arith.mulf %76, %276 : vector<8x32xf32>
    %278 = arith.addf %274, %277 : vector<8x32xf32>
    %c3_137 = arith.constant 3 : index
    %c0_138 = arith.constant 0 : index
    %c0_139 = arith.constant 0 : index
    %279 = vector.load %arg9[%c3_137, %c0_138, %c0_139] : memref<4x1x32xf32, #tpu.memory_space<vmem>>, vector<1x1x32xf32>
    %280 = vector.shape_cast %279 : vector<1x1x32xf32> to vector<1x32xf32>
    %281 = vector.broadcast %280 : vector<1x32xf32> to vector<8x32xf32>
    %282 = arith.addf %278, %281 : vector<8x32xf32>
    %cst_140 = arith.constant 0.707106769 : f32
    %283 = vector.broadcast %cst_140 : f32 to vector<8x32xf32>
    %284 = arith.mulf %282, %283 : vector<8x32xf32>
    %285 = math.absf %284 : vector<8x32xf32>
    %cst_141 = arith.constant 0.327591091 : f32
    %286 = vector.broadcast %cst_141 : f32 to vector<8x32xf32>
    %287 = arith.mulf %286, %285 : vector<8x32xf32>
    %cst_142 = arith.constant 1.000000e+00 : f32
    %288 = vector.broadcast %cst_142 : f32 to vector<8x32xf32>
    %289 = arith.addf %288, %287 : vector<8x32xf32>
    %cst_143 = arith.constant 1.000000e+00 : f32
    %290 = vector.broadcast %cst_143 : f32 to vector<8x32xf32>
    %291 = arith.divf %290, %289 : vector<8x32xf32>
    %cst_144 = arith.constant 1.06140542 : f32
    %292 = vector.broadcast %cst_144 : f32 to vector<8x32xf32>
    %293 = arith.mulf %292, %291 : vector<8x32xf32>
    %cst_145 = arith.constant 1.45315206 : f32
    %294 = vector.broadcast %cst_145 : f32 to vector<8x32xf32>
    %295 = arith.subf %293, %294 : vector<8x32xf32>
    %296 = arith.mulf %295, %291 : vector<8x32xf32>
    %cst_146 = arith.constant 1.42141378 : f32
    %297 = vector.broadcast %cst_146 : f32 to vector<8x32xf32>
    %298 = arith.addf %296, %297 : vector<8x32xf32>
    %299 = arith.mulf %298, %291 : vector<8x32xf32>
    %cst_147 = arith.constant 0.284496725 : f32
    %300 = vector.broadcast %cst_147 : f32 to vector<8x32xf32>
    %301 = arith.subf %299, %300 : vector<8x32xf32>
    %302 = arith.mulf %301, %291 : vector<8x32xf32>
    %cst_148 = arith.constant 0.254829586 : f32
    %303 = vector.broadcast %cst_148 : f32 to vector<8x32xf32>
    %304 = arith.addf %302, %303 : vector<8x32xf32>
    %305 = arith.mulf %304, %291 : vector<8x32xf32>
    %cst_149 = arith.constant 0.000000e+00 : f32
    %306 = vector.broadcast %cst_149 : f32 to vector<8x32xf32>
    %307 = arith.subf %306, %285 : vector<8x32xf32>
    %308 = arith.mulf %307, %285 : vector<8x32xf32>
    %309 = math.exp %308 : vector<8x32xf32>
    %310 = arith.mulf %305, %309 : vector<8x32xf32>
    %cst_150 = arith.constant 1.000000e+00 : f32
    %311 = vector.broadcast %cst_150 : f32 to vector<8x32xf32>
    %312 = arith.subf %311, %310 : vector<8x32xf32>
    %cst_151 = arith.constant 0.000000e+00 : f32
    %313 = vector.broadcast %cst_151 : f32 to vector<8x32xf32>
    %314 = arith.cmpf oge, %284, %313 : vector<8x32xf32>
    %cst_152 = arith.constant 0.000000e+00 : f32
    %315 = vector.broadcast %cst_152 : f32 to vector<8x32xf32>
    %316 = arith.subf %315, %312 : vector<8x32xf32>
    %317 = arith.select %314, %312, %316 : vector<8x32xi1>, vector<8x32xf32>
    %cst_153 = arith.constant 5.000000e-01 : f32
    %318 = vector.broadcast %cst_153 : f32 to vector<8x32xf32>
    %319 = arith.mulf %318, %282 : vector<8x32xf32>
    %cst_154 = arith.constant 1.000000e+00 : f32
    %320 = vector.broadcast %cst_154 : f32 to vector<8x32xf32>
    %321 = arith.addf %320, %317 : vector<8x32xf32>
    %322 = arith.mulf %319, %321 : vector<8x32xf32>
    %c1_155 = arith.constant 1 : index
    %c0_156 = arith.constant 0 : index
    %c0_157 = arith.constant 0 : index
    %323 = vector.load %arg12[%c1_155, %c0_156, %c0_157] : memref<2x4x32xf32, #tpu.memory_space<vmem>>, vector<1x4x32xf32>
    %324 = vector.shape_cast %323 : vector<1x4x32xf32> to vector<4x32xf32>
    %cst_158 = arith.constant dense<0.000000e+00> : vector<4x8xf32>
    %325 = tpu.matmul %324, %322, %cst_158 {dimension_numbers = #tpu.dot_dimension_numbers<[1], [1], [0], [0], [0, 0, 1, 0], [], []>} : vector<4x32xf32>, vector<8x32xf32>, vector<4x8xf32> -> vector<4x8xf32>
    %326 = arith.addf %265, %325 : vector<4x8xf32>
    %c0_159 = arith.constant 0 : index
    %c0_160 = arith.constant 0 : index
    %327 = vector.load %arg13[%c0_159, %c0_160] : memref<4x1xf32, #tpu.memory_space<vmem>>, vector<4x1xf32>
    %328 = vector.broadcast %327 : vector<4x1xf32> to vector<4x8xf32>
    %329 = arith.addf %326, %328 : vector<4x8xf32>
    %330 = arith.negf %329 : vector<4x8xf32>
    %331 = math.exp %330 : vector<4x8xf32>
    %cst_161 = arith.constant 1.000000e+00 : f32
    %332 = vector.broadcast %cst_161 : f32 to vector<4x8xf32>
    %333 = arith.addf %332, %331 : vector<4x8xf32>
    %334 = arith.divf %332, %333 : vector<4x8xf32>
    %c0_162 = arith.constant 0 : index
    %c0_163 = arith.constant 0 : index
    %335 = vector.load %arg14[%c0_162, %c0_163] : memref<32x32xf32, #tpu.memory_space<vmem>>, vector<32x32xf32>
    %336 = vector.extract_strided_slice %39 {offsets = [0, 0], sizes = [8, 8], strides = [1, 1]} : vector<8x32xf32> to vector<8x8xf32>
    %337 = vector.extract_strided_slice %71 {offsets = [0, 0], sizes = [8, 8], strides = [1, 1]} : vector<8x32xf32> to vector<8x8xf32>
    %338 = vector.extract_strided_slice %7 {offsets = [0, 0], sizes = [8, 8], strides = [1, 1]} : vector<8x32xf32> to vector<8x8xf32>
    %cst_164 = arith.constant dense<0.000000e+00> : vector<8x8xf32>
    %339 = tpu.matmul %336, %337, %cst_164 {dimension_numbers = #tpu.dot_dimension_numbers<[1], [1], [0], [0], [0, 0, 1, 0], [], []>} : vector<8x8xf32>, vector<8x8xf32>, vector<8x8xf32> -> vector<8x8xf32>
    %cst_165 = arith.constant 0.353553385 : f32
    %340 = vector.broadcast %cst_165 : f32 to vector<8x8xf32>
    %341 = arith.mulf %339, %340 : vector<8x8xf32>
    %342 = vector.extract_strided_slice %205 {offsets = [0, 0], sizes = [8, 1], strides = [1, 1]} : vector<8x4xf32> to vector<8x1xf32>
    %343 = vector.broadcast %342 : vector<8x1xf32> to vector<8x8xf32>
    %344 = arith.mulf %341, %343 : vector<8x8xf32>
    %345 = vector.extract_strided_slice %334 {offsets = [0, 0], sizes = [1, 8], strides = [1, 1]} : vector<4x8xf32> to vector<1x8xf32>
    %346 = vector.broadcast %345 : vector<1x8xf32> to vector<8x8xf32>
    %347 = arith.addf %344, %346 : vector<8x8xf32>
    %cst_166 = arith.constant dense<0xFF800000> : vector<8xf32>
    %348 = vector.multi_reduction <maximumf>, %347, %cst_166 [1] : vector<8x8xf32> to vector<8xf32>
    %349 = vector.shape_cast %348 : vector<8xf32> to vector<8x1xf32>
    %350 = vector.broadcast %349 : vector<8x1xf32> to vector<8x8xf32>
    %351 = arith.subf %347, %350 : vector<8x8xf32>
    %352 = math.exp %351 : vector<8x8xf32>
    %cst_167 = arith.constant dense<0.000000e+00> : vector<8xf32>
    %353 = vector.multi_reduction <add>, %352, %cst_167 [1] : vector<8x8xf32> to vector<8xf32>
    %354 = vector.shape_cast %353 : vector<8xf32> to vector<8x1xf32>
    %355 = tpu.reciprocal %354 {approx = true} : vector<8x1xf32> -> vector<8x1xf32>
    %356 = vector.broadcast %355 : vector<8x1xf32> to vector<8x8xf32>
    %357 = arith.mulf %352, %356 : vector<8x8xf32>
    %cst_168 = arith.constant dense<0.000000e+00> : vector<8x8xf32>
    %358 = tpu.matmul %357, %338, %cst_168 {dimension_numbers = #tpu.dot_dimension_numbers<[1], [0], [0], [1], [0, 0, 1, 1], [], []>} : vector<8x8xf32>, vector<8x8xf32>, vector<8x8xf32> -> vector<8x8xf32>
    %359 = vector.extract_strided_slice %335 {offsets = [0, 0], sizes = [8, 32], strides = [1, 1]} : vector<32x32xf32> to vector<8x32xf32>
    %cst_169 = arith.constant dense<0.000000e+00> : vector<8x32xf32>
    %360 = tpu.matmul %358, %359, %cst_169 {dimension_numbers = #tpu.dot_dimension_numbers<[1], [0], [0], [1], [0, 0, 1, 1], [], []>} : vector<8x8xf32>, vector<8x32xf32>, vector<8x32xf32> -> vector<8x32xf32>
    %361 = vector.extract_strided_slice %39 {offsets = [0, 8], sizes = [8, 8], strides = [1, 1]} : vector<8x32xf32> to vector<8x8xf32>
    %362 = vector.extract_strided_slice %71 {offsets = [0, 8], sizes = [8, 8], strides = [1, 1]} : vector<8x32xf32> to vector<8x8xf32>
    %363 = vector.extract_strided_slice %7 {offsets = [0, 8], sizes = [8, 8], strides = [1, 1]} : vector<8x32xf32> to vector<8x8xf32>
    %cst_170 = arith.constant dense<0.000000e+00> : vector<8x8xf32>
    %364 = tpu.matmul %361, %362, %cst_170 {dimension_numbers = #tpu.dot_dimension_numbers<[1], [1], [0], [0], [0, 0, 1, 0], [], []>} : vector<8x8xf32>, vector<8x8xf32>, vector<8x8xf32> -> vector<8x8xf32>
    %cst_171 = arith.constant 0.353553385 : f32
    %365 = vector.broadcast %cst_171 : f32 to vector<8x8xf32>
    %366 = arith.mulf %364, %365 : vector<8x8xf32>
    %367 = vector.extract_strided_slice %205 {offsets = [0, 1], sizes = [8, 1], strides = [1, 1]} : vector<8x4xf32> to vector<8x1xf32>
    %368 = vector.broadcast %367 : vector<8x1xf32> to vector<8x8xf32>
    %369 = arith.mulf %366, %368 : vector<8x8xf32>
    %370 = vector.extract_strided_slice %334 {offsets = [1, 0], sizes = [1, 8], strides = [1, 1]} : vector<4x8xf32> to vector<1x8xf32>
    %371 = vector.broadcast %370 : vector<1x8xf32> to vector<8x8xf32>
    %372 = arith.addf %369, %371 : vector<8x8xf32>
    %cst_172 = arith.constant dense<0xFF800000> : vector<8xf32>
    %373 = vector.multi_reduction <maximumf>, %372, %cst_172 [1] : vector<8x8xf32> to vector<8xf32>
    %374 = vector.shape_cast %373 : vector<8xf32> to vector<8x1xf32>
    %375 = vector.broadcast %374 : vector<8x1xf32> to vector<8x8xf32>
    %376 = arith.subf %372, %375 : vector<8x8xf32>
    %377 = math.exp %376 : vector<8x8xf32>
    %cst_173 = arith.constant dense<0.000000e+00> : vector<8xf32>
    %378 = vector.multi_reduction <add>, %377, %cst_173 [1] : vector<8x8xf32> to vector<8xf32>
    %379 = vector.shape_cast %378 : vector<8xf32> to vector<8x1xf32>
    %380 = tpu.reciprocal %379 {approx = true} : vector<8x1xf32> -> vector<8x1xf32>
    %381 = vector.broadcast %380 : vector<8x1xf32> to vector<8x8xf32>
    %382 = arith.mulf %377, %381 : vector<8x8xf32>
    %cst_174 = arith.constant dense<0.000000e+00> : vector<8x8xf32>
    %383 = tpu.matmul %382, %363, %cst_174 {dimension_numbers = #tpu.dot_dimension_numbers<[1], [0], [0], [1], [0, 0, 1, 1], [], []>} : vector<8x8xf32>, vector<8x8xf32>, vector<8x8xf32> -> vector<8x8xf32>
    %384 = vector.extract_strided_slice %335 {offsets = [8, 0], sizes = [8, 32], strides = [1, 1]} : vector<32x32xf32> to vector<8x32xf32>
    %cst_175 = arith.constant dense<0.000000e+00> : vector<8x32xf32>
    %385 = tpu.matmul %383, %384, %cst_175 {dimension_numbers = #tpu.dot_dimension_numbers<[1], [0], [0], [1], [0, 0, 1, 1], [], []>} : vector<8x8xf32>, vector<8x32xf32>, vector<8x32xf32> -> vector<8x32xf32>
    %386 = arith.addf %360, %385 : vector<8x32xf32>
    %387 = vector.extract_strided_slice %39 {offsets = [0, 16], sizes = [8, 8], strides = [1, 1]} : vector<8x32xf32> to vector<8x8xf32>
    %388 = vector.extract_strided_slice %71 {offsets = [0, 16], sizes = [8, 8], strides = [1, 1]} : vector<8x32xf32> to vector<8x8xf32>
    %389 = vector.extract_strided_slice %7 {offsets = [0, 16], sizes = [8, 8], strides = [1, 1]} : vector<8x32xf32> to vector<8x8xf32>
    %cst_176 = arith.constant dense<0.000000e+00> : vector<8x8xf32>
    %390 = tpu.matmul %387, %388, %cst_176 {dimension_numbers = #tpu.dot_dimension_numbers<[1], [1], [0], [0], [0, 0, 1, 0], [], []>} : vector<8x8xf32>, vector<8x8xf32>, vector<8x8xf32> -> vector<8x8xf32>
    %cst_177 = arith.constant 0.353553385 : f32
    %391 = vector.broadcast %cst_177 : f32 to vector<8x8xf32>
    %392 = arith.mulf %390, %391 : vector<8x8xf32>
    %393 = vector.extract_strided_slice %205 {offsets = [0, 2], sizes = [8, 1], strides = [1, 1]} : vector<8x4xf32> to vector<8x1xf32>
    %394 = vector.broadcast %393 : vector<8x1xf32> to vector<8x8xf32>
    %395 = arith.mulf %392, %394 : vector<8x8xf32>
    %396 = vector.extract_strided_slice %334 {offsets = [2, 0], sizes = [1, 8], strides = [1, 1]} : vector<4x8xf32> to vector<1x8xf32>
    %397 = vector.broadcast %396 : vector<1x8xf32> to vector<8x8xf32>
    %398 = arith.addf %395, %397 : vector<8x8xf32>
    %cst_178 = arith.constant dense<0xFF800000> : vector<8xf32>
    %399 = vector.multi_reduction <maximumf>, %398, %cst_178 [1] : vector<8x8xf32> to vector<8xf32>
    %400 = vector.shape_cast %399 : vector<8xf32> to vector<8x1xf32>
    %401 = vector.broadcast %400 : vector<8x1xf32> to vector<8x8xf32>
    %402 = arith.subf %398, %401 : vector<8x8xf32>
    %403 = math.exp %402 : vector<8x8xf32>
    %cst_179 = arith.constant dense<0.000000e+00> : vector<8xf32>
    %404 = vector.multi_reduction <add>, %403, %cst_179 [1] : vector<8x8xf32> to vector<8xf32>
    %405 = vector.shape_cast %404 : vector<8xf32> to vector<8x1xf32>
    %406 = tpu.reciprocal %405 {approx = true} : vector<8x1xf32> -> vector<8x1xf32>
    %407 = vector.broadcast %406 : vector<8x1xf32> to vector<8x8xf32>
    %408 = arith.mulf %403, %407 : vector<8x8xf32>
    %cst_180 = arith.constant dense<0.000000e+00> : vector<8x8xf32>
    %409 = tpu.matmul %408, %389, %cst_180 {dimension_numbers = #tpu.dot_dimension_numbers<[1], [0], [0], [1], [0, 0, 1, 1], [], []>} : vector<8x8xf32>, vector<8x8xf32>, vector<8x8xf32> -> vector<8x8xf32>
    %410 = vector.extract_strided_slice %335 {offsets = [16, 0], sizes = [8, 32], strides = [1, 1]} : vector<32x32xf32> to vector<8x32xf32>
    %cst_181 = arith.constant dense<0.000000e+00> : vector<8x32xf32>
    %411 = tpu.matmul %409, %410, %cst_181 {dimension_numbers = #tpu.dot_dimension_numbers<[1], [0], [0], [1], [0, 0, 1, 1], [], []>} : vector<8x8xf32>, vector<8x32xf32>, vector<8x32xf32> -> vector<8x32xf32>
    %412 = arith.addf %386, %411 : vector<8x32xf32>
    %413 = vector.extract_strided_slice %39 {offsets = [0, 24], sizes = [8, 8], strides = [1, 1]} : vector<8x32xf32> to vector<8x8xf32>
    %414 = vector.extract_strided_slice %71 {offsets = [0, 24], sizes = [8, 8], strides = [1, 1]} : vector<8x32xf32> to vector<8x8xf32>
    %415 = vector.extract_strided_slice %7 {offsets = [0, 24], sizes = [8, 8], strides = [1, 1]} : vector<8x32xf32> to vector<8x8xf32>
    %cst_182 = arith.constant dense<0.000000e+00> : vector<8x8xf32>
    %416 = tpu.matmul %413, %414, %cst_182 {dimension_numbers = #tpu.dot_dimension_numbers<[1], [1], [0], [0], [0, 0, 1, 0], [], []>} : vector<8x8xf32>, vector<8x8xf32>, vector<8x8xf32> -> vector<8x8xf32>
    %cst_183 = arith.constant 0.353553385 : f32
    %417 = vector.broadcast %cst_183 : f32 to vector<8x8xf32>
    %418 = arith.mulf %416, %417 : vector<8x8xf32>
    %419 = vector.extract_strided_slice %205 {offsets = [0, 3], sizes = [8, 1], strides = [1, 1]} : vector<8x4xf32> to vector<8x1xf32>
    %420 = vector.broadcast %419 : vector<8x1xf32> to vector<8x8xf32>
    %421 = arith.mulf %418, %420 : vector<8x8xf32>
    %422 = vector.extract_strided_slice %334 {offsets = [3, 0], sizes = [1, 8], strides = [1, 1]} : vector<4x8xf32> to vector<1x8xf32>
    %423 = vector.broadcast %422 : vector<1x8xf32> to vector<8x8xf32>
    %424 = arith.addf %421, %423 : vector<8x8xf32>
    %cst_184 = arith.constant dense<0xFF800000> : vector<8xf32>
    %425 = vector.multi_reduction <maximumf>, %424, %cst_184 [1] : vector<8x8xf32> to vector<8xf32>
    %426 = vector.shape_cast %425 : vector<8xf32> to vector<8x1xf32>
    %427 = vector.broadcast %426 : vector<8x1xf32> to vector<8x8xf32>
    %428 = arith.subf %424, %427 : vector<8x8xf32>
    %429 = math.exp %428 : vector<8x8xf32>
    %cst_185 = arith.constant dense<0.000000e+00> : vector<8xf32>
    %430 = vector.multi_reduction <add>, %429, %cst_185 [1] : vector<8x8xf32> to vector<8xf32>
    %431 = vector.shape_cast %430 : vector<8xf32> to vector<8x1xf32>
    %432 = tpu.reciprocal %431 {approx = true} : vector<8x1xf32> -> vector<8x1xf32>
    %433 = vector.broadcast %432 : vector<8x1xf32> to vector<8x8xf32>
    %434 = arith.mulf %429, %433 : vector<8x8xf32>
    %cst_186 = arith.constant dense<0.000000e+00> : vector<8x8xf32>
    %435 = tpu.matmul %434, %415, %cst_186 {dimension_numbers = #tpu.dot_dimension_numbers<[1], [0], [0], [1], [0, 0, 1, 1], [], []>} : vector<8x8xf32>, vector<8x8xf32>, vector<8x8xf32> -> vector<8x8xf32>
    %436 = vector.extract_strided_slice %335 {offsets = [24, 0], sizes = [8, 32], strides = [1, 1]} : vector<32x32xf32> to vector<8x32xf32>
    %cst_187 = arith.constant dense<0.000000e+00> : vector<8x32xf32>
    %437 = tpu.matmul %435, %436, %cst_187 {dimension_numbers = #tpu.dot_dimension_numbers<[1], [0], [0], [1], [0, 0, 1, 1], [], []>} : vector<8x8xf32>, vector<8x32xf32>, vector<8x32xf32> -> vector<8x32xf32>
    %438 = arith.addf %412, %437 : vector<8x32xf32>
    %c0_188 = arith.constant 0 : index
    %c0_189 = arith.constant 0 : index
    %439 = vector.load %arg15[%c0_188, %c0_189] : memref<1x32xf32, #tpu.memory_space<vmem>>, vector<1x32xf32>
    %440 = vector.broadcast %439 : vector<1x32xf32> to vector<8x32xf32>
    %441 = arith.addf %438, %440 : vector<8x32xf32>
    %c0_190 = arith.constant 0 : index
    %c0_191 = arith.constant 0 : index
    %c0_192 = arith.constant 0 : index
    %442 = vector.load %arg16[%c0_190, %c0_191, %c0_192] : memref<1x8x32xf32, #tpu.memory_space<vmem>>, vector<1x8x32xf32>
    %443 = vector.shape_cast %442 : vector<1x8x32xf32> to vector<8x32xf32>
    %444 = vector.shape_cast %441 : vector<8x32xf32> to vector<1x8x32xf32>
    tpu.vector_store %arg16[%c0_190, %c0_191, %c0_192], %444 {strides = array<i32>} : memref<1x8x32xf32, #tpu.memory_space<vmem>>, vector<1x8x32xf32>,
    return
  }
  func.func @transform_0(%arg0: i32) -> (i32, i32, i32) {
    %c0_i32 = arith.constant 0 : i32
    %c0_i32_0 = arith.constant 0 : i32
    %c0_i32_1 = arith.constant 0 : i32
    return %arg0, %c0_i32, %c0_i32_0 : i32, i32, i32
  }
  func.func @transform_1(%arg0: i32) -> (i32, i32) {
    %c0_i32 = arith.constant 0 : i32
    %c0_i32_0 = arith.constant 0 : i32
    %c0_i32_1 = arith.constant 0 : i32
    return %c0_i32, %c0_i32_0 : i32, i32
  }
  func.func @transform_2(%arg0: i32) -> (i32, i32) {
    %c0_i32 = arith.constant 0 : i32
    %c0_i32_0 = arith.constant 0 : i32
    %c0_i32_1 = arith.constant 0 : i32
    return %c0_i32, %c0_i32_0 : i32, i32
  }
  func.func @transform_3(%arg0: i32) -> (i32, i32, i32) {
    %c0_i32 = arith.constant 0 : i32
    %c0_i32_0 = arith.constant 0 : i32
    %c0_i32_1 = arith.constant 0 : i32
    %c0_i32_2 = arith.constant 0 : i32
    return %c0_i32, %c0_i32_0, %c0_i32_1 : i32, i32, i32
  }
  func.func @transform_4(%arg0: i32) -> (i32, i32, i32) {
    %c0_i32 = arith.constant 0 : i32
    %c0_i32_0 = arith.constant 0 : i32
    %c0_i32_1 = arith.constant 0 : i32
    %c0_i32_2 = arith.constant 0 : i32
    return %c0_i32, %c0_i32_0, %c0_i32_1 : i32, i32, i32
  }
  func.func @transform_5(%arg0: i32) -> (i32, i32, i32) {
    %c0_i32 = arith.constant 0 : i32
    %c0_i32_0 = arith.constant 0 : i32
    %c0_i32_1 = arith.constant 0 : i32
    %c0_i32_2 = arith.constant 0 : i32
    return %c0_i32, %c0_i32_0, %c0_i32_1 : i32, i32, i32
  }
  func.func @transform_6(%arg0: i32) -> (i32, i32, i32) {
    %c0_i32 = arith.constant 0 : i32
    %c0_i32_0 = arith.constant 0 : i32
    %c0_i32_1 = arith.constant 0 : i32
    %c0_i32_2 = arith.constant 0 : i32
    return %c0_i32, %c0_i32_0, %c0_i32_1 : i32, i32, i32
  }
  func.func @transform_7(%arg0: i32) -> (i32, i32, i32) {
    %c0_i32 = arith.constant 0 : i32
    %c0_i32_0 = arith.constant 0 : i32
    %c0_i32_1 = arith.constant 0 : i32
    %c0_i32_2 = arith.constant 0 : i32
    return %c0_i32, %c0_i32_0, %c0_i32_1 : i32, i32, i32
  }
  func.func @transform_8(%arg0: i32) -> (i32, i32, i32) {
    %c0_i32 = arith.constant 0 : i32
    %c0_i32_0 = arith.constant 0 : i32
    %c0_i32_1 = arith.constant 0 : i32
    %c0_i32_2 = arith.constant 0 : i32
    return %c0_i32, %c0_i32_0, %c0_i32_1 : i32, i32, i32
  }
  func.func @transform_9(%arg0: i32) -> (i32, i32, i32) {
    %c0_i32 = arith.constant 0 : i32
    %c0_i32_0 = arith.constant 0 : i32
    %c0_i32_1 = arith.constant 0 : i32
    %c0_i32_2 = arith.constant 0 : i32
    return %c0_i32, %c0_i32_0, %c0_i32_1 : i32, i32, i32
  }
  func.func @transform_10(%arg0: i32) -> (i32, i32) {
    %c0_i32 = arith.constant 0 : i32
    %c0_i32_0 = arith.constant 0 : i32
    %c0_i32_1 = arith.constant 0 : i32
    return %c0_i32, %c0_i32_0 : i32, i32
  }
  func.func @transform_11(%arg0: i32) -> (i32, i32, i32) {
    %c0_i32 = arith.constant 0 : i32
    %c0_i32_0 = arith.constant 0 : i32
    %c0_i32_1 = arith.constant 0 : i32
    %c0_i32_2 = arith.constant 0 : i32
    return %c0_i32, %c0_i32_0, %c0_i32_1 : i32, i32, i32
  }
  func.func @transform_12(%arg0: i32) -> (i32, i32) {
    %c0_i32 = arith.constant 0 : i32
    %c0_i32_0 = arith.constant 0 : i32
    %c0_i32_1 = arith.constant 0 : i32
    return %c0_i32, %c0_i32_0 : i32, i32
  }
  func.func @transform_13(%arg0: i32) -> (i32, i32) {
    %c0_i32 = arith.constant 0 : i32
    %c0_i32_0 = arith.constant 0 : i32
    %c0_i32_1 = arith.constant 0 : i32
    return %c0_i32, %c0_i32_0 : i32, i32
  }
  func.func @transform_14(%arg0: i32) -> (i32, i32) {
    %c0_i32 = arith.constant 0 : i32
    %c0_i32_0 = arith.constant 0 : i32
    %c0_i32_1 = arith.constant 0 : i32
    return %c0_i32, %c0_i32_0 : i32, i32
  }
  func.func @transform_15(%arg0: i32) -> (i32, i32, i32) {
    %c0_i32 = arith.constant 0 : i32
    %c0_i32_0 = arith.constant 0 : i32
    %c0_i32_1 = arith.constant 0 : i32
    return %arg0, %c0_i32, %c0_i32_0 : i32, i32, i32
  }
}

</mosaic_0001>

<llo_original>
// kernel: dc_attention_forward.1
$region0: #{dc_attention_forward.1}
  #allocation0 [shape = 'u32[]', space=smem, size = 0x4, offset = 0x4, fixed_abs, tag = 'smem constant byte address 0x4 - core index']
  #allocation1 [shape = 'u32[144,128]{1,0:T(1,128)}', space=vmem, size = 0x12000, scoped, tag = 'internal scratch']
  %s0 = inlined_call_operand.vmem [shape: f32[2,8,32], index: 0, kind: input, shape index: {}]
  %s1 = inlined_call_operand.hbm [shape: f32[32,96], index: 1, kind: input, shape index: {}]
  %s2 = inlined_call_operand.hbm [shape: f32[1,96], index: 2, kind: input, shape index: {}]
  %s3 = inlined_call_operand.hbm [shape: f32[6,32,32], index: 3, kind: input, shape index: {}]
  %s4 = inlined_call_operand.vmem [shape: f32[2,1,32], index: 4, kind: input, shape index: {}]
  %s5 = inlined_call_operand.vmem [shape: f32[4,32,32], index: 5, kind: input, shape index: {}]
  %s6 = inlined_call_operand.hbm [shape: f32[2,1,32], index: 6, kind: input, shape index: {}]
  %s7 = inlined_call_operand.vmem [shape: f32[4,3,32], index: 7, kind: input, shape index: {}]
  %s8 = inlined_call_operand.hbm [shape: f32[4,1,32], index: 8, kind: input, shape index: {}]
  %s9 = inlined_call_operand.vmem [shape: f32[2,32,4], index: 9, kind: input, shape index: {}]
  %s10 = inlined_call_operand.hbm [shape: f32[1,4], index: 10, kind: input, shape index: {}]
  %s11 = inlined_call_operand.hbm [shape: f32[2,4,32], index: 11, kind: input, shape index: {}]
  %s12 = inlined_call_operand.vmem [shape: f32[4,1], index: 12, kind: input, shape index: {}]
  %s13 = inlined_call_operand.hbm [shape: f32[32,32], index: 13, kind: input, shape index: {}]
  %s14 = inlined_call_operand.hbm [shape: f32[1,32], index: 14, kind: input, shape index: {}]
  %s15 = inlined_call_operand.hbm [shape: f32[2,8,32], index: 15, kind: output, shape index: {}]
  %s16 = sld [smem:[#allocation0]]
  $region129: #{dc_attention_forward.1} parent=0
    _
  %s18 = ssub.s32 1, %s16
  %s19 = scalar_select 0, %s18, %s16
  $region1: #{dc_attention_forward.1} parent=0
    #allocation2 [shape = 'u8[16384]{0}', space=vmem, size = 0x4000, scoped, tag = 'input window, operand 1, single buffered']
    #allocation3 [shape = 's32[2]{0}', space=sflag, size = 0x8, scoped, tag = 'scoped memory for dc_attention_forward.1']
    #allocation4 [shape = 's32[2]{0}', space=sflag, size = 0x8, scoped, tag = 'scoped memory for dc_attention_forward.1']
    #allocation5 [shape = 'u8[512]{0}', space=vmem, size = 0x400, scoped, tag = 'input window, operand 2, single buffered']
    #allocation6 [shape = 's32[1]{0}', space=sflag, size = 0x4, scoped, tag = 'scoped memory for dc_attention_forward.1']
    #allocation7 [shape = 'u8[98304]{0}', space=vmem, size = 0x18000, scoped, tag = 'input window, operand 3, single buffered']
    #allocation8 [shape = 'u8[1024]{0}', space=vmem, size = 0x400, scoped, tag = 'input window, operand 6, single buffered']
    #allocation9 [shape = 's32[1]{0}', space=sflag, size = 0x4, scoped, tag = 'scoped memory for dc_attention_forward.1']
    #allocation10 [shape = 'u8[2048]{0}', space=vmem, size = 0x800, scoped, tag = 'input window, operand 8, single buffered']
    #allocation11 [shape = 'u8[512]{0}', space=vmem, size = 0x400, scoped, tag = 'input window, operand 10, single buffered']
    #allocation12 [shape = 's32[1]{0}', space=sflag, size = 0x4, scoped, tag = 'scoped memory for dc_attention_forward.1']
    #allocation13 [shape = 'u8[4096]{0}', space=vmem, size = 0x1000, scoped, tag = 'input window, operand 11, single buffered']
    #allocation14 [shape = 'u8[16384]{0}', space=vmem, size = 0x4000, scoped, tag = 'input window, operand 13, single buffered']
    #allocation15 [shape = 's32[1]{0}', space=sflag, size = 0x4, scoped, tag = 'scoped memory for dc_attention_forward.1']
    #allocation16 [shape = 'u8[512]{0}', space=vmem, size = 0x400, scoped, tag = 'input window, operand 14, single buffered']
    #allocation17 [shape = 'u8[8192]{0}', space=vmem, size = 0x2000, scoped, tag = 'output window, operand 0']
    %20 = vsyncpa [#allocation3], 0
    %21 = vsyncpa [#allocation6], 0
    %22 = vsyncpa [#allocation9], 0
    %23 = vsyncpa [#allocation12], 0
    %24 = vsyncpa [#allocation15], 0
    %25 = vsyncpa [#allocation4], 0
    %s26 = scalar_lea.sflag [#allocation4], 1
    %27 = vsyncpa %s26, 0
    loop: start=0, step=1, limit=4
    $region2: #{dc_attention_forward.1} parent=1 // loop_pre_header
      _
    $region3: #{dc_attention_forward.1} parent=1 // loop_header
      %s29 = sphi 0, %s33
      %p30 = scmp.ge.s32.totalorder %s29, 4
      %s39 = sphi 0, %s41
      %s42 = sphi 0, %s39
      %s43 = sphi 0, %s42
      %s59 = sphi 0, %s43
      %s63 = sphi 0, %s63
      %s65 = sphi 0, %s63
      %s66 = sphi 0, %s65
      %s80 = sphi 0, %s66
      %s84 = sphi 0, %s84
      %s86 = sphi 0, %s84
      %s87 = sphi 0, %s86
      %s101 = sphi 0, %s87
      %s105 = sphi 0, %s105
      %s107 = sphi 0, %s105
      %s108 = sphi 0, %s107
      %s122 = sphi 0, %s108
      %s126 = sphi 0, %s126
      %s128 = sphi 0, %s126
      %s129 = sphi 0, %s128
      %s143 = sphi 0, %s129
      %s147 = sphi 0, %s147
      %s149 = sphi 0, %s147
      %s150 = sphi 0, %s149
      %s164 = sphi 0, %s150
      %s168 = sphi 0, %s168
      %s170 = sphi 0, %s168
      %s171 = sphi 0, %s170
      %s185 = sphi 0, %s171
      %s189 = sphi 0, %s189
      %s191 = sphi 0, %s189
      %s192 = sphi 0, %s191
      %s206 = sphi 0, %s192
      %s210 = sphi 0, %s210
      %s212 = sphi 0, %s210
      %s213 = sphi 0, %s212
      %s227 = sphi 0, %s213
      %s231 = sphi 0, %s231
      %s233 = sphi 0, %s231
      %s234 = sphi 0, %s233
      %s248 = sphi 0, %s234
      %s252 = sphi 0, %s252
      %s254 = sphi 0, %s252
      %s255 = sphi 0, %s254
      %s269 = sphi 0, %s255
      %s273 = sphi 0, %s273
      %s275 = sphi 0, %s273
      %s276 = sphi 0, %s275
      %s290 = sphi 0, %s276
      %s294 = sphi 0, %s294
      %s296 = sphi 0, %s294
      %s297 = sphi 0, %s296
      %s311 = sphi 0, %s297
      %s315 = sphi 0, %s315
      %s317 = sphi 0, %s315
      %s318 = sphi 0, %s317
      %s332 = sphi 0, %s318
      %s336 = sphi 0, %s336
      %s338 = sphi 0, %s336
      %s339 = sphi 0, %s338
      %s353 = sphi 0, %s339
      %s359 = sphi 0, %s361
      %s362 = sphi 0, %s359
      %s363 = sphi 0, %s362
      %s379 = sphi 0, %s363
    $region4: #{dc_attention_forward.1} parent=1 // loop_header_branch
      %32 = sbr.rel (%p30) target = $region8
    $region5: #{dc_attention_forward.1} parent=1 // loop_body
      %s34 = ssub.s32 %s29, 1
      %s35 = ssub.s32 %s29, 2
      %s36 = sadd.s32 %s29, 1
      %s37 = ssub.s32 %s29, %s36
      %p38 = scmp.eq.s32.totalorder %s37, 0
      %s40 = sadd.s32 %s39, 1
      %s41 = scalar_select %p38, %s39, %s40
      %p44 = pneg %p38
      %p45 = scmp.eq.s32.totalorder %s29, 1
      %p46 = por %p44, %p45
      %p47 = scmp.ne.s32.totalorder %s39, %s42
      %p48 = scmp.eq.s32.totalorder %s29, 0
      %p49 = por %p47, %p48
      %p50 = scmp.ne.s32.totalorder %s39, %s42
      %p51 = scmp.eq.s32.totalorder %s34, 1
      %p52 = por %p50, %p51
      %p53 = scmp.ne.s32.totalorder %s42, %s43
      %p54 = scmp.eq.s32.totalorder %s34, 0
      %p55 = por %p53, %p54
      %p56 = scmp.ne.s32.totalorder %s42, %s43
      %p57 = scmp.eq.s32.totalorder %s35, 1
      %p58 = por %p56, %p57
      %p60 = scmp.ne.s32.totalorder %s43, %s59
      %p61 = scmp.eq.s32.totalorder %s35, 0
      %p62 = por %p60, %p61
      %s64 = sadd.s32 %s63, 1
      %p67 = scmp.eq.s32.totalorder %s29, 1
      %p68 = scmp.ne.s32.totalorder %s63, %s65
      %p69 = scmp.eq.s32.totalorder %s29, 0
      %p70 = por %p68, %p69
      %p71 = scmp.ne.s32.totalorder %s63, %s65
      %p72 = scmp.eq.s32.totalorder %s34, 1
      %p73 = por %p71, %p72
      %p74 = scmp.ne.s32.totalorder %s65, %s66
      %p75 = scmp.eq.s32.totalorder %s34, 0
      %p76 = por %p74, %p75
      %p77 = scmp.ne.s32.totalorder %s65, %s66
      %p78 = scmp.eq.s32.totalorder %s35, 1
      %p79 = por %p77, %p78
      %p81 = scmp.ne.s32.totalorder %s66, %s80
      %p82 = scmp.eq.s32.totalorder %s35, 0
      %p83 = por %p81, %p82
      %s85 = sadd.s32 %s84, 1
      %p88 = scmp.eq.s32.totalorder %s29, 1
      %p89 = scmp.ne.s32.totalorder %s84, %s86
      %p90 = scmp.eq.s32.totalorder %s29, 0
      %p91 = por %p89, %p90
      %p92 = scmp.ne.s32.totalorder %s84, %s86
      %p93 = scmp.eq.s32.totalorder %s34, 1
      %p94 = por %p92, %p93
      %p95 = scmp.ne.s32.totalorder %s86, %s87
      %p96 = scmp.eq.s32.totalorder %s34, 0
      %p97 = por %p95, %p96
      %p98 = scmp.ne.s32.totalorder %s86, %s87
      %p99 = scmp.eq.s32.totalorder %s35, 1
      %p100 = por %p98, %p99
      %p102 = scmp.ne.s32.totalorder %s87, %s101
      %p103 = scmp.eq.s32.totalorder %s35, 0
      %p104 = por %p102, %p103
      %s106 = sadd.s32 %s105, 1
      %p109 = scmp.eq.s32.totalorder %s29, 1
      %p110 = scmp.ne.s32.totalorder %s105, %s107
      %p111 = scmp.eq.s32.totalorder %s29, 0
      %p112 = por %p110, %p111
      %p113 = scmp.ne.s32.totalorder %s105, %s107
      %p114 = scmp.eq.s32.totalorder %s34, 1
      %p115 = por %p113, %p114
      %p116 = scmp.ne.s32.totalorder %s107, %s108
      %p117 = scmp.eq.s32.totalorder %s34, 0
      %p118 = por %p116, %p117
      %p119 = scmp.ne.s32.totalorder %s107, %s108
      %p120 = scmp.eq.s32.totalorder %s35, 1
      %p121 = por %p119, %p120
      %p123 = scmp.ne.s32.totalorder %s108, %s122
      %p124 = scmp.eq.s32.totalorder %s35, 0
      %p125 = por %p123, %p124
      %s127 = sadd.s32 %s126, 1
      %p130 = scmp.eq.s32.totalorder %s29, 1
      %p131 = scmp.ne.s32.totalorder %s126, %s128
      %p132 = scmp.eq.s32.totalorder %s29, 0
      %p133 = por %p131, %p132
      %p134 = scmp.ne.s32.totalorder %s126, %s128
      %p135 = scmp.eq.s32.totalorder %s34, 1
      %p136 = por %p134, %p135
      %p137 = scmp.ne.s32.totalorder %s128, %s129
      %p138 = scmp.eq.s32.totalorder %s34, 0
      %p139 = por %p137, %p138
      %p140 = scmp.ne.s32.totalorder %s128, %s129
      %p141 = scmp.eq.s32.totalorder %s35, 1
      %p142 = por %p140, %p141
      %p144 = scmp.ne.s32.totalorder %s129, %s143
      %p145 = scmp.eq.s32.totalorder %s35, 0
      %p146 = por %p144, %p145
      %s148 = sadd.s32 %s147, 1
      %p151 = scmp.eq.s32.totalorder %s29, 1
      %p152 = scmp.ne.s32.totalorder %s147, %s149
      %p153 = scmp.eq.s32.totalorder %s29, 0
      %p154 = por %p152, %p153
      %p155 = scmp.ne.s32.totalorder %s147, %s149
      %p156 = scmp.eq.s32.totalorder %s34, 1
      %p157 = por %p155, %p156
      %p158 = scmp.ne.s32.totalorder %s149, %s150
      %p159 = scmp.eq.s32.totalorder %s34, 0
      %p160 = por %p158, %p159
      %p161 = scmp.ne.s32.totalorder %s149, %s150
      %p162 = scmp.eq.s32.totalorder %s35, 1
      %p163 = por %p161, %p162
      %p165 = scmp.ne.s32.totalorder %s150, %s164
      %p166 = scmp.eq.s32.totalorder %s35, 0
      %p167 = por %p165, %p166
      %s169 = sadd.s32 %s168, 1
      %p172 = scmp.eq.s32.totalorder %s29, 1
      %p173 = scmp.ne.s32.totalorder %s168, %s170
      %p174 = scmp.eq.s32.totalorder %s29, 0
      %p175 = por %p173, %p174
      %p176 = scmp.ne.s32.totalorder %s168, %s170
      %p177 = scmp.eq.s32.totalorder %s34, 1
      %p178 = por %p176, %p177
      %p179 = scmp.ne.s32.totalorder %s170, %s171
      %p180 = scmp.eq.s32.totalorder %s34, 0
      %p181 = por %p179, %p180
      %p182 = scmp.ne.s32.totalorder %s170, %s171
      %p183 = scmp.eq.s32.totalorder %s35, 1
      %p184 = por %p182, %p183
      %p186 = scmp.ne.s32.totalorder %s171, %s185
      %p187 = scmp.eq.s32.totalorder %s35, 0
      %p188 = por %p186, %p187
      %s190 = sadd.s32 %s189, 1
      %p193 = scmp.eq.s32.totalorder %s29, 1
      %p194 = scmp.ne.s32.totalorder %s189, %s191
      %p195 = scmp.eq.s32.totalorder %s29, 0
      %p196 = por %p194, %p195
      %p197 = scmp.ne.s32.totalorder %s189, %s191
      %p198 = scmp.eq.s32.totalorder %s34, 1
      %p199 = por %p197, %p198
      %p200 = scmp.ne.s32.totalorder %s191, %s192
      %p201 = scmp.eq.s32.totalorder %s34, 0
      %p202 = por %p200, %p201
      %p203 = scmp.ne.s32.totalorder %s191, %s192
      %p204 = scmp.eq.s32.totalorder %s35, 1
      %p205 = por %p203, %p204
      %p207 = scmp.ne.s32.totalorder %s192, %s206
      %p208 = scmp.eq.s32.totalorder %s35, 0
      %p209 = por %p207, %p208
      %s211 = sadd.s32 %s210, 1
      %p214 = scmp.eq.s32.totalorder %s29, 1
      %p215 = scmp.ne.s32.totalorder %s210, %s212
      %p216 = scmp.eq.s32.totalorder %s29, 0
      %p217 = por %p215, %p216
      %p218 = scmp.ne.s32.totalorder %s210, %s212
      %p219 = scmp.eq.s32.totalorder %s34, 1
      %p220 = por %p218, %p219
      %p221 = scmp.ne.s32.totalorder %s212, %s213
      %p222 = scmp.eq.s32.totalorder %s34, 0
      %p223 = por %p221, %p222
      %p224 = scmp.ne.s32.totalorder %s212, %s213
      %p225 = scmp.eq.s32.totalorder %s35, 1
      %p226 = por %p224, %p225
      %p228 = scmp.ne.s32.totalorder %s213, %s227
      %p229 = scmp.eq.s32.totalorder %s35, 0
      %p230 = por %p228, %p229
      %s232 = sadd.s32 %s231, 1
      %p235 = scmp.eq.s32.totalorder %s29, 1
      %p236 = scmp.ne.s32.totalorder %s231, %s233
      %p237 = scmp.eq.s32.totalorder %s29, 0
      %p238 = por %p236, %p237
      %p239 = scmp.ne.s32.totalorder %s231, %s233
      %p240 = scmp.eq.s32.totalorder %s34, 1
      %p241 = por %p239, %p240
      %p242 = scmp.ne.s32.totalorder %s233, %s234
      %p243 = scmp.eq.s32.totalorder %s34, 0
      %p244 = por %p242, %p243
      %p245 = scmp.ne.s32.totalorder %s233, %s234
      %p246 = scmp.eq.s32.totalorder %s35, 1
      %p247 = por %p245, %p246
      %p249 = scmp.ne.s32.totalorder %s234, %s248
      %p250 = scmp.eq.s32.totalorder %s35, 0
      %p251 = por %p249, %p250
      %s253 = sadd.s32 %s252, 1
      %p256 = scmp.eq.s32.totalorder %s29, 1
      %p257 = scmp.ne.s32.totalorder %s252, %s254
      %p258 = scmp.eq.s32.totalorder %s29, 0
      %p259 = por %p257, %p258
      %p260 = scmp.ne.s32.totalorder %s252, %s254
      %p261 = scmp.eq.s32.totalorder %s34, 1
      %p262 = por %p260, %p261
      %p263 = scmp.ne.s32.totalorder %s254, %s255
      %p264 = scmp.eq.s32.totalorder %s34, 0
      %p265 = por %p263, %p264
      %p266 = scmp.ne.s32.totalorder %s254, %s255
      %p267 = scmp.eq.s32.totalorder %s35, 1
      %p268 = por %p266, %p267
      %p270 = scmp.ne.s32.totalorder %s255, %s269
      %p271 = scmp.eq.s32.totalorder %s35, 0
      %p272 = por %p270, %p271
      %s274 = sadd.s32 %s273, 1
      %p277 = scmp.eq.s32.totalorder %s29, 1
      %p278 = scmp.ne.s32.totalorder %s273, %s275
      %p279 = scmp.eq.s32.totalorder %s29, 0
      %p280 = por %p278, %p279
      %p281 = scmp.ne.s32.totalorder %s273, %s275
      %p282 = scmp.eq.s32.totalorder %s34, 1
      %p283 = por %p281, %p282
      %p284 = scmp.ne.s32.totalorder %s275, %s276
      %p285 = scmp.eq.s32.totalorder %s34, 0
      %p286 = por %p284, %p285
      %p287 = scmp.ne.s32.totalorder %s275, %s276
      %p288 = scmp.eq.s32.totalorder %s35, 1
      %p289 = por %p287, %p288
      %p291 = scmp.ne.s32.totalorder %s276, %s290
      %p292 = scmp.eq.s32.totalorder %s35, 0
      %p293 = por %p291, %p292
      %s295 = sadd.s32 %s294, 1
      %p298 = scmp.eq.s32.totalorder %s29, 1
      %p299 = scmp.ne.s32.totalorder %s294, %s296
      %p300 = scmp.eq.s32.totalorder %s29, 0
      %p301 = por %p299, %p300
      %p302 = scmp.ne.s32.totalorder %s294, %s296
      %p303 = scmp.eq.s32.totalorder %s34, 1
      %p304 = por %p302, %p303
      %p305 = scmp.ne.s32.totalorder %s296, %s297
      %p306 = scmp.eq.s32.totalorder %s34, 0
      %p307 = por %p305, %p306
      %p308 = scmp.ne.s32.totalorder %s296, %s297
      %p309 = scmp.eq.s32.totalorder %s35, 1
      %p310 = por %p308, %p309
      %p312 = scmp.ne.s32.totalorder %s297, %s311
      %p313 = scmp.eq.s32.totalorder %s35, 0
      %p314 = por %p312, %p313
      %s316 = sadd.s32 %s315, 1
      %p319 = scmp.eq.s32.totalorder %s29, 1
      %p320 = scmp.ne.s32.totalorder %s315, %s317
      %p321 = scmp.eq.s32.totalorder %s29, 0
      %p322 = por %p320, %p321
      %p323 = scmp.ne.s32.totalorder %s315, %s317
      %p324 = scmp.eq.s32.totalorder %s34, 1
      %p325 = por %p323, %p324
      %p326 = scmp.ne.s32.totalorder %s317, %s318
      %p327 = scmp.eq.s32.totalorder %s34, 0
      %p328 = por %p326, %p327
      %p329 = scmp.ne.s32.totalorder %s317, %s318
      %p330 = scmp.eq.s32.totalorder %s35, 1
      %p331 = por %p329, %p330
      %p333 = scmp.ne.s32.totalorder %s318, %s332
      %p334 = scmp.eq.s32.totalorder %s35, 0
      %p335 = por %p333, %p334
      %s337 = sadd.s32 %s336, 1
      %p340 = scmp.eq.s32.totalorder %s29, 1
      %p341 = scmp.ne.s32.totalorder %s336, %s338
      %p342 = scmp.eq.s32.totalorder %s29, 0
      %p343 = por %p341, %p342
      %p344 = scmp.ne.s32.totalorder %s336, %s338
      %p345 = scmp.eq.s32.totalorder %s34, 1
      %p346 = por %p344, %p345
      %p347 = scmp.ne.s32.totalorder %s338, %s339
      %p348 = scmp.eq.s32.totalorder %s34, 0
      %p349 = por %p347, %p348
      %p350 = scmp.ne.s32.totalorder %s338, %s339
      %p351 = scmp.eq.s32.totalorder %s35, 1
      %p352 = por %p350, %p351
      %p354 = scmp.ne.s32.totalorder %s339, %s353
      %p355 = scmp.eq.s32.totalorder %s35, 0
      %p356 = por %p354, %p355
      %s357 = ssub.s32 %s29, %s36
      %p358 = scmp.eq.s32.totalorder %s357, 0
      %s360 = sadd.s32 %s359, 1
      %s361 = scalar_select %p358, %s359, %s360
      %p364 = pneg %p358
      %p365 = scmp.eq.s32.totalorder %s29, 1
      %p366 = por %p364, %p365
      %p367 = scmp.ne.s32.totalorder %s359, %s362
      %p368 = scmp.eq.s32.totalorder %s29, 0
      %p369 = por %p367, %p368
      %p370 = scmp.ne.s32.totalorder %s359, %s362
      %p371 = scmp.eq.s32.totalorder %s34, 1
      %p372 = por %p370, %p371
      %p373 = scmp.ne.s32.totalorder %s362, %s363
      %p374 = scmp.eq.s32.totalorder %s34, 0
      %p375 = por %p373, %p374
      %p376 = scmp.ne.s32.totalorder %s362, %s363
      %p377 = scmp.eq.s32.totalorder %s35, 1
      %p378 = por %p376, %p377
      %p380 = scmp.ne.s32.totalorder %s363, %s379
      %p381 = scmp.eq.s32.totalorder %s35, 0
      %p382 = por %p380, %p381
      %p383 = scmp.le.s32.totalorder 1, %s29
      %p384 = scmp.lt.s32.totalorder %s29, 3
      %p385 = pnand %p383, %p384
      %p386 = pneg %p385
      // Predicated region
      $region9: #{dc_attention_forward.1} parent=5 // pred_check
        _
      $region10: #{dc_attention_forward.1} parent=5 // pred_check_branch
        %388 = sbr.rel (%p385) target = $region12
      $region11: #{dc_attention_forward.1} parent=5 // pred_region
        %s389 = ssub.s32 %s29, 1
        // Predicated region
        $region13: #{dc_attention_forward.1} parent=11 // pred_check
          %p390 = pneg %p76
        $region14: #{dc_attention_forward.1} parent=11 // pred_check_branch
          %392 = sbr.rel (%p390) target = $region16
        $region15: #{dc_attention_forward.1} parent=11 // pred_region
          %s394 = ssub.s32 512, 512
          %395 = vsyncadd [#allocation3], %s394
          %s396 = sshll.u32 [#allocation2], 4
          %s397 = int_to_ptr.vmem [resolvable:$true] %s396
          %402 = dma.hbm_to_vmem [thread:$0]  %s1, 512, %s397, [#allocation3], 128, 128, 8
        $region16: #{dc_attention_forward.1} parent=11 // pred_fallthru
          _
        // Predicated region
        $region17: #{dc_attention_forward.1} parent=11 // pred_check
          %p403 = pneg %p97
        $region18: #{dc_attention_forward.1} parent=11 // pred_check_branch
          %405 = sbr.rel (%p403) target = $region20
        $region19: #{dc_attention_forward.1} parent=11 // pred_region
          %s407 = ssub.s32 16, 16
          %408 = vsyncadd [#allocation6], %s407
          %s410 = sshll.u32 [#allocation5], 4
          %s411 = int_to_ptr.vmem [resolvable:$true] %s410
          %413 = dma.hbm_to_vmem [thread:$0]  %s2, 16, %s411, [#allocation6]
        $region20: #{dc_attention_forward.1} parent=11 // pred_fallthru
          _
        // Predicated region
        $region21: #{dc_attention_forward.1} parent=11 // pred_check
          %p414 = pneg %p118
        $region22: #{dc_attention_forward.1} parent=11 // pred_check_branch
          %416 = sbr.rel (%p414) target = $region24
        $region23: #{dc_attention_forward.1} parent=11 // pred_region
          %s418 = ssub.s32 3072, 3072
          %419 = vsyncadd [#allocation6], %s418
          %s420 = sshll.u32 [#allocation7], 4
          %s421 = int_to_ptr.vmem [resolvable:$true] %s420
          %426 = dma.hbm_to_vmem [thread:$0]  %s3, 3072, %s421, [#allocation6], 128, 128, 8
        $region24: #{dc_attention_forward.1} parent=11 // pred_fallthru
          _
        // Predicated region
        $region25: #{dc_attention_forward.1} parent=11 // pred_check
          %p427 = pneg %p139
        $region26: #{dc_attention_forward.1} parent=11 // pred_check_branch
          %429 = sbr.rel (%p427) target = $region28
        $region27: #{dc_attention_forward.1} parent=11 // pred_region
          _
        $region28: #{dc_attention_forward.1} parent=11 // pred_fallthru
          _
        // Predicated region
        $region29: #{dc_attention_forward.1} parent=11 // pred_check
          %p430 = pneg %p160
        $region30: #{dc_attention_forward.1} parent=11 // pred_check_branch
          %432 = sbr.rel (%p430) target = $region32
        $region31: #{dc_attention_forward.1} parent=11 // pred_region
          _
        $region32: #{dc_attention_forward.1} parent=11 // pred_fallthru
          _
        // Predicated region
        $region33: #{dc_attention_forward.1} parent=11 // pred_check
          %p433 = pneg %p181
        $region34: #{dc_attention_forward.1} parent=11 // pred_check_branch
          %435 = sbr.rel (%p433) target = $region36
        $region35: #{dc_attention_forward.1} parent=11 // pred_region
          %s437 = ssub.s32 32, 32
          %438 = vsyncadd [#allocation9], %s437
          %s439 = sshll.u32 [#allocation8], 4
          %s440 = int_to_ptr.vmem [resolvable:$true] %s439
          %445 = dma.hbm_to_vmem [thread:$0]  %s6, 32, %s440, [#allocation9], 16, 16, 1
        $region36: #{dc_attention_forward.1} parent=11 // pred_fallthru
          _
        // Predicated region
        $region37: #{dc_attention_forward.1} parent=11 // pred_check
          %p446 = pneg %p202
        $region38: #{dc_attention_forward.1} parent=11 // pred_check_branch
          %448 = sbr.rel (%p446) target = $region40
        $region39: #{dc_attention_forward.1} parent=11 // pred_region
          _
        $region40: #{dc_attention_forward.1} parent=11 // pred_fallthru
          _
        // Predicated region
        $region41: #{dc_attention_forward.1} parent=11 // pred_check
          %p449 = pneg %p223
        $region42: #{dc_attention_forward.1} parent=11 // pred_check_branch
          %451 = sbr.rel (%p449) target = $region44
        $region43: #{dc_attention_forward.1} parent=11 // pred_region
          %s453 = ssub.s32 64, 64
          %454 = vsyncadd [#allocation9], %s453
          %s455 = sshll.u32 [#allocation10], 4
          %s456 = int_to_ptr.vmem [resolvable:$true] %s455
          %461 = dma.hbm_to_vmem [thread:$0]  %s8, 64, %s456, [#allocation9], 16, 16, 1
        $region44: #{dc_attention_forward.1} parent=11 // pred_fallthru
          _
        // Predicated region
        $region45: #{dc_attention_forward.1} parent=11 // pred_check
          %p462 = pneg %p244
        $region46: #{dc_attention_forward.1} parent=11 // pred_check_branch
          %464 = sbr.rel (%p462) target = $region48
        $region47: #{dc_attention_forward.1} parent=11 // pred_region
          _
        $region48: #{dc_attention_forward.1} parent=11 // pred_fallthru
          _
        // Predicated region
        $region49: #{dc_attention_forward.1} parent=11 // pred_check
          %p465 = pneg %p265
        $region50: #{dc_attention_forward.1} parent=11 // pred_check_branch
          %467 = sbr.rel (%p465) target = $region52
        $region51: #{dc_attention_forward.1} parent=11 // pred_region
          %s469 = ssub.s32 16, 16
          %470 = vsyncadd [#allocation12], %s469
          %s472 = sshll.u32 [#allocation11], 4
          %s473 = int_to_ptr.vmem [resolvable:$true] %s472
          %475 = dma.hbm_to_vmem [thread:$0]  %s10, 16, %s473, [#allocation12]
        $region52: #{dc_attention_forward.1} parent=11 // pred_fallthru
          _
        // Predicated region
        $region53: #{dc_attention_forward.1} parent=11 // pred_check
          %p476 = pneg %p286
        $region54: #{dc_attention_forward.1} parent=11 // pred_check_branch
          %478 = sbr.rel (%p476) target = $region56
        $region55: #{dc_attention_forward.1} parent=11 // pred_region
          %s480 = ssub.s32 128, 128
          %481 = vsyncadd [#allocation12], %s480
          %s482 = sshll.u32 [#allocation13], 4
          %s483 = int_to_ptr.vmem [resolvable:$true] %s482
          %488 = dma.hbm_to_vmem [thread:$0]  %s11, 128, %s483, [#allocation12], 64, 64, 4
        $region56: #{dc_attention_forward.1} parent=11 // pred_fallthru
          _
        // Predicated region
        $region57: #{dc_attention_forward.1} parent=11 // pred_check
          %p489 = pneg %p307
        $region58: #{dc_attention_forward.1} parent=11 // pred_check_branch
          %491 = sbr.rel (%p489) target = $region60
        $region59: #{dc_attention_forward.1} parent=11 // pred_region
          _
        $region60: #{dc_attention_forward.1} parent=11 // pred_fallthru
          _
        // Predicated region
        $region61: #{dc_attention_forward.1} parent=11 // pred_check
          %p492 = pneg %p328
        $region62: #{dc_attention_forward.1} parent=11 // pred_check_branch
          %494 = sbr.rel (%p492) target = $region64
        $region63: #{dc_attention_forward.1} parent=11 // pred_region
          %s496 = ssub.s32 512, 512
          %497 = vsyncadd [#allocation15], %s496
          %s498 = sshll.u32 [#allocation14], 4
          %s499 = int_to_ptr.vmem [resolvable:$true] %s498
          %504 = dma.hbm_to_vmem [thread:$0]  %s13, 512, %s499, [#allocation15], 128, 128, 8
        $region64: #{dc_attention_forward.1} parent=11 // pred_fallthru
          _
        // Predicated region
        $region65: #{dc_attention_forward.1} parent=11 // pred_check
          %p505 = pneg %p349
        $region66: #{dc_attention_forward.1} parent=11 // pred_check_branch
          %507 = sbr.rel (%p505) target = $region68
        $region67: #{dc_attention_forward.1} parent=11 // pred_region
          %s509 = ssub.s32 16, 16
          %510 = vsyncadd [#allocation15], %s509
          %s512 = sshll.u32 [#allocation16], 4
          %s513 = int_to_ptr.vmem [resolvable:$true] %s512
          %515 = dma.hbm_to_vmem [thread:$0]  %s14, 16, %s513, [#allocation15]
        $region68: #{dc_attention_forward.1} parent=11 // pred_fallthru
          _
      $region12: #{dc_attention_forward.1} parent=5 // pred_fallthru
        _
      %p516 = scmp.lt.s32.totalorder %s29, 2
      // Predicated region
      $region69: #{dc_attention_forward.1} parent=5 // pred_check
        %p517 = pneg %p516
      $region70: #{dc_attention_forward.1} parent=5 // pred_check_branch
        %519 = sbr.rel (%p517) target = $region72
      $region71: #{dc_attention_forward.1} parent=5 // pred_region
        // Predicated region
        $region73: #{dc_attention_forward.1} parent=71 // pred_check
          %p520 = pneg %p49
        $region74: #{dc_attention_forward.1} parent=71 // pred_check_branch
          %522 = sbr.rel (%p520) target = $region76
        $region75: #{dc_attention_forward.1} parent=71 // pred_region
          %p523 = scmp.lt.s32.totalorder %s29, 1
          %s524 = scalar_select %p523, %s29, 1
          %s525 = smul.addr %s524, 8
          %s526 = scalar_lea.vmem %s0, %s525
        $region76: #{dc_attention_forward.1} parent=71 // pred_fallthru
          _
      $region72: #{dc_attention_forward.1} parent=5 // pred_fallthru
        _
      %p527 = scmp.le.s32.totalorder 1, %s29
      %p528 = scmp.lt.s32.totalorder %s29, 3
      %p529 = pnand %p527, %p528
      %p530 = pneg %p529
      // Predicated region
      $region77: #{dc_attention_forward.1} parent=5 // pred_check
        _
      $region78: #{dc_attention_forward.1} parent=5 // pred_check_branch
        %532 = sbr.rel (%p529) target = $region80
      $region79: #{dc_attention_forward.1} parent=5 // pred_region
        %s533 = ssub.s32 %s29, 1
        // Predicated region
        $region81: #{dc_attention_forward.1} parent=79 // pred_check
          %p534 = pneg %p76
        $region82: #{dc_attention_forward.1} parent=79 // pred_check_branch
          %536 = sbr.rel (%p534) target = $region84
        $region83: #{dc_attention_forward.1} parent=79 // pred_region
          %537 = dma.done [#allocation3], 512
        $region84: #{dc_attention_forward.1} parent=79 // pred_fallthru
          _
        // Predicated region
        $region85: #{dc_attention_forward.1} parent=79 // pred_check
          %p538 = pneg %p97
        $region86: #{dc_attention_forward.1} parent=79 // pred_check_branch
          %540 = sbr.rel (%p538) target = $region88
        $region87: #{dc_attention_forward.1} parent=79 // pred_region
          %541 = dma.done [#allocation6], 16
        $region88: #{dc_attention_forward.1} parent=79 // pred_fallthru
          _
        // Predicated region
        $region89: #{dc_attention_forward.1} parent=79 // pred_check
          %p542 = pneg %p118
        $region90: #{dc_attention_forward.1} parent=79 // pred_check_branch
          %544 = sbr.rel (%p542) target = $region92
        $region91: #{dc_attention_forward.1} parent=79 // pred_region
          %545 = dma.done [#allocation6], 3072
        $region92: #{dc_attention_forward.1} parent=79 // pred_fallthru
          _
        // Predicated region
        $region93: #{dc_attention_forward.1} parent=79 // pred_check
          %p546 = pneg %p181
        $region94: #{dc_attention_forward.1} parent=79 // pred_check_branch
          %548 = sbr.rel (%p546) target = $region96
        $region95: #{dc_attention_forward.1} parent=79 // pred_region
          %549 = dma.done [#allocation9], 32
        $region96: #{dc_attention_forward.1} parent=79 // pred_fallthru
          _
        // Predicated region
        $region97: #{dc_attention_forward.1} parent=79 // pred_check
          %p550 = pneg %p223
        $region98: #{dc_attention_forward.1} parent=79 // pred_check_branch
          %552 = sbr.rel (%p550) target = $region100
        $region99: #{dc_attention_forward.1} parent=79 // pred_region
          %553 = dma.done [#allocation9], 64
        $region100: #{dc_attention_forward.1} parent=79 // pred_fallthru
          _
        // Predicated region
        $region101: #{dc_attention_forward.1} parent=79 // pred_check
          %p554 = pneg %p265
        $region102: #{dc_attention_forward.1} parent=79 // pred_check_branch
          %556 = sbr.rel (%p554) target = $region104
        $region103: #{dc_attention_forward.1} parent=79 // pred_region
          %557 = dma.done [#allocation12], 16
        $region104: #{dc_attention_forward.1} parent=79 // pred_fallthru
          _
        // Predicated region
        $region105: #{dc_attention_forward.1} parent=79 // pred_check
          %p558 = pneg %p286
        $region106: #{dc_attention_forward.1} parent=79 // pred_check_branch
          %560 = sbr.rel (%p558) target = $region108
        $region107: #{dc_attention_forward.1} parent=79 // pred_region
          %561 = dma.done [#allocation12], 128
        $region108: #{dc_attention_forward.1} parent=79 // pred_fallthru
          _
        // Predicated region
        $region109: #{dc_attention_forward.1} parent=79 // pred_check
          %p562 = pneg %p328
        $region110: #{dc_attention_forward.1} parent=79 // pred_check_branch
          %564 = sbr.rel (%p562) target = $region112
        $region111: #{dc_attention_forward.1} parent=79 // pred_region
          %565 = dma.done [#allocation15], 512
        $region112: #{dc_attention_forward.1} parent=79 // pred_fallthru
          _
        // Predicated region
        $region113: #{dc_attention_forward.1} parent=79 // pred_check
          %p566 = pneg %p349
        $region114: #{dc_attention_forward.1} parent=79 // pred_check_branch
          %568 = sbr.rel (%p566) target = $region116
        $region115: #{dc_attention_forward.1} parent=79 // pred_region
          %569 = dma.done [#allocation15], 16
        $region116: #{dc_attention_forward.1} parent=79 // pred_fallthru
          _
        %p570 = scmp.lt.s32.totalorder %s34, 1
        %s571 = scalar_select %p570, %s34, 1
        %s572 = smul.addr %s571, 8
        %s573 = scalar_lea.vmem %s0, %s572
        %p574 = pneg %p55
        %p575 = pneg %p52
        %p576 = pneg %p76
        %p577 = pneg %p73
        %p578 = pneg %p97
        %p579 = pneg %p94
        %p580 = pneg %p118
        %p581 = pneg %p115
        %p582 = pneg %p139
        %p583 = pneg %p136
        %p584 = pneg %p160
        %p585 = pneg %p157
        %p586 = pneg %p181
        %p587 = pneg %p178
        %p588 = pneg %p202
        %p589 = pneg %p199
        %p590 = pneg %p223
        %p591 = pneg %p220
        %p592 = pneg %p244
        %p593 = pneg %p241
        %p594 = pneg %p265
        %p595 = pneg %p262
        %p596 = pneg %p286
        %p597 = pneg %p283
        %p598 = pneg %p307
        %p599 = pneg %p304
        %p600 = pneg %p328
        %p601 = pneg %p325
        %p602 = pneg %p349
        %p603 = pneg %p346
        %p604 = pneg %p375
        %p605 = pneg %p372
        %s606 = sand.u32 %s362, 1
        %s607 = scalar_lea.sflag [#allocation4], %s606
        %s608 = sand.u32 %s362, 1
        %s609 = smul.addr %s608, 8
        %s610 = scalar_lea.vmem [#allocation17], %s609
        %p611 = scmp.lt.s32.totalorder %s34, 1
        %s612 = scalar_select %p611, %s34, 1
        %s613 = smul.addr %s612, 8
        %s614 = scalar_lea.vmem %s0, %s613
        %v615 = vld [vmem:[%s614] sm:$0xff]
        %v616 = vld [vmem:[#allocation2] sm:$0xff]
        %v617 = vld [vmem:[#allocation2 + $0x8] sm:$0xff]
        %v618 = vld [vmem:[#allocation2 + $0x10] sm:$0xff]
        %v619 = vld [vmem:[#allocation2 + $0x18] sm:$0xff]
        %v620 = vld [vmem:[#allocation5] sm:$0x1]
        %v622 = vlaneseq
        %v623 = vshrl.u32 %v622, 7
        %v624 = vsub.s32 0, %v623
        %v625 = vrot.slane %v620, %v624
        %vm627 = vcmask 261120
        %v629 = vsel %vm627, %v615, 0
        %631 = vmatprep.subr.mxu0 0.0
        %632 = vmatpush1.msra.mxu0 %v616
        %633 = vmatprep.subr.mxu0 0.0
        %634 = vmatpush1.msra.mxu0 %v617
        %635 = vmatprep.subr.mxu0 0.0
        %636 = vmatpush1.msra.mxu0 %v618
        %637 = vmatprep.subr.mxu0 0.0
        %638 = vmatpush1.msra.mxu0 %v619
        %639 = vmatprep.subr.mxu0 0.0
        %640 = vmatpush1.msra.mxu0 0.0
        %641 = vmatprep.subr.mxu0 0.0
        %642 = vmatpush1.msra.mxu0 0.0
        %643 = vmatprep.subr.mxu0 0.0
        %644 = vmatpush1.msra.mxu0 0.0
        %645 = vmatprep.subr.mxu0 0.0
        %646 = vmatpush1.msra.mxu0 0.0
        %647 = vmatprep.subr.mxu0 0.0
        %648 = vmatpush1.msra.mxu0 0.0
        %649 = vmatprep.subr.mxu0 0.0
        %650 = vmatpush1.msra.mxu0 0.0
        %651 = vmatprep.subr.mxu0 0.0
        %652 = vmatpush1.msra.mxu0 0.0
        %653 = vmatprep.subr.mxu0 0.0
        %654 = vmatpush1.msra.mxu0 0.0
        %655 = vmatprep.subr.mxu0 0.0
        %656 = vmatpush1.msra.mxu0 0.0
        %657 = vmatprep.subr.mxu0 0.0
        %658 = vmatpush1.msra.mxu0 0.0
        %659 = vmatprep.subr.mxu0 0.0
        %660 = vmatpush1.msra.mxu0 0.0
        %661 = vmatprep.subr.mxu0 0.0
        %662 = vmatpush1.msra.mxu0 0.0
        %663 = vmatprep.subr.mxu0 0.0
        %664 = vmatpush1.msra.mxu0 0.0
        %665 = vmatprep.subr.mxu0 0.0
        %666 = vmatpush1.msra.mxu0 0.0
        %667 = vmatprep.subr.mxu0 0.0
        %668 = vmatpush1.msra.mxu0 0.0
        %669 = vmatprep.subr.mxu0 0.0
        %670 = vmatpush1.msra.mxu0 0.0
        %671 = vmatprep.subr.mxu0 0.0
        %672 = vmatpush1.msra.mxu0 0.0
        %673 = vmatprep.subr.mxu0 0.0
        %674 = vmatpush1.msra.mxu0 0.0
        %675 = vmatprep.subr.mxu0 0.0
        %676 = vmatpush1.msra.mxu0 0.0
        %677 = vmatprep.subr.mxu0 0.0
        %678 = vmatpush1.msra.mxu0 0.0
        %679 = vmatprep.subr.mxu0 0.0
        %680 = vmatpush1.msra.mxu0 0.0
        %681 = vmatprep.subr.mxu0 0.0
        %682 = vmatpush1.msra.mxu0 0.0
        %683 = vmatprep.subr.mxu0 0.0
        %684 = vmatpush1.msra.mxu0 0.0
        %685 = vmatprep.subr.mxu0 0.0
        %686 = vmatpush1.msra.mxu0 0.0
        %687 = vmatprep.subr.mxu0 0.0
        %688 = vmatpush1.msra.mxu0 0.0
        %689 = vmatprep.subr.mxu0 0.0
        %690 = vmatpush1.msra.mxu0 0.0
        %691 = vmatprep.subr.mxu0 0.0
        %692 = vmatpush1.msra.mxu0 0.0
        %693 = vmatprep.subr.mxu0 0.0
        %694 = vmatpush1.msra.mxu0 0.0
        %695 = vmatprep.mubr.f32.mxu0 0.0
        %696 = vmatmul.mubr.f32.gmra.mrb[0].mxu0 %v629
        %v697 = vpop.f32.mrb[0].mxu0
        %v698 = vadd.f32 %v625, %v697
        %v699 = vpop.f32.mrb[0].mxu0
        %700 = vdwg.mxu0
        %v702 = vrot.slane %v698, 7
        %vm704 = vcmask 1040384
        %v705 = vsel %vm704, 0.0, %v702
        %v706 = vrot.slane %v698, 1
        %vm708 = vcmask 1046528
        %v709 = vsel %vm708, %v706, 0.0
        %v710 = vld [vmem:[#allocation7] sm:$0xff]
        %v711 = vld [vmem:[#allocation7 + $0x8] sm:$0xff]
        %v712 = vld [vmem:[#allocation7 + $0x10] sm:$0xff]
        %v713 = vld [vmem:[#allocation7 + $0x18] sm:$0xff]
        %s714 = scalar_lea.vmem [#allocation7], 32
        %v715 = vld [vmem:[%s714] sm:$0xff]
        %v716 = vld [vmem:[%s714 + $0x8] sm:$0xff]
        %v717 = vld [vmem:[%s714 + $0x10] sm:$0xff]
        %v718 = vld [vmem:[%s714 + $0x18] sm:$0xff]
        %s719 = scalar_lea.vmem [#allocation7], 64
        %v720 = vld [vmem:[%s719] sm:$0xff]
        %v721 = vld [vmem:[%s719 + $0x8] sm:$0xff]
        %v722 = vld [vmem:[%s719 + $0x10] sm:$0xff]
        %v723 = vld [vmem:[%s719 + $0x18] sm:$0xff]
        %v724 = vsel %vm627, %v698, 0
        %726 = vmatprep.subr.mxu0 0.0
        %727 = vmatpush1.msra.mxu0 %v715
        %728 = vmatprep.subr.mxu0 0.0
        %729 = vmatpush1.msra.mxu0 %v716
        %730 = vmatprep.subr.mxu0 0.0
        %731 = vmatpush1.msra.mxu0 %v717
        %732 = vmatprep.subr.mxu0 0.0
        %733 = vmatpush1.msra.mxu0 %v718
        %734 = vmatprep.subr.mxu0 0.0
        %735 = vmatpush1.msra.mxu0 0.0
        %736 = vmatprep.subr.mxu0 0.0
        %737 = vmatpush1.msra.mxu0 0.0
        %738 = vmatprep.subr.mxu0 0.0
        %739 = vmatpush1.msra.mxu0 0.0
        %740 = vmatprep.subr.mxu0 0.0
        %741 = vmatpush1.msra.mxu0 0.0
        %742 = vmatprep.subr.mxu0 0.0
        %743 = vmatpush1.msra.mxu0 0.0
        %744 = vmatprep.subr.mxu0 0.0
        %745 = vmatpush1.msra.mxu0 0.0
        %746 = vmatprep.subr.mxu0 0.0
        %747 = vmatpush1.msra.mxu0 0.0
        %748 = vmatprep.subr.mxu0 0.0
        %749 = vmatpush1.msra.mxu0 0.0
        %750 = vmatprep.subr.mxu0 0.0
        %751 = vmatpush1.msra.mxu0 0.0
        %752 = vmatprep.subr.mxu0 0.0
        %753 = vmatpush1.msra.mxu0 0.0
        %754 = vmatprep.subr.mxu0 0.0
        %755 = vmatpush1.msra.mxu0 0.0
        %756 = vmatprep.subr.mxu0 0.0
        %757 = vmatpush1.msra.mxu0 0.0
        %758 = vmatprep.subr.mxu0 0.0
        %759 = vmatpush1.msra.mxu0 0.0
        %760 = vmatprep.subr.mxu0 0.0
        %761 = vmatpush1.msra.mxu0 0.0
        %762 = vmatprep.subr.mxu0 0.0
        %763 = vmatpush1.msra.mxu0 0.0
        %764 = vmatprep.subr.mxu0 0.0
        %765 = vmatpush1.msra.mxu0 0.0
        %766 = vmatprep.subr.mxu0 0.0
        %767 = vmatpush1.msra.mxu0 0.0
        %768 = vmatprep.subr.mxu0 0.0
        %769 = vmatpush1.msra.mxu0 0.0
        %770 = vmatprep.subr.mxu0 0.0
        %771 = vmatpush1.msra.mxu0 0.0
        %772 = vmatprep.subr.mxu0 0.0
        %773 = vmatpush1.msra.mxu0 0.0
        %774 = vmatprep.subr.mxu0 0.0
        %775 = vmatpush1.msra.mxu0 0.0
        %776 = vmatprep.subr.mxu0 0.0
        %777 = vmatpush1.msra.mxu0 0.0
        %778 = vmatprep.subr.mxu0 0.0
        %779 = vmatpush1.msra.mxu0 0.0
        %780 = vmatprep.subr.mxu0 0.0
        %781 = vmatpush1.msra.mxu0 0.0
        %782 = vmatprep.subr.mxu0 0.0
        %783 = vmatpush1.msra.mxu0 0.0
        %784 = vmatprep.subr.mxu0 0.0
        %785 = vmatpush1.msra.mxu0 0.0
        %786 = vmatprep.subr.mxu0 0.0
        %787 = vmatpush1.msra.mxu0 0.0
        %788 = vmatprep.subr.mxu0 0.0
        %789 = vmatpush1.msra.mxu0 0.0
        %790 = vmatprep.mubr.f32.mxu0 0.0
        %791 = vmatmul.mubr.f32.gmra.mrb[0].mxu0 %v724
        %v792 = vpop.f32.mrb[0].mxu0
        %v793 = vadd.f32 0.0, %v792
        %v794 = vpop.f32.mrb[0].mxu0
        %795 = vdwg.mxu0
        %v797 = vsel %vm627, %v705, 0
        %799 = vmatprep.subr.mxu0 0.0
        %800 = vmatpush1.msra.mxu0 %v710
        %801 = vmatprep.subr.mxu0 0.0
        %802 = vmatpush1.msra.mxu0 %v711
        %803 = vmatprep.subr.mxu0 0.0
        %804 = vmatpush1.msra.mxu0 %v712
        %805 = vmatprep.subr.mxu0 0.0
        %806 = vmatpush1.msra.mxu0 %v713
        %807 = vmatprep.subr.mxu0 0.0
        %808 = vmatpush1.msra.mxu0 0.0
        %809 = vmatprep.subr.mxu0 0.0
        %810 = vmatpush1.msra.mxu0 0.0
        %811 = vmatprep.subr.mxu0 0.0
        %812 = vmatpush1.msra.mxu0 0.0
        %813 = vmatprep.subr.mxu0 0.0
        %814 = vmatpush1.msra.mxu0 0.0
        %815 = vmatprep.subr.mxu0 0.0
        %816 = vmatpush1.msra.mxu0 0.0
        %817 = vmatprep.subr.mxu0 0.0
        %818 = vmatpush1.msra.mxu0 0.0
        %819 = vmatprep.subr.mxu0 0.0
        %820 = vmatpush1.msra.mxu0 0.0
        %821 = vmatprep.subr.mxu0 0.0
        %822 = vmatpush1.msra.mxu0 0.0
        %823 = vmatprep.subr.mxu0 0.0
        %824 = vmatpush1.msra.mxu0 0.0
        %825 = vmatprep.subr.mxu0 0.0
        %826 = vmatpush1.msra.mxu0 0.0
        %827 = vmatprep.subr.mxu0 0.0
        %828 = vmatpush1.msra.mxu0 0.0
        %829 = vmatprep.subr.mxu0 0.0
        %830 = vmatpush1.msra.mxu0 0.0
        %831 = vmatprep.subr.mxu0 0.0
        %832 = vmatpush1.msra.mxu0 0.0
        %833 = vmatprep.subr.mxu0 0.0
        %834 = vmatpush1.msra.mxu0 0.0
        %835 = vmatprep.subr.mxu0 0.0
        %836 = vmatpush1.msra.mxu0 0.0
        %837 = vmatprep.subr.mxu0 0.0
        %838 = vmatpush1.msra.mxu0 0.0
        %839 = vmatprep.subr.mxu0 0.0
        %840 = vmatpush1.msra.mxu0 0.0
        %841 = vmatprep.subr.mxu0 0.0
        %842 = vmatpush1.msra.mxu0 0.0
        %843 = vmatprep.subr.mxu0 0.0
        %844 = vmatpush1.msra.mxu0 0.0
        %845 = vmatprep.subr.mxu0 0.0
        %846 = vmatpush1.msra.mxu0 0.0
        %847 = vmatprep.subr.mxu0 0.0
        %848 = vmatpush1.msra.mxu0 0.0
        %849 = vmatprep.subr.mxu0 0.0
        %850 = vmatpush1.msra.mxu0 0.0
        %851 = vmatprep.subr.mxu0 0.0
        %852 = vmatpush1.msra.mxu0 0.0
        %853 = vmatprep.subr.mxu0 0.0
        %854 = vmatpush1.msra.mxu0 0.0
        %855 = vmatprep.subr.mxu0 0.0
        %856 = vmatpush1.msra.mxu0 0.0
        %857 = vmatprep.subr.mxu0 0.0
        %858 = vmatpush1.msra.mxu0 0.0
        %859 = vmatprep.subr.mxu0 0.0
        %860 = vmatpush1.msra.mxu0 0.0
        %861 = vmatprep.subr.mxu0 0.0
        %862 = vmatpush1.msra.mxu0 0.0
        %863 = vmatprep.mubr.f32.mxu0 0.0
        %864 = vmatmul.mubr.f32.gmra.mrb[0].mxu0 %v797
        %v865 = vpop.f32.mrb[0].mxu0
        %v866 = vadd.f32 %v793, %v865
        %v867 = vpop.f32.mrb[0].mxu0
        %868 = vdwg.mxu0
        %v870 = vsel %vm627, %v709, 0
        %872 = vmatprep.subr.mxu0 0.0
        %873 = vmatpush1.msra.mxu0 %v720
        %874 = vmatprep.subr.mxu0 0.0
        %875 = vmatpush1.msra.mxu0 %v721
        %876 = vmatprep.subr.mxu0 0.0
        %877 = vmatpush1.msra.mxu0 %v722
        %878 = vmatprep.subr.mxu0 0.0
        %879 = vmatpush1.msra.mxu0 %v723
        %880 = vmatprep.subr.mxu0 0.0
        %881 = vmatpush1.msra.mxu0 0.0
        %882 = vmatprep.subr.mxu0 0.0
        %883 = vmatpush1.msra.mxu0 0.0
        %884 = vmatprep.subr.mxu0 0.0
        %885 = vmatpush1.msra.mxu0 0.0
        %886 = vmatprep.subr.mxu0 0.0
        %887 = vmatpush1.msra.mxu0 0.0
        %888 = vmatprep.subr.mxu0 0.0
        %889 = vmatpush1.msra.mxu0 0.0
        %890 = vmatprep.subr.mxu0 0.0
        %891 = vmatpush1.msra.mxu0 0.0
        %892 = vmatprep.subr.mxu0 0.0
        %893 = vmatpush1.msra.mxu0 0.0
        %894 = vmatprep.subr.mxu0 0.0
        %895 = vmatpush1.msra.mxu0 0.0
        %896 = vmatprep.subr.mxu0 0.0
        %897 = vmatpush1.msra.mxu0 0.0
        %898 = vmatprep.subr.mxu0 0.0
        %899 = vmatpush1.msra.mxu0 0.0
        %900 = vmatprep.subr.mxu0 0.0
        %901 = vmatpush1.msra.mxu0 0.0
        %902 = vmatprep.subr.mxu0 0.0
        %903 = vmatpush1.msra.mxu0 0.0
        %904 = vmatprep.subr.mxu0 0.0
        %905 = vmatpush1.msra.mxu0 0.0
        %906 = vmatprep.subr.mxu0 0.0
        %907 = vmatpush1.msra.mxu0 0.0
        %908 = vmatprep.subr.mxu0 0.0
        %909 = vmatpush1.msra.mxu0 0.0
        %910 = vmatprep.subr.mxu0 0.0
        %911 = vmatpush1.msra.mxu0 0.0
        %912 = vmatprep.subr.mxu0 0.0
        %913 = vmatpush1.msra.mxu0 0.0
        %914 = vmatprep.subr.mxu0 0.0
        %915 = vmatpush1.msra.mxu0 0.0
        %916 = vmatprep.subr.mxu0 0.0
        %917 = vmatpush1.msra.mxu0 0.0
        %918 = vmatprep.subr.mxu0 0.0
        %919 = vmatpush1.msra.mxu0 0.0
        %920 = vmatprep.subr.mxu0 0.0
        %921 = vmatpush1.msra.mxu0 0.0
        %922 = vmatprep.subr.mxu0 0.0
        %923 = vmatpush1.msra.mxu0 0.0
        %924 = vmatprep.subr.mxu0 0.0
        %925 = vmatpush1.msra.mxu0 0.0
        %926 = vmatprep.subr.mxu0 0.0
        %927 = vmatpush1.msra.mxu0 0.0
        %928 = vmatprep.subr.mxu0 0.0
        %929 = vmatpush1.msra.mxu0 0.0
        %930 = vmatprep.subr.mxu0 0.0
        %931 = vmatpush1.msra.mxu0 0.0
        %932 = vmatprep.subr.mxu0 0.0
        %933 = vmatpush1.msra.mxu0 0.0
        %934 = vmatprep.subr.mxu0 0.0
        %935 = vmatpush1.msra.mxu0 0.0
        %936 = vmatprep.mubr.f32.mxu0 0.0
        %937 = vmatmul.mubr.f32.gmra.mrb[0].mxu0 %v870
        %v938 = vpop.f32.mrb[0].mxu0
        %v939 = vadd.f32 0.0, %v938
        %v940 = vpop.f32.mrb[0].mxu0
        %941 = vdwg.mxu0
        %v942 = vadd.f32 %v866, %v939
        %v943 = vld [vmem:[%s4] sm:$0x1]
        %v945 = vlaneseq
        %v946 = vshrl.u32 %v945, 7
        %v947 = vsub.s32 0, %v946
        %v948 = vrot.slane %v943, %v947
        %v950 = vadd.f32 %v942, %v948
        %v951 = vld [vmem:[%s5] sm:$0xff]
        %v952 = vld [vmem:[%s5 + $0x8] sm:$0xff]
        %v953 = vld [vmem:[%s5 + $0x10] sm:$0xff]
        %v954 = vld [vmem:[%s5 + $0x18] sm:$0xff]
        %s955 = scalar_lea.vmem %s5, 32
        %v956 = vld [vmem:[%s955] sm:$0xff]
        %v957 = vld [vmem:[%s955 + $0x8] sm:$0xff]
        %v958 = vld [vmem:[%s955 + $0x10] sm:$0xff]
        %v959 = vld [vmem:[%s955 + $0x18] sm:$0xff]
        %v961 = vsel %vm627, %v950, 0
        %963 = vmatprep.subr.mxu0 0.0
        %964 = vmatpush1.msra.mxu0 %v956
        %965 = vmatprep.subr.mxu0 0.0
        %966 = vmatpush1.msra.mxu0 %v957
        %967 = vmatprep.subr.mxu0 0.0
        %968 = vmatpush1.msra.mxu0 %v958
        %969 = vmatprep.subr.mxu0 0.0
        %970 = vmatpush1.msra.mxu0 %v959
        %971 = vmatprep.subr.mxu0 0.0
        %972 = vmatpush1.msra.mxu0 0.0
        %973 = vmatprep.subr.mxu0 0.0
        %974 = vmatpush1.msra.mxu0 0.0
        %975 = vmatprep.subr.mxu0 0.0
        %976 = vmatpush1.msra.mxu0 0.0
        %977 = vmatprep.subr.mxu0 0.0
        %978 = vmatpush1.msra.mxu0 0.0
        %979 = vmatprep.subr.mxu0 0.0
        %980 = vmatpush1.msra.mxu0 0.0
        %981 = vmatprep.subr.mxu0 0.0
        %982 = vmatpush1.msra.mxu0 0.0
        %983 = vmatprep.subr.mxu0 0.0
        %984 = vmatpush1.msra.mxu0 0.0
        %985 = vmatprep.subr.mxu0 0.0
        %986 = vmatpush1.msra.mxu0 0.0
        %987 = vmatprep.subr.mxu0 0.0
        %988 = vmatpush1.msra.mxu0 0.0
        %989 = vmatprep.subr.mxu0 0.0
        %990 = vmatpush1.msra.mxu0 0.0
        %991 = vmatprep.subr.mxu0 0.0
        %992 = vmatpush1.msra.mxu0 0.0
        %993 = vmatprep.subr.mxu0 0.0
        %994 = vmatpush1.msra.mxu0 0.0
        %995 = vmatprep.subr.mxu0 0.0
        %996 = vmatpush1.msra.mxu0 0.0
        %997 = vmatprep.subr.mxu0 0.0
        %998 = vmatpush1.msra.mxu0 0.0
        %999 = vmatprep.subr.mxu0 0.0
        %1000 = vmatpush1.msra.mxu0 0.0
        %1001 = vmatprep.subr.mxu0 0.0
        %1002 = vmatpush1.msra.mxu0 0.0
        %1003 = vmatprep.subr.mxu0 0.0
        %1004 = vmatpush1.msra.mxu0 0.0
        %1005 = vmatprep.subr.mxu0 0.0
        %1006 = vmatpush1.msra.mxu0 0.0
        %1007 = vmatprep.subr.mxu0 0.0
        %1008 = vmatpush1.msra.mxu0 0.0
        %1009 = vmatprep.subr.mxu0 0.0
        %1010 = vmatpush1.msra.mxu0 0.0
        %1011 = vmatprep.subr.mxu0 0.0
        %1012 = vmatpush1.msra.mxu0 0.0
        %1013 = vmatprep.subr.mxu0 0.0
        %1014 = vmatpush1.msra.mxu0 0.0
        %1015 = vmatprep.subr.mxu0 0.0
        %1016 = vmatpush1.msra.mxu0 0.0
        %1017 = vmatprep.subr.mxu0 0.0
        %1018 = vmatpush1.msra.mxu0 0.0
        %1019 = vmatprep.subr.mxu0 0.0
        %1020 = vmatpush1.msra.mxu0 0.0
        %1021 = vmatprep.subr.mxu0 0.0
        %1022 = vmatpush1.msra.mxu0 0.0
        %1023 = vmatprep.subr.mxu0 0.0
        %1024 = vmatpush1.msra.mxu0 0.0
        %1025 = vmatprep.subr.mxu0 0.0
        %1026 = vmatpush1.msra.mxu0 0.0
        %1027 = vmatprep.mubr.f32.mxu0 0.0
        %1028 = vmatmul.mubr.f32.gmra.mrb[0].mxu0 %v961
        %v1029 = vpop.f32.mrb[0].mxu0
        %v1030 = vadd.f32 0.0, %v1029
        %v1031 = vpop.f32.mrb[0].mxu0
        %1032 = vdwg.mxu0
        %1033 = vmatprep.subr.mxu0 0.0
        %1034 = vmatpush1.msra.mxu0 %v951
        %1035 = vmatprep.subr.mxu0 0.0
        %1036 = vmatpush1.msra.mxu0 %v952
        %1037 = vmatprep.subr.mxu0 0.0
        %1038 = vmatpush1.msra.mxu0 %v953
        %1039 = vmatprep.subr.mxu0 0.0
        %1040 = vmatpush1.msra.mxu0 %v954
        %1041 = vmatprep.subr.mxu0 0.0
        %1042 = vmatpush1.msra.mxu0 0.0
        %1043 = vmatprep.subr.mxu0 0.0
        %1044 = vmatpush1.msra.mxu0 0.0
        %1045 = vmatprep.subr.mxu0 0.0
        %1046 = vmatpush1.msra.mxu0 0.0
        %1047 = vmatprep.subr.mxu0 0.0
        %1048 = vmatpush1.msra.mxu0 0.0
        %1049 = vmatprep.subr.mxu0 0.0
        %1050 = vmatpush1.msra.mxu0 0.0
        %1051 = vmatprep.subr.mxu0 0.0
        %1052 = vmatpush1.msra.mxu0 0.0
        %1053 = vmatprep.subr.mxu0 0.0
        %1054 = vmatpush1.msra.mxu0 0.0
        %1055 = vmatprep.subr.mxu0 0.0
        %1056 = vmatpush1.msra.mxu0 0.0
        %1057 = vmatprep.subr.mxu0 0.0
        %1058 = vmatpush1.msra.mxu0 0.0
        %1059 = vmatprep.subr.mxu0 0.0
        %1060 = vmatpush1.msra.mxu0 0.0
        %1061 = vmatprep.subr.mxu0 0.0
        %1062 = vmatpush1.msra.mxu0 0.0
        %1063 = vmatprep.subr.mxu0 0.0
        %1064 = vmatpush1.msra.mxu0 0.0
        %1065 = vmatprep.subr.mxu0 0.0
        %1066 = vmatpush1.msra.mxu0 0.0
        %1067 = vmatprep.subr.mxu0 0.0
        %1068 = vmatpush1.msra.mxu0 0.0
        %1069 = vmatprep.subr.mxu0 0.0
        %1070 = vmatpush1.msra.mxu0 0.0
        %1071 = vmatprep.subr.mxu0 0.0
        %1072 = vmatpush1.msra.mxu0 0.0
        %1073 = vmatprep.subr.mxu0 0.0
        %1074 = vmatpush1.msra.mxu0 0.0
        %1075 = vmatprep.subr.mxu0 0.0
        %1076 = vmatpush1.msra.mxu0 0.0
        %1077 = vmatprep.subr.mxu0 0.0
        %1078 = vmatpush1.msra.mxu0 0.0
        %1079 = vmatprep.subr.mxu0 0.0
        %1080 = vmatpush1.msra.mxu0 0.0
        %1081 = vmatprep.subr.mxu0 0.0
        %1082 = vmatpush1.msra.mxu0 0.0
        %1083 = vmatprep.subr.mxu0 0.0
        %1084 = vmatpush1.msra.mxu0 0.0
        %1085 = vmatprep.subr.mxu0 0.0
        %1086 = vmatpush1.msra.mxu0 0.0
        %1087 = vmatprep.subr.mxu0 0.0
        %1088 = vmatpush1.msra.mxu0 0.0
        %1089 = vmatprep.subr.mxu0 0.0
        %1090 = vmatpush1.msra.mxu0 0.0
        %1091 = vmatprep.subr.mxu0 0.0
        %1092 = vmatpush1.msra.mxu0 0.0
        %1093 = vmatprep.subr.mxu0 0.0
        %1094 = vmatpush1.msra.mxu0 0.0
        %1095 = vmatprep.subr.mxu0 0.0
        %1096 = vmatpush1.msra.mxu0 0.0
        %1097 = vmatprep.mubr.f32.mxu0 0.0
        %1098 = vmatmul.mubr.f32.gmra.mrb[0].mxu0 %v724
        %v1099 = vpop.f32.mrb[0].mxu0
        %v1100 = vadd.f32 %v1030, %v1099
        %v1101 = vpop.f32.mrb[0].mxu0
        %1102 = vdwg.mxu0
        %v1103 = vld [vmem:[#allocation8] sm:$0x1]
        %v1105 = vlaneseq
        %v1106 = vshrl.u32 %v1105, 7
        %v1107 = vsub.s32 0, %v1106
        %v1108 = vrot.slane %v1103, %v1107
        %v1110 = vadd.f32 %v1100, %v1108
        %1111 = vrot.lane.b32.xlu0 %v702, 96
        %v1112 = vpop.permute.xlu0 %1111
        %v1114 = vsel %vm704, 0.0, %v1112
        %s1115 = scalar_lea.vmem [#allocation7], 96
        %v1116 = vld [vmem:[%s1115] sm:$0xff]
        %v1117 = vld [vmem:[%s1115 + $0x8] sm:$0xff]
        %v1118 = vld [vmem:[%s1115 + $0x10] sm:$0xff]
        %v1119 = vld [vmem:[%s1115 + $0x18] sm:$0xff]
        %s1120 = scalar_lea.vmem [#allocation7], 128
        %v1121 = vld [vmem:[%s1120] sm:$0xff]
        %v1122 = vld [vmem:[%s1120 + $0x8] sm:$0xff]
        %v1123 = vld [vmem:[%s1120 + $0x10] sm:$0xff]
        %v1124 = vld [vmem:[%s1120 + $0x18] sm:$0xff]
        %s1125 = scalar_lea.vmem [#allocation7], 160
        %v1126 = vld [vmem:[%s1125] sm:$0xff]
        %v1127 = vld [vmem:[%s1125 + $0x8] sm:$0xff]
        %v1128 = vld [vmem:[%s1125 + $0x10] sm:$0xff]
        %v1129 = vld [vmem:[%s1125 + $0x18] sm:$0xff]
        %1130 = vrot.lane.b32.xlu0 %v698, 96
        %v1131 = vpop.permute.xlu0 %1130
        %v1132 = vsel %vm627, %v1131, 0
        %1134 = vmatprep.subr.mxu0 0.0
        %1135 = vmatpush1.msra.mxu0 %v1121
        %1136 = vmatprep.subr.mxu0 0.0
        %1137 = vmatpush1.msra.mxu0 %v1122
        %1138 = vmatprep.subr.mxu0 0.0
        %1139 = vmatpush1.msra.mxu0 %v1123
        %1140 = vmatprep.subr.mxu0 0.0
        %1141 = vmatpush1.msra.mxu0 %v1124
        %1142 = vmatprep.subr.mxu0 0.0
        %1143 = vmatpush1.msra.mxu0 0.0
        %1144 = vmatprep.subr.mxu0 0.0
        %1145 = vmatpush1.msra.mxu0 0.0
        %1146 = vmatprep.subr.mxu0 0.0
        %1147 = vmatpush1.msra.mxu0 0.0
        %1148 = vmatprep.subr.mxu0 0.0
        %1149 = vmatpush1.msra.mxu0 0.0
        %1150 = vmatprep.subr.mxu0 0.0
        %1151 = vmatpush1.msra.mxu0 0.0
        %1152 = vmatprep.subr.mxu0 0.0
        %1153 = vmatpush1.msra.mxu0 0.0
        %1154 = vmatprep.subr.mxu0 0.0
        %1155 = vmatpush1.msra.mxu0 0.0
        %1156 = vmatprep.subr.mxu0 0.0
        %1157 = vmatpush1.msra.mxu0 0.0
        %1158 = vmatprep.subr.mxu0 0.0
        %1159 = vmatpush1.msra.mxu0 0.0
        %1160 = vmatprep.subr.mxu0 0.0
        %1161 = vmatpush1.msra.mxu0 0.0
        %1162 = vmatprep.subr.mxu0 0.0
        %1163 = vmatpush1.msra.mxu0 0.0
        %1164 = vmatprep.subr.mxu0 0.0
        %1165 = vmatpush1.msra.mxu0 0.0
        %1166 = vmatprep.subr.mxu0 0.0
        %1167 = vmatpush1.msra.mxu0 0.0
        %1168 = vmatprep.subr.mxu0 0.0
        %1169 = vmatpush1.msra.mxu0 0.0
        %1170 = vmatprep.subr.mxu0 0.0
        %1171 = vmatpush1.msra.mxu0 0.0
        %1172 = vmatprep.subr.mxu0 0.0
        %1173 = vmatpush1.msra.mxu0 0.0
        %1174 = vmatprep.subr.mxu0 0.0
        %1175 = vmatpush1.msra.mxu0 0.0
        %1176 = vmatprep.subr.mxu0 0.0
        %1177 = vmatpush1.msra.mxu0 0.0
        %1178 = vmatprep.subr.mxu0 0.0
        %1179 = vmatpush1.msra.mxu0 0.0
        %1180 = vmatprep.subr.mxu0 0.0
        %1181 = vmatpush1.msra.mxu0 0.0
        %1182 = vmatprep.subr.mxu0 0.0
        %1183 = vmatpush1.msra.mxu0 0.0
        %1184 = vmatprep.subr.mxu0 0.0
        %1185 = vmatpush1.msra.mxu0 0.0
        %1186 = vmatprep.subr.mxu0 0.0
        %1187 = vmatpush1.msra.mxu0 0.0
        %1188 = vmatprep.subr.mxu0 0.0
        %1189 = vmatpush1.msra.mxu0 0.0
        %1190 = vmatprep.subr.mxu0 0.0
        %1191 = vmatpush1.msra.mxu0 0.0
        %1192 = vmatprep.subr.mxu0 0.0
        %1193 = vmatpush1.msra.mxu0 0.0
        %1194 = vmatprep.subr.mxu0 0.0
        %1195 = vmatpush1.msra.mxu0 0.0
        %1196 = vmatprep.subr.mxu0 0.0
        %1197 = vmatpush1.msra.mxu0 0.0
        %1198 = vmatprep.mubr.f32.mxu0 0.0
        %1199 = vmatmul.mubr.f32.gmra.mrb[0].mxu0 %v1132
        %v1200 = vpop.f32.mrb[0].mxu0
        %v1201 = vadd.f32 0.0, %v1200
        %v1202 = vpop.f32.mrb[0].mxu0
        %1203 = vdwg.mxu0
        %v1205 = vsel %vm627, %v1114, 0
        %1207 = vmatprep.subr.mxu0 0.0
        %1208 = vmatpush1.msra.mxu0 %v1116
        %1209 = vmatprep.subr.mxu0 0.0
        %1210 = vmatpush1.msra.mxu0 %v1117
        %1211 = vmatprep.subr.mxu0 0.0
        %1212 = vmatpush1.msra.mxu0 %v1118
        %1213 = vmatprep.subr.mxu0 0.0
        %1214 = vmatpush1.msra.mxu0 %v1119
        %1215 = vmatprep.subr.mxu0 0.0
        %1216 = vmatpush1.msra.mxu0 0.0
        %1217 = vmatprep.subr.mxu0 0.0
        %1218 = vmatpush1.msra.mxu0 0.0
        %1219 = vmatprep.subr.mxu0 0.0
        %1220 = vmatpush1.msra.mxu0 0.0
        %1221 = vmatprep.subr.mxu0 0.0
        %1222 = vmatpush1.msra.mxu0 0.0
        %1223 = vmatprep.subr.mxu0 0.0
        %1224 = vmatpush1.msra.mxu0 0.0
        %1225 = vmatprep.subr.mxu0 0.0
        %1226 = vmatpush1.msra.mxu0 0.0
        %1227 = vmatprep.subr.mxu0 0.0
        %1228 = vmatpush1.msra.mxu0 0.0
        %1229 = vmatprep.subr.mxu0 0.0
        %1230 = vmatpush1.msra.mxu0 0.0
        %1231 = vmatprep.subr.mxu0 0.0
        %1232 = vmatpush1.msra.mxu0 0.0
        %1233 = vmatprep.subr.mxu0 0.0
        %1234 = vmatpush1.msra.mxu0 0.0
        %1235 = vmatprep.subr.mxu0 0.0
        %1236 = vmatpush1.msra.mxu0 0.0
        %1237 = vmatprep.subr.mxu0 0.0
        %1238 = vmatpush1.msra.mxu0 0.0
        %1239 = vmatprep.subr.mxu0 0.0
        %1240 = vmatpush1.msra.mxu0 0.0
        %1241 = vmatprep.subr.mxu0 0.0
        %1242 = vmatpush1.msra.mxu0 0.0
        %1243 = vmatprep.subr.mxu0 0.0
        %1244 = vmatpush1.msra.mxu0 0.0
        %1245 = vmatprep.subr.mxu0 0.0
        %1246 = vmatpush1.msra.mxu0 0.0
        %1247 = vmatprep.subr.mxu0 0.0
        %1248 = vmatpush1.msra.mxu0 0.0
        %1249 = vmatprep.subr.mxu0 0.0
        %1250 = vmatpush1.msra.mxu0 0.0
        %1251 = vmatprep.subr.mxu0 0.0
        %1252 = vmatpush1.msra.mxu0 0.0
        %1253 = vmatprep.subr.mxu0 0.0
        %1254 = vmatpush1.msra.mxu0 0.0
        %1255 = vmatprep.subr.mxu0 0.0
        %1256 = vmatpush1.msra.mxu0 0.0
        %1257 = vmatprep.subr.mxu0 0.0
        %1258 = vmatpush1.msra.mxu0 0.0
        %1259 = vmatprep.subr.mxu0 0.0
        %1260 = vmatpush1.msra.mxu0 0.0
        %1261 = vmatprep.subr.mxu0 0.0
        %1262 = vmatpush1.msra.mxu0 0.0
        %1263 = vmatprep.subr.mxu0 0.0
        %1264 = vmatpush1.msra.mxu0 0.0
        %1265 = vmatprep.subr.mxu0 0.0
        %1266 = vmatpush1.msra.mxu0 0.0
        %1267 = vmatprep.subr.mxu0 0.0
        %1268 = vmatpush1.msra.mxu0 0.0
        %1269 = vmatprep.subr.mxu0 0.0
        %1270 = vmatpush1.msra.mxu0 0.0
        %1271 = vmatprep.mubr.f32.mxu0 0.0
        %1272 = vmatmul.mubr.f32.gmra.mrb[0].mxu0 %v1205
        %v1273 = vpop.f32.mrb[0].mxu0
        %v1274 = vadd.f32 %v1201, %v1273
        %v1275 = vpop.f32.mrb[0].mxu0
        %1276 = vdwg.mxu0
        %1277 = vrot.lane.b32.xlu0 %v709, 96
        %v1278 = vpop.permute.xlu0 %1277
        %v1279 = vsel %vm627, %v1278, 0
        %1281 = vmatprep.subr.mxu0 0.0
        %1282 = vmatpush1.msra.mxu0 %v1126
        %1283 = vmatprep.subr.mxu0 0.0
        %1284 = vmatpush1.msra.mxu0 %v1127
        %1285 = vmatprep.subr.mxu0 0.0
        %1286 = vmatpush1.msra.mxu0 %v1128
        %1287 = vmatprep.subr.mxu0 0.0
        %1288 = vmatpush1.msra.mxu0 %v1129
        %1289 = vmatprep.subr.mxu0 0.0
        %1290 = vmatpush1.msra.mxu0 0.0
        %1291 = vmatprep.subr.mxu0 0.0
        %1292 = vmatpush1.msra.mxu0 0.0
        %1293 = vmatprep.subr.mxu0 0.0
        %1294 = vmatpush1.msra.mxu0 0.0
        %1295 = vmatprep.subr.mxu0 0.0
        %1296 = vmatpush1.msra.mxu0 0.0
        %1297 = vmatprep.subr.mxu0 0.0
        %1298 = vmatpush1.msra.mxu0 0.0
        %1299 = vmatprep.subr.mxu0 0.0
        %1300 = vmatpush1.msra.mxu0 0.0
        %1301 = vmatprep.subr.mxu0 0.0
        %1302 = vmatpush1.msra.mxu0 0.0
        %1303 = vmatprep.subr.mxu0 0.0
        %1304 = vmatpush1.msra.mxu0 0.0
        %1305 = vmatprep.subr.mxu0 0.0
        %1306 = vmatpush1.msra.mxu0 0.0
        %1307 = vmatprep.subr.mxu0 0.0
        %1308 = vmatpush1.msra.mxu0 0.0
        %1309 = vmatprep.subr.mxu0 0.0
        %1310 = vmatpush1.msra.mxu0 0.0
        %1311 = vmatprep.subr.mxu0 0.0
        %1312 = vmatpush1.msra.mxu0 0.0
        %1313 = vmatprep.subr.mxu0 0.0
        %1314 = vmatpush1.msra.mxu0 0.0
        %1315 = vmatprep.subr.mxu0 0.0
        %1316 = vmatpush1.msra.mxu0 0.0
        %1317 = vmatprep.subr.mxu0 0.0
        %1318 = vmatpush1.msra.mxu0 0.0
        %1319 = vmatprep.subr.mxu0 0.0
        %1320 = vmatpush1.msra.mxu0 0.0
        %1321 = vmatprep.subr.mxu0 0.0
        %1322 = vmatpush1.msra.mxu0 0.0
        %1323 = vmatprep.subr.mxu0 0.0
        %1324 = vmatpush1.msra.mxu0 0.0
        %1325 = vmatprep.subr.mxu0 0.0
        %1326 = vmatpush1.msra.mxu0 0.0
        %1327 = vmatprep.subr.mxu0 0.0
        %1328 = vmatpush1.msra.mxu0 0.0
        %1329 = vmatprep.subr.mxu0 0.0
        %1330 = vmatpush1.msra.mxu0 0.0
        %1331 = vmatprep.subr.mxu0 0.0
        %1332 = vmatpush1.msra.mxu0 0.0
        %1333 = vmatprep.subr.mxu0 0.0
        %1334 = vmatpush1.msra.mxu0 0.0
        %1335 = vmatprep.subr.mxu0 0.0
        %1336 = vmatpush1.msra.mxu0 0.0
        %1337 = vmatprep.subr.mxu0 0.0
        %1338 = vmatpush1.msra.mxu0 0.0
        %1339 = vmatprep.subr.mxu0 0.0
        %1340 = vmatpush1.msra.mxu0 0.0
        %1341 = vmatprep.subr.mxu0 0.0
        %1342 = vmatpush1.msra.mxu0 0.0
        %1343 = vmatprep.subr.mxu0 0.0
        %1344 = vmatpush1.msra.mxu0 0.0
        %1345 = vmatprep.mubr.f32.mxu0 0.0
        %1346 = vmatmul.mubr.f32.gmra.mrb[0].mxu0 %v1279
        %v1347 = vpop.f32.mrb[0].mxu0
        %v1348 = vadd.f32 0.0, %v1347
        %v1349 = vpop.f32.mrb[0].mxu0
        %1350 = vdwg.mxu0
        %v1351 = vadd.f32 %v1274, %v1348
        %s1352 = scalar_lea.vmem %s4, 1
        %v1353 = vld [vmem:[%s1352] sm:$0x1]
        %v1355 = vlaneseq
        %v1356 = vshrl.u32 %v1355, 7
        %v1357 = vsub.s32 0, %v1356
        %v1358 = vrot.slane %v1353, %v1357
        %v1360 = vadd.f32 %v1351, %v1358
        %s1361 = scalar_lea.vmem %s5, 64
        %v1362 = vld [vmem:[%s1361] sm:$0xff]
        %v1363 = vld [vmem:[%s1361 + $0x8] sm:$0xff]
        %v1364 = vld [vmem:[%s1361 + $0x10] sm:$0xff]
        %v1365 = vld [vmem:[%s1361 + $0x18] sm:$0xff]
        %s1366 = scalar_lea.vmem %s5, 96
        %v1367 = vld [vmem:[%s1366] sm:$0xff]
        %v1368 = vld [vmem:[%s1366 + $0x8] sm:$0xff]
        %v1369 = vld [vmem:[%s1366 + $0x10] sm:$0xff]
        %v1370 = vld [vmem:[%s1366 + $0x18] sm:$0xff]
        %v1372 = vsel %vm627, %v1360, 0
        %1374 = vmatprep.subr.mxu0 0.0
        %1375 = vmatpush1.msra.mxu0 %v1367
        %1376 = vmatprep.subr.mxu0 0.0
        %1377 = vmatpush1.msra.mxu0 %v1368
        %1378 = vmatprep.subr.mxu0 0.0
        %1379 = vmatpush1.msra.mxu0 %v1369
        %1380 = vmatprep.subr.mxu0 0.0
        %1381 = vmatpush1.msra.mxu0 %v1370
        %1382 = vmatprep.subr.mxu0 0.0
        %1383 = vmatpush1.msra.mxu0 0.0
        %1384 = vmatprep.subr.mxu0 0.0
        %1385 = vmatpush1.msra.mxu0 0.0
        %1386 = vmatprep.subr.mxu0 0.0
        %1387 = vmatpush1.msra.mxu0 0.0
        %1388 = vmatprep.subr.mxu0 0.0
        %1389 = vmatpush1.msra.mxu0 0.0
        %1390 = vmatprep.subr.mxu0 0.0
        %1391 = vmatpush1.msra.mxu0 0.0
        %1392 = vmatprep.subr.mxu0 0.0
        %1393 = vmatpush1.msra.mxu0 0.0
        %1394 = vmatprep.subr.mxu0 0.0
        %1395 = vmatpush1.msra.mxu0 0.0
        %1396 = vmatprep.subr.mxu0 0.0
        %1397 = vmatpush1.msra.mxu0 0.0
        %1398 = vmatprep.subr.mxu0 0.0
        %1399 = vmatpush1.msra.mxu0 0.0
        %1400 = vmatprep.subr.mxu0 0.0
        %1401 = vmatpush1.msra.mxu0 0.0
        %1402 = vmatprep.subr.mxu0 0.0
        %1403 = vmatpush1.msra.mxu0 0.0
        %1404 = vmatprep.subr.mxu0 0.0
        %1405 = vmatpush1.msra.mxu0 0.0
        %1406 = vmatprep.subr.mxu0 0.0
        %1407 = vmatpush1.msra.mxu0 0.0
        %1408 = vmatprep.subr.mxu0 0.0
        %1409 = vmatpush1.msra.mxu0 0.0
        %1410 = vmatprep.subr.mxu0 0.0
        %1411 = vmatpush1.msra.mxu0 0.0
        %1412 = vmatprep.subr.mxu0 0.0
        %1413 = vmatpush1.msra.mxu0 0.0
        %1414 = vmatprep.subr.mxu0 0.0
        %1415 = vmatpush1.msra.mxu0 0.0
        %1416 = vmatprep.subr.mxu0 0.0
        %1417 = vmatpush1.msra.mxu0 0.0
        %1418 = vmatprep.subr.mxu0 0.0
        %1419 = vmatpush1.msra.mxu0 0.0
        %1420 = vmatprep.subr.mxu0 0.0
        %1421 = vmatpush1.msra.mxu0 0.0
        %1422 = vmatprep.subr.mxu0 0.0
        %1423 = vmatpush1.msra.mxu0 0.0
        %1424 = vmatprep.subr.mxu0 0.0
        %1425 = vmatpush1.msra.mxu0 0.0
        %1426 = vmatprep.subr.mxu0 0.0
        %1427 = vmatpush1.msra.mxu0 0.0
        %1428 = vmatprep.subr.mxu0 0.0
        %1429 = vmatpush1.msra.mxu0 0.0
        %1430 = vmatprep.subr.mxu0 0.0
        %1431 = vmatpush1.msra.mxu0 0.0
        %1432 = vmatprep.subr.mxu0 0.0
        %1433 = vmatpush1.msra.mxu0 0.0
        %1434 = vmatprep.subr.mxu0 0.0
        %1435 = vmatpush1.msra.mxu0 0.0
        %1436 = vmatprep.subr.mxu0 0.0
        %1437 = vmatpush1.msra.mxu0 0.0
        %1438 = vmatprep.mubr.f32.mxu0 0.0
        %1439 = vmatmul.mubr.f32.gmra.mrb[0].mxu0 %v1372
        %v1440 = vpop.f32.mrb[0].mxu0
        %v1441 = vadd.f32 0.0, %v1440
        %v1442 = vpop.f32.mrb[0].mxu0
        %1443 = vdwg.mxu0
        %1444 = vmatprep.subr.mxu0 0.0
        %1445 = vmatpush1.msra.mxu0 %v1362
        %1446 = vmatprep.subr.mxu0 0.0
        %1447 = vmatpush1.msra.mxu0 %v1363
        %1448 = vmatprep.subr.mxu0 0.0
        %1449 = vmatpush1.msra.mxu0 %v1364
        %1450 = vmatprep.subr.mxu0 0.0
        %1451 = vmatpush1.msra.mxu0 %v1365
        %1452 = vmatprep.subr.mxu0 0.0
        %1453 = vmatpush1.msra.mxu0 0.0
        %1454 = vmatprep.subr.mxu0 0.0
        %1455 = vmatpush1.msra.mxu0 0.0
        %1456 = vmatprep.subr.mxu0 0.0
        %1457 = vmatpush1.msra.mxu0 0.0
        %1458 = vmatprep.subr.mxu0 0.0
        %1459 = vmatpush1.msra.mxu0 0.0
        %1460 = vmatprep.subr.mxu0 0.0
        %1461 = vmatpush1.msra.mxu0 0.0
        %1462 = vmatprep.subr.mxu0 0.0
        %1463 = vmatpush1.msra.mxu0 0.0
        %1464 = vmatprep.subr.mxu0 0.0
        %1465 = vmatpush1.msra.mxu0 0.0
        %1466 = vmatprep.subr.mxu0 0.0
        %1467 = vmatpush1.msra.mxu0 0.0
        %1468 = vmatprep.subr.mxu0 0.0
        %1469 = vmatpush1.msra.mxu0 0.0
        %1470 = vmatprep.subr.mxu0 0.0
        %1471 = vmatpush1.msra.mxu0 0.0
        %1472 = vmatprep.subr.mxu0 0.0
        %1473 = vmatpush1.msra.mxu0 0.0
        %1474 = vmatprep.subr.mxu0 0.0
        %1475 = vmatpush1.msra.mxu0 0.0
        %1476 = vmatprep.subr.mxu0 0.0
        %1477 = vmatpush1.msra.mxu0 0.0
        %1478 = vmatprep.subr.mxu0 0.0
        %1479 = vmatpush1.msra.mxu0 0.0
        %1480 = vmatprep.subr.mxu0 0.0
        %1481 = vmatpush1.msra.mxu0 0.0
        %1482 = vmatprep.subr.mxu0 0.0
        %1483 = vmatpush1.msra.mxu0 0.0
        %1484 = vmatprep.subr.mxu0 0.0
        %1485 = vmatpush1.msra.mxu0 0.0
        %1486 = vmatprep.subr.mxu0 0.0
        %1487 = vmatpush1.msra.mxu0 0.0
        %1488 = vmatprep.subr.mxu0 0.0
        %1489 = vmatpush1.msra.mxu0 0.0
        %1490 = vmatprep.subr.mxu0 0.0
        %1491 = vmatpush1.msra.mxu0 0.0
        %1492 = vmatprep.subr.mxu0 0.0
        %1493 = vmatpush1.msra.mxu0 0.0
        %1494 = vmatprep.subr.mxu0 0.0
        %1495 = vmatpush1.msra.mxu0 0.0
        %1496 = vmatprep.subr.mxu0 0.0
        %1497 = vmatpush1.msra.mxu0 0.0
        %1498 = vmatprep.subr.mxu0 0.0
        %1499 = vmatpush1.msra.mxu0 0.0
        %1500 = vmatprep.subr.mxu0 0.0
        %1501 = vmatpush1.msra.mxu0 0.0
        %1502 = vmatprep.subr.mxu0 0.0
        %1503 = vmatpush1.msra.mxu0 0.0
        %1504 = vmatprep.subr.mxu0 0.0
        %1505 = vmatpush1.msra.mxu0 0.0
        %1506 = vmatprep.subr.mxu0 0.0
        %1507 = vmatpush1.msra.mxu0 0.0
        %1508 = vmatprep.mubr.f32.mxu0 0.0
        %1509 = vmatmul.mubr.f32.gmra.mrb[0].mxu0 %v1132
        %v1510 = vpop.f32.mrb[0].mxu0
        %v1511 = vadd.f32 %v1441, %v1510
        %v1512 = vpop.f32.mrb[0].mxu0
        %1513 = vdwg.mxu0
        %s1514 = scalar_lea.vmem [#allocation8], 1
        %v1515 = vld [vmem:[%s1514] sm:$0x1]
        %v1517 = vlaneseq
        %v1518 = vshrl.u32 %v1517, 7
        %v1519 = vsub.s32 0, %v1518
        %v1520 = vrot.slane %v1515, %v1519
        %v1522 = vadd.f32 %v1511, %v1520
        %v1523 = vrot.slane %v615, 7
        %v1525 = vsel %vm704, 0.0, %v1523
        %v1526 = vrot.slane %v615, 1
        %v1528 = vsel %vm708, %v1526, 0.0
        %v1529 = vld [vmem:[%s7] sm:$0x7]
        %v1530 = vlaneseq
        %v1531 = vshrl.u32 %v1530, 7
        %v1532 = vsub.s32 0, %v1531
        %v1533 = vrot.slane %v1529, %v1532
        %v1534 = vmul.f32 %v1525, %v1533
        %v1535 = vlaneseq
        %v1536 = vshrl.u32 %v1535, 7
        %v1537 = vsub.s32 1, %v1536
        %v1538 = vrot.slane %v1529, %v1537
        %v1539 = vmul.f32 %v615, %v1538
        %v1540 = vadd.f32 %v1534, %v1539
        %v1541 = vlaneseq
        %v1542 = vshrl.u32 %v1541, 7
        %v1543 = vsub.s32 2, %v1542
        %v1544 = vrot.slane %v1529, %v1543
        %v1545 = vmul.f32 %v1528, %v1544
        %v1546 = vadd.f32 %v1540, %v1545
        %v1547 = vld [vmem:[#allocation10] sm:$0x1]
        %v1549 = vlaneseq
        %v1550 = vshrl.u32 %v1549, 7
        %v1551 = vsub.s32 0, %v1550
        %v1552 = vrot.slane %v1547, %v1551
        %v1554 = vadd.f32 %v1546, %v1552
        %v1555 = vmul.f32 %v1554, 0.70710677
        %v1556 = vand.u32 2147483647, %v1555
        %v1557 = vmul.f32 %v1556, 0.3275911
        %v1558 = vadd.f32 %v1557, 1.0
        %v1559 = vrcp.pop %v1558
        %v1560 = vmul.f32 1.0, %v1559
        %v1561 = vmul.f32 %v1560, 1.0614054
        %v1562 = vsub.f32 %v1561, 1.4531521
        %v1563 = vmul.f32 %v1562, %v1560
        %v1564 = vadd.f32 %v1563, 1.4214138
        %v1565 = vmul.f32 %v1564, %v1560
        %v1566 = vsub.f32 %v1565, 0.28449672
        %v1567 = vmul.f32 %v1566, %v1560
        %v1568 = vadd.f32 %v1567, 0.2548296
        %v1569 = vmul.f32 %v1568, %v1560
        %v1570 = vsub.f32 0.0, %v1556
        %v1571 = vmul.f32 %v1570, %v1556
        %v1572 = vmul.f32 %v1571, 1.442695
        %v1573 = vpow.pop %v1572
        %v1574 = vmul.f32 %v1569, %v1573
        %v1575 = vsub.f32 1.0, %v1574
        %vm1576 = vcmp.ge.f32.partialorder %v1555, 0.0
        %v1577 = vsub.f32 0.0, %v1575
        %v1578 = vsel %vm1576, %v1575, %v1577
        %v1579 = vmul.f32 %v1554, 0.5
        %v1580 = vadd.f32 %v1578, 1.0
        %v1581 = vmul.f32 %v1579, %v1580
        %v1582 = vld [vmem:[%s9] sm:$0xff]
        %v1583 = vld [vmem:[%s9 + $0x8] sm:$0xff]
        %v1584 = vld [vmem:[%s9 + $0x10] sm:$0xff]
        %v1585 = vld [vmem:[%s9 + $0x18] sm:$0xff]
        %s1586 = scalar_lea.vmem %s7, 4
        %v1587 = vld [vmem:[%s1586] sm:$0x7]
        %v1588 = vlaneseq
        %v1589 = vshrl.u32 %v1588, 7
        %v1590 = vsub.s32 0, %v1589
        %v1591 = vrot.slane %v1587, %v1590
        %v1592 = vmul.f32 %v1525, %v1591
        %v1593 = vlaneseq
        %v1594 = vshrl.u32 %v1593, 7
        %v1595 = vsub.s32 1, %v1594
        %v1596 = vrot.slane %v1587, %v1595
        %v1597 = vmul.f32 %v615, %v1596
        %v1598 = vadd.f32 %v1592, %v1597
        %v1599 = vlaneseq
        %v1600 = vshrl.u32 %v1599, 7
        %v1601 = vsub.s32 2, %v1600
        %v1602 = vrot.slane %v1587, %v1601
        %v1603 = vmul.f32 %v1528, %v1602
        %v1604 = vadd.f32 %v1598, %v1603
        %s1605 = scalar_lea.vmem [#allocation10], 1
        %v1606 = vld [vmem:[%s1605] sm:$0x1]
        %v1608 = vlaneseq
        %v1609 = vshrl.u32 %v1608, 7
        %v1610 = vsub.s32 0, %v1609
        %v1611 = vrot.slane %v1606, %v1610
        %v1613 = vadd.f32 %v1604, %v1611
        %v1614 = vmul.f32 %v1613, 0.70710677
        %v1615 = vand.u32 2147483647, %v1614
        %v1616 = vmul.f32 %v1615, 0.3275911
        %v1617 = vadd.f32 %v1616, 1.0
        %v1618 = vrcp.pop %v1617
        %v1619 = vmul.f32 1.0, %v1618
        %v1620 = vmul.f32 %v1619, 1.0614054
        %v1621 = vsub.f32 %v1620, 1.4531521
        %v1622 = vmul.f32 %v1621, %v1619
        %v1623 = vadd.f32 %v1622, 1.4214138
        %v1624 = vmul.f32 %v1623, %v1619
        %v1625 = vsub.f32 %v1624, 0.28449672
        %v1626 = vmul.f32 %v1625, %v1619
        %v1627 = vadd.f32 %v1626, 0.2548296
        %v1628 = vmul.f32 %v1627, %v1619
        %v1629 = vsub.f32 0.0, %v1615
        %v1630 = vmul.f32 %v1629, %v1615
        %v1631 = vmul.f32 %v1630, 1.442695
        %v1632 = vpow.pop %v1631
        %v1633 = vmul.f32 %v1628, %v1632
        %v1634 = vsub.f32 1.0, %v1633
        %vm1635 = vcmp.ge.f32.partialorder %v1614, 0.0
        %v1636 = vsub.f32 0.0, %v1634
        %v1637 = vsel %vm1635, %v1634, %v1636
        %v1638 = vmul.f32 %v1613, 0.5
        %v1639 = vadd.f32 %v1637, 1.0
        %v1640 = vmul.f32 %v1638, %v1639
        %s1641 = scalar_lea.vmem %s9, 32
        %v1642 = vld [vmem:[%s1641] sm:$0xff]
        %v1643 = vld [vmem:[%s1641 + $0x8] sm:$0xff]
        %v1644 = vld [vmem:[%s1641 + $0x10] sm:$0xff]
        %v1645 = vld [vmem:[%s1641 + $0x18] sm:$0xff]
        %v1647 = vsel %vm627, %v1640, 0
        %1649 = vmatprep.subr.mxu0 0.0
        %1650 = vmatpush1.msra.mxu0 %v1642
        %1651 = vmatprep.subr.mxu0 0.0
        %1652 = vmatpush1.msra.mxu0 %v1643
        %1653 = vmatprep.subr.mxu0 0.0
        %1654 = vmatpush1.msra.mxu0 %v1644
        %1655 = vmatprep.subr.mxu0 0.0
        %1656 = vmatpush1.msra.mxu0 %v1645
        %1657 = vmatprep.subr.mxu0 0.0
        %1658 = vmatpush1.msra.mxu0 0.0
        %1659 = vmatprep.subr.mxu0 0.0
        %1660 = vmatpush1.msra.mxu0 0.0
        %1661 = vmatprep.subr.mxu0 0.0
        %1662 = vmatpush1.msra.mxu0 0.0
        %1663 = vmatprep.subr.mxu0 0.0
        %1664 = vmatpush1.msra.mxu0 0.0
        %1665 = vmatprep.subr.mxu0 0.0
        %1666 = vmatpush1.msra.mxu0 0.0
        %1667 = vmatprep.subr.mxu0 0.0
        %1668 = vmatpush1.msra.mxu0 0.0
        %1669 = vmatprep.subr.mxu0 0.0
        %1670 = vmatpush1.msra.mxu0 0.0
        %1671 = vmatprep.subr.mxu0 0.0
        %1672 = vmatpush1.msra.mxu0 0.0
        %1673 = vmatprep.subr.mxu0 0.0
        %1674 = vmatpush1.msra.mxu0 0.0
        %1675 = vmatprep.subr.mxu0 0.0
        %1676 = vmatpush1.msra.mxu0 0.0
        %1677 = vmatprep.subr.mxu0 0.0
        %1678 = vmatpush1.msra.mxu0 0.0
        %1679 = vmatprep.subr.mxu0 0.0
        %1680 = vmatpush1.msra.mxu0 0.0
        %1681 = vmatprep.subr.mxu0 0.0
        %1682 = vmatpush1.msra.mxu0 0.0
        %1683 = vmatprep.subr.mxu0 0.0
        %1684 = vmatpush1.msra.mxu0 0.0
        %1685 = vmatprep.subr.mxu0 0.0
        %1686 = vmatpush1.msra.mxu0 0.0
        %1687 = vmatprep.subr.mxu0 0.0
        %1688 = vmatpush1.msra.mxu0 0.0
        %1689 = vmatprep.subr.mxu0 0.0
        %1690 = vmatpush1.msra.mxu0 0.0
        %1691 = vmatprep.subr.mxu0 0.0
        %1692 = vmatpush1.msra.mxu0 0.0
        %1693 = vmatprep.subr.mxu0 0.0
        %1694 = vmatpush1.msra.mxu0 0.0
        %1695 = vmatprep.subr.mxu0 0.0
        %1696 = vmatpush1.msra.mxu0 0.0
        %1697 = vmatprep.subr.mxu0 0.0
        %1698 = vmatpush1.msra.mxu0 0.0
        %1699 = vmatprep.subr.mxu0 0.0
        %1700 = vmatpush1.msra.mxu0 0.0
        %1701 = vmatprep.subr.mxu0 0.0
        %1702 = vmatpush1.msra.mxu0 0.0
        %1703 = vmatprep.subr.mxu0 0.0
        %1704 = vmatpush1.msra.mxu0 0.0
        %1705 = vmatprep.subr.mxu0 0.0
        %1706 = vmatpush1.msra.mxu0 0.0
        %1707 = vmatprep.subr.mxu0 0.0
        %1708 = vmatpush1.msra.mxu0 0.0
        %1709 = vmatprep.subr.mxu0 0.0
        %1710 = vmatpush1.msra.mxu0 0.0
        %1711 = vmatprep.subr.mxu0 0.0
        %1712 = vmatpush1.msra.mxu0 0.0
        %1713 = vmatprep.mubr.f32.mxu0 0.0
        %1714 = vmatmul.mubr.f32.gmra.mrb[0].mxu0 %v1647
        %v1715 = vpop.f32.mrb[0].mxu0
        %v1716 = vadd.f32 0.0, %v1715
        %v1717 = vpop.f32.mrb[0].mxu0
        %1718 = vdwg.mxu0
        %v1720 = vsel %vm627, %v1581, 0
        %1722 = vmatprep.subr.mxu0 0.0
        %1723 = vmatpush1.msra.mxu0 %v1582
        %1724 = vmatprep.subr.mxu0 0.0
        %1725 = vmatpush1.msra.mxu0 %v1583
        %1726 = vmatprep.subr.mxu0 0.0
        %1727 = vmatpush1.msra.mxu0 %v1584
        %1728 = vmatprep.subr.mxu0 0.0
        %1729 = vmatpush1.msra.mxu0 %v1585
        %1730 = vmatprep.subr.mxu0 0.0
        %1731 = vmatpush1.msra.mxu0 0.0
        %1732 = vmatprep.subr.mxu0 0.0
        %1733 = vmatpush1.msra.mxu0 0.0
        %1734 = vmatprep.subr.mxu0 0.0
        %1735 = vmatpush1.msra.mxu0 0.0
        %1736 = vmatprep.subr.mxu0 0.0
        %1737 = vmatpush1.msra.mxu0 0.0
        %1738 = vmatprep.subr.mxu0 0.0
        %1739 = vmatpush1.msra.mxu0 0.0
        %1740 = vmatprep.subr.mxu0 0.0
        %1741 = vmatpush1.msra.mxu0 0.0
        %1742 = vmatprep.subr.mxu0 0.0
        %1743 = vmatpush1.msra.mxu0 0.0
        %1744 = vmatprep.subr.mxu0 0.0
        %1745 = vmatpush1.msra.mxu0 0.0
        %1746 = vmatprep.subr.mxu0 0.0
        %1747 = vmatpush1.msra.mxu0 0.0
        %1748 = vmatprep.subr.mxu0 0.0
        %1749 = vmatpush1.msra.mxu0 0.0
        %1750 = vmatprep.subr.mxu0 0.0
        %1751 = vmatpush1.msra.mxu0 0.0
        %1752 = vmatprep.subr.mxu0 0.0
        %1753 = vmatpush1.msra.mxu0 0.0
        %1754 = vmatprep.subr.mxu0 0.0
        %1755 = vmatpush1.msra.mxu0 0.0
        %1756 = vmatprep.subr.mxu0 0.0
        %1757 = vmatpush1.msra.mxu0 0.0
        %1758 = vmatprep.subr.mxu0 0.0
        %1759 = vmatpush1.msra.mxu0 0.0
        %1760 = vmatprep.subr.mxu0 0.0
        %1761 = vmatpush1.msra.mxu0 0.0
        %1762 = vmatprep.subr.mxu0 0.0
        %1763 = vmatpush1.msra.mxu0 0.0
        %1764 = vmatprep.subr.mxu0 0.0
        %1765 = vmatpush1.msra.mxu0 0.0
        %1766 = vmatprep.subr.mxu0 0.0
        %1767 = vmatpush1.msra.mxu0 0.0
        %1768 = vmatprep.subr.mxu0 0.0
        %1769 = vmatpush1.msra.mxu0 0.0
        %1770 = vmatprep.subr.mxu0 0.0
        %1771 = vmatpush1.msra.mxu0 0.0
        %1772 = vmatprep.subr.mxu0 0.0
        %1773 = vmatpush1.msra.mxu0 0.0
        %1774 = vmatprep.subr.mxu0 0.0
        %1775 = vmatpush1.msra.mxu0 0.0
        %1776 = vmatprep.subr.mxu0 0.0
        %1777 = vmatpush1.msra.mxu0 0.0
        %1778 = vmatprep.subr.mxu0 0.0
        %1779 = vmatpush1.msra.mxu0 0.0
        %1780 = vmatprep.subr.mxu0 0.0
        %1781 = vmatpush1.msra.mxu0 0.0
        %1782 = vmatprep.subr.mxu0 0.0
        %1783 = vmatpush1.msra.mxu0 0.0
        %1784 = vmatprep.subr.mxu0 0.0
        %1785 = vmatpush1.msra.mxu0 0.0
        %1786 = vmatprep.mubr.f32.mxu0 0.0
        %1787 = vmatmul.mubr.f32.gmra.mrb[0].mxu0 %v1720
        %v1788 = vpop.f32.mrb[0].mxu0
        %v1789 = vadd.f32 %v1716, %v1788
        %v1790 = vpop.f32.mrb[0].mxu0
        %1791 = vdwg.mxu0
        %v1792 = vld [vmem:[#allocation11] sm:$0x1]
        %v1794 = vlaneseq
        %v1795 = vshrl.u32 %v1794, 7
        %v1796 = vsub.s32 0, %v1795
        %v1797 = vrot.slane %v1792, %v1796
        %v1799 = vadd.f32 %v1789, %v1797
        %v1800 = vxor.u32 %v1799, 2147483648
        %v1801 = vmul.f32 %v1800, 1.442695
        %v1802 = vpow.pop %v1801
        %v1803 = vadd.f32 %v1802, 1.0
        %v1804 = vrcp.pop %v1803
        %v1805 = vmul.f32 1.0, %v1804
        %s1806 = scalar_lea.vmem %s7, 8
        %v1807 = vld [vmem:[%s1806] sm:$0x7]
        %v1808 = vlaneseq
        %v1809 = vshrl.u32 %v1808, 7
        %v1810 = vsub.s32 0, %v1809
        %v1811 = vrot.slane %v1807, %v1810
        %v1812 = vmul.f32 %v1525, %v1811
        %v1813 = vlaneseq
        %v1814 = vshrl.u32 %v1813, 7
        %v1815 = vsub.s32 1, %v1814
        %v1816 = vrot.slane %v1807, %v1815
        %v1817 = vmul.f32 %v615, %v1816
        %v1818 = vadd.f32 %v1812, %v1817
        %v1819 = vlaneseq
        %v1820 = vshrl.u32 %v1819, 7
        %v1821 = vsub.s32 2, %v1820
        %v1822 = vrot.slane %v1807, %v1821
        %v1823 = vmul.f32 %v1528, %v1822
        %v1824 = vadd.f32 %v1818, %v1823
        %s1825 = scalar_lea.vmem [#allocation10], 2
        %v1826 = vld [vmem:[%s1825] sm:$0x1]
        %v1828 = vlaneseq
        %v1829 = vshrl.u32 %v1828, 7
        %v1830 = vsub.s32 0, %v1829
        %v1831 = vrot.slane %v1826, %v1830
        %v1833 = vadd.f32 %v1824, %v1831
        %v1834 = vmul.f32 %v1833, 0.70710677
        %v1835 = vand.u32 2147483647, %v1834
        %v1836 = vmul.f32 %v1835, 0.3275911
        %v1837 = vadd.f32 %v1836, 1.0
        %v1838 = vrcp.pop %v1837
        %v1839 = vmul.f32 1.0, %v1838
        %v1840 = vmul.f32 %v1839, 1.0614054
        %v1841 = vsub.f32 %v1840, 1.4531521
        %v1842 = vmul.f32 %v1841, %v1839
        %v1843 = vadd.f32 %v1842, 1.4214138
        %v1844 = vmul.f32 %v1843, %v1839
        %v1845 = vsub.f32 %v1844, 0.28449672
        %v1846 = vmul.f32 %v1845, %v1839
        %v1847 = vadd.f32 %v1846, 0.2548296
        %v1848 = vmul.f32 %v1847, %v1839
        %v1849 = vsub.f32 0.0, %v1835
        %v1850 = vmul.f32 %v1849, %v1835
        %v1851 = vmul.f32 %v1850, 1.442695
        %v1852 = vpow.pop %v1851
        %v1853 = vmul.f32 %v1848, %v1852
        %v1854 = vsub.f32 1.0, %v1853
        %vm1855 = vcmp.ge.f32.partialorder %v1834, 0.0
        %v1856 = vsub.f32 0.0, %v1854
        %v1857 = vsel %vm1855, %v1854, %v1856
        %v1858 = vmul.f32 %v1833, 0.5
        %v1859 = vadd.f32 %v1857, 1.0
        %v1860 = vmul.f32 %v1858, %v1859
        %v1861 = vld [vmem:[#allocation13] sm:$0xf]
        %s1862 = scalar_lea.vmem %s7, 12
        %v1863 = vld [vmem:[%s1862] sm:$0x7]
        %v1864 = vlaneseq
        %v1865 = vshrl.u32 %v1864, 7
        %v1866 = vsub.s32 0, %v1865
        %v1867 = vrot.slane %v1863, %v1866
        %v1868 = vmul.f32 %v1525, %v1867
        %v1869 = vlaneseq
        %v1870 = vshrl.u32 %v1869, 7
        %v1871 = vsub.s32 1, %v1870
        %v1872 = vrot.slane %v1863, %v1871
        %v1873 = vmul.f32 %v615, %v1872
        %v1874 = vadd.f32 %v1868, %v1873
        %v1875 = vlaneseq
        %v1876 = vshrl.u32 %v1875, 7
        %v1877 = vsub.s32 2, %v1876
        %v1878 = vrot.slane %v1863, %v1877
        %v1879 = vmul.f32 %v1528, %v1878
        %v1880 = vadd.f32 %v1874, %v1879
        %s1881 = scalar_lea.vmem [#allocation10], 3
        %v1882 = vld [vmem:[%s1881] sm:$0x1]
        %v1884 = vlaneseq
        %v1885 = vshrl.u32 %v1884, 7
        %v1886 = vsub.s32 0, %v1885
        %v1887 = vrot.slane %v1882, %v1886
        %v1889 = vadd.f32 %v1880, %v1887
        %v1890 = vmul.f32 %v1889, 0.70710677
        %v1891 = vand.u32 2147483647, %v1890
        %v1892 = vmul.f32 %v1891, 0.3275911
        %v1893 = vadd.f32 %v1892, 1.0
        %v1894 = vrcp.pop %v1893
        %v1895 = vmul.f32 1.0, %v1894
        %v1896 = vmul.f32 %v1895, 1.0614054
        %v1897 = vsub.f32 %v1896, 1.4531521
        %v1898 = vmul.f32 %v1897, %v1895
        %v1899 = vadd.f32 %v1898, 1.4214138
        %v1900 = vmul.f32 %v1899, %v1895
        %v1901 = vsub.f32 %v1900, 0.28449672
        %v1902 = vmul.f32 %v1901, %v1895
        %v1903 = vadd.f32 %v1902, 0.2548296
        %v1904 = vmul.f32 %v1903, %v1895
        %v1905 = vsub.f32 0.0, %v1891
        %v1906 = vmul.f32 %v1905, %v1891
        %v1907 = vmul.f32 %v1906, 1.442695
        %v1908 = vpow.pop %v1907
        %v1909 = vmul.f32 %v1904, %v1908
        %v1910 = vsub.f32 1.0, %v1909
        %vm1911 = vcmp.ge.f32.partialorder %v1890, 0.0
        %v1912 = vsub.f32 0.0, %v1910
        %v1913 = vsel %vm1911, %v1910, %v1912
        %v1914 = vmul.f32 %v1889, 0.5
        %v1915 = vadd.f32 %v1913, 1.0
        %v1916 = vmul.f32 %v1914, %v1915
        %s1917 = scalar_lea.vmem [#allocation13], 4
        %v1918 = vld [vmem:[%s1917] sm:$0xf]
        %v1920 = vsel %vm627, %v1918, 0
        %v1923 = vsel %vm627, %v1916, 0
        %1925 = vmatprep.subr.mxu0 0.0
        %1926 = vmatpush1.xpose.msra.mxu0 %v1923
        %1927 = vmatprep.subr.mxu0 0.0
        %1928 = vmatpush1.xpose.msra.mxu0 0.0
        %1929 = vmatprep.subr.mxu0 0.0
        %1930 = vmatpush1.xpose.msra.mxu0 0.0
        %1931 = vmatprep.subr.mxu0 0.0
        %1932 = vmatpush1.xpose.msra.mxu0 0.0
        %1933 = vmatprep.subr.mxu0 0.0
        %1934 = vmatpush1.xpose.msra.mxu0 0.0
        %1935 = vmatprep.subr.mxu0 0.0
        %1936 = vmatpush1.xpose.msra.mxu0 0.0
        %1937 = vmatprep.subr.mxu0 0.0
        %1938 = vmatpush1.xpose.msra.mxu0 0.0
        %1939 = vmatprep.subr.mxu0 0.0
        %1940 = vmatpush1.xpose.msra.mxu0 0.0
        %1941 = vmatprep.subr.mxu0 0.0
        %1942 = vmatpush1.xpose.msra.mxu0 0.0
        %1943 = vmatprep.subr.mxu0 0.0
        %1944 = vmatpush1.xpose.msra.mxu0 0.0
        %1945 = vmatprep.subr.mxu0 0.0
        %1946 = vmatpush1.xpose.msra.mxu0 0.0
        %1947 = vmatprep.subr.mxu0 0.0
        %1948 = vmatpush1.xpose.msra.mxu0 0.0
        %1949 = vmatprep.subr.mxu0 0.0
        %1950 = vmatpush1.xpose.msra.mxu0 0.0
        %1951 = vmatprep.subr.mxu0 0.0
        %1952 = vmatpush1.xpose.msra.mxu0 0.0
        %1953 = vmatprep.subr.mxu0 0.0
        %1954 = vmatpush1.xpose.msra.mxu0 0.0
        %1955 = vmatprep.subr.mxu0 0.0
        %1956 = vmatpush1.xpose.msra.mxu0 0.0
        %1957 = vmatprep.subr.mxu0 0.0
        %1958 = vmatpush1.xpose.msra.mxu0 0.0
        %1959 = vmatprep.subr.mxu0 0.0
        %1960 = vmatpush1.xpose.msra.mxu0 0.0
        %1961 = vmatprep.subr.mxu0 0.0
        %1962 = vmatpush1.xpose.msra.mxu0 0.0
        %1963 = vmatprep.subr.mxu0 0.0
        %1964 = vmatpush1.xpose.msra.mxu0 0.0
        %1965 = vmatprep.subr.mxu0 0.0
        %1966 = vmatpush1.xpose.msra.mxu0 0.0
        %1967 = vmatprep.subr.mxu0 0.0
        %1968 = vmatpush1.xpose.msra.mxu0 0.0
        %1969 = vmatprep.subr.mxu0 0.0
        %1970 = vmatpush1.xpose.msra.mxu0 0.0
        %1971 = vmatprep.subr.mxu0 0.0
        %1972 = vmatpush1.xpose.msra.mxu0 0.0
        %1973 = vmatprep.subr.mxu0 0.0
        %1974 = vmatpush1.xpose.msra.mxu0 0.0
        %1975 = vmatprep.subr.mxu0 0.0
        %1976 = vmatpush1.xpose.msra.mxu0 0.0
        %1977 = vmatprep.subr.mxu0 0.0
        %1978 = vmatpush1.xpose.msra.mxu0 0.0
        %1979 = vmatprep.subr.mxu0 0.0
        %1980 = vmatpush1.xpose.msra.mxu0 0.0
        %1981 = vmatprep.subr.mxu0 0.0
        %1982 = vmatpush1.xpose.msra.mxu0 0.0
        %1983 = vmatprep.subr.mxu0 0.0
        %1984 = vmatpush1.xpose.msra.mxu0 0.0
        %1985 = vmatprep.subr.mxu0 0.0
        %1986 = vmatpush1.xpose.msra.mxu0 0.0
        %1987 = vmatprep.subr.mxu0 0.0
        %1988 = vmatpush1.xpose.msra.mxu0 0.0
        %1989 = vmatprep.mubr.f32.mxu0 0.0
        %1990 = vmatmul.mubr.f32.gmra.mrb[0].mxu0 %v1920
        %v1991 = vpop.f32.mrb[0].mxu0
        %v1992 = vadd.f32 0.0, %v1991
        %v1993 = vpop.f32.mrb[0].mxu0
        %1994 = vdwg.mxu0
        %v1996 = vsel %vm627, %v1861, 0
        %v1999 = vsel %vm627, %v1860, 0
        %2001 = vmatprep.subr.mxu0 0.0
        %2002 = vmatpush1.xpose.msra.mxu0 %v1999
        %2003 = vmatprep.subr.mxu0 0.0
        %2004 = vmatpush1.xpose.msra.mxu0 0.0
        %2005 = vmatprep.subr.mxu0 0.0
        %2006 = vmatpush1.xpose.msra.mxu0 0.0
        %2007 = vmatprep.subr.mxu0 0.0
        %2008 = vmatpush1.xpose.msra.mxu0 0.0
        %2009 = vmatprep.subr.mxu0 0.0
        %2010 = vmatpush1.xpose.msra.mxu0 0.0
        %2011 = vmatprep.subr.mxu0 0.0
        %2012 = vmatpush1.xpose.msra.mxu0 0.0
        %2013 = vmatprep.subr.mxu0 0.0
        %2014 = vmatpush1.xpose.msra.mxu0 0.0
        %2015 = vmatprep.subr.mxu0 0.0
        %2016 = vmatpush1.xpose.msra.mxu0 0.0
        %2017 = vmatprep.subr.mxu0 0.0
        %2018 = vmatpush1.xpose.msra.mxu0 0.0
        %2019 = vmatprep.subr.mxu0 0.0
        %2020 = vmatpush1.xpose.msra.mxu0 0.0
        %2021 = vmatprep.subr.mxu0 0.0
        %2022 = vmatpush1.xpose.msra.mxu0 0.0
        %2023 = vmatprep.subr.mxu0 0.0
        %2024 = vmatpush1.xpose.msra.mxu0 0.0
        %2025 = vmatprep.subr.mxu0 0.0
        %2026 = vmatpush1.xpose.msra.mxu0 0.0
        %2027 = vmatprep.subr.mxu0 0.0
        %2028 = vmatpush1.xpose.msra.mxu0 0.0
        %2029 = vmatprep.subr.mxu0 0.0
        %2030 = vmatpush1.xpose.msra.mxu0 0.0
        %2031 = vmatprep.subr.mxu0 0.0
        %2032 = vmatpush1.xpose.msra.mxu0 0.0
        %2033 = vmatprep.subr.mxu0 0.0
        %2034 = vmatpush1.xpose.msra.mxu0 0.0
        %2035 = vmatprep.subr.mxu0 0.0
        %2036 = vmatpush1.xpose.msra.mxu0 0.0
        %2037 = vmatprep.subr.mxu0 0.0
        %2038 = vmatpush1.xpose.msra.mxu0 0.0
        %2039 = vmatprep.subr.mxu0 0.0
        %2040 = vmatpush1.xpose.msra.mxu0 0.0
        %2041 = vmatprep.subr.mxu0 0.0
        %2042 = vmatpush1.xpose.msra.mxu0 0.0
        %2043 = vmatprep.subr.mxu0 0.0
        %2044 = vmatpush1.xpose.msra.mxu0 0.0
        %2045 = vmatprep.subr.mxu0 0.0
        %2046 = vmatpush1.xpose.msra.mxu0 0.0
        %2047 = vmatprep.subr.mxu0 0.0
        %2048 = vmatpush1.xpose.msra.mxu0 0.0
        %2049 = vmatprep.subr.mxu0 0.0
        %2050 = vmatpush1.xpose.msra.mxu0 0.0
        %2051 = vmatprep.subr.mxu0 0.0
        %2052 = vmatpush1.xpose.msra.mxu0 0.0
        %2053 = vmatprep.subr.mxu0 0.0
        %2054 = vmatpush1.xpose.msra.mxu0 0.0
        %2055 = vmatprep.subr.mxu0 0.0
        %2056 = vmatpush1.xpose.msra.mxu0 0.0
        %2057 = vmatprep.subr.mxu0 0.0
        %2058 = vmatpush1.xpose.msra.mxu0 0.0
        %2059 = vmatprep.subr.mxu0 0.0
        %2060 = vmatpush1.xpose.msra.mxu0 0.0
        %2061 = vmatprep.subr.mxu0 0.0
        %2062 = vmatpush1.xpose.msra.mxu0 0.0
        %2063 = vmatprep.subr.mxu0 0.0
        %2064 = vmatpush1.xpose.msra.mxu0 0.0
        %2065 = vmatprep.mubr.f32.mxu0 0.0
        %2066 = vmatmul.mubr.f32.gmra.mrb[0].mxu0 %v1996
        %v2067 = vpop.f32.mrb[0].mxu0
        %v2068 = vadd.f32 %v1992, %v2067
        %v2069 = vpop.f32.mrb[0].mxu0
        %2070 = vdwg.mxu0
        %v2071 = vld [vmem:[%s12] sm:$0xf]
        %2073 = vset.pattern.permute.xlu0 0
        %2074 = vperm.xlu0 %2073, %v2071
        %v2075 = vpop.permute.xlu0 %2074
        %v2077 = vadd.f32 %v2068, %v2075
        %v2078 = vxor.u32 %v2077, 2147483648
        %v2079 = vmul.f32 %v2078, 1.442695
        %v2080 = vpow.pop %v2079
        %v2081 = vadd.f32 %v2080, 1.0
        %v2082 = vrcp.pop %v2081
        %v2083 = vmul.f32 1.0, %v2082
        %v2084 = vld [vmem:[#allocation14] sm:$0xff]
        %v2085 = vld [vmem:[#allocation14 + $0x8] sm:$0xff]
        %v2086 = vld [vmem:[#allocation14 + $0x10] sm:$0xff]
        %v2087 = vld [vmem:[#allocation14 + $0x18] sm:$0xff]
        %vm2088 = vcmask 64512
        %v2090 = vsel %vm2088, %v1110, 0
        %v2093 = vsel %vm2088, %v1522, 0
        %2095 = vmatprep.subr.mxu0 0.0
        %2096 = vmatpush1.xpose.msra.mxu0 %v2093
        %2097 = vmatprep.subr.mxu0 0.0
        %2098 = vmatpush1.xpose.msra.mxu0 0.0
        %2099 = vmatprep.subr.mxu0 0.0
        %2100 = vmatpush1.xpose.msra.mxu0 0.0
        %2101 = vmatprep.subr.mxu0 0.0
        %2102 = vmatpush1.xpose.msra.mxu0 0.0
        %2103 = vmatprep.subr.mxu0 0.0
        %2104 = vmatpush1.xpose.msra.mxu0 0.0
        %2105 = vmatprep.subr.mxu0 0.0
        %2106 = vmatpush1.xpose.msra.mxu0 0.0
        %2107 = vmatprep.subr.mxu0 0.0
        %2108 = vmatpush1.xpose.msra.mxu0 0.0
        %2109 = vmatprep.subr.mxu0 0.0
        %2110 = vmatpush1.xpose.msra.mxu0 0.0
        %2111 = vmatprep.subr.mxu0 0.0
        %2112 = vmatpush1.xpose.msra.mxu0 0.0
        %2113 = vmatprep.subr.mxu0 0.0
        %2114 = vmatpush1.xpose.msra.mxu0 0.0
        %2115 = vmatprep.subr.mxu0 0.0
        %2116 = vmatpush1.xpose.msra.mxu0 0.0
        %2117 = vmatprep.subr.mxu0 0.0
        %2118 = vmatpush1.xpose.msra.mxu0 0.0
        %2119 = vmatprep.subr.mxu0 0.0
        %2120 = vmatpush1.xpose.msra.mxu0 0.0
        %2121 = vmatprep.subr.mxu0 0.0
        %2122 = vmatpush1.xpose.msra.mxu0 0.0
        %2123 = vmatprep.subr.mxu0 0.0
        %2124 = vmatpush1.xpose.msra.mxu0 0.0
        %2125 = vmatprep.subr.mxu0 0.0
        %2126 = vmatpush1.xpose.msra.mxu0 0.0
        %2127 = vmatprep.subr.mxu0 0.0
        %2128 = vmatpush1.xpose.msra.mxu0 0.0
        %2129 = vmatprep.subr.mxu0 0.0
        %2130 = vmatpush1.xpose.msra.mxu0 0.0
        %2131 = vmatprep.subr.mxu0 0.0
        %2132 = vmatpush1.xpose.msra.mxu0 0.0
        %2133 = vmatprep.subr.mxu0 0.0
        %2134 = vmatpush1.xpose.msra.mxu0 0.0
        %2135 = vmatprep.subr.mxu0 0.0
        %2136 = vmatpush1.xpose.msra.mxu0 0.0
        %2137 = vmatprep.subr.mxu0 0.0
        %2138 = vmatpush1.xpose.msra.mxu0 0.0
        %2139 = vmatprep.subr.mxu0 0.0
        %2140 = vmatpush1.xpose.msra.mxu0 0.0
        %2141 = vmatprep.subr.mxu0 0.0
        %2142 = vmatpush1.xpose.msra.mxu0 0.0
        %2143 = vmatprep.subr.mxu0 0.0
        %2144 = vmatpush1.xpose.msra.mxu0 0.0
        %2145 = vmatprep.subr.mxu0 0.0
        %2146 = vmatpush1.xpose.msra.mxu0 0.0
        %2147 = vmatprep.subr.mxu0 0.0
        %2148 = vmatpush1.xpose.msra.mxu0 0.0
        %2149 = vmatprep.subr.mxu0 0.0
        %2150 = vmatpush1.xpose.msra.mxu0 0.0
        %2151 = vmatprep.subr.mxu0 0.0
        %2152 = vmatpush1.xpose.msra.mxu0 0.0
        %2153 = vmatprep.subr.mxu0 0.0
        %2154 = vmatpush1.xpose.msra.mxu0 0.0
        %2155 = vmatprep.subr.mxu0 0.0
        %2156 = vmatpush1.xpose.msra.mxu0 0.0
        %2157 = vmatprep.subr.mxu0 0.0
        %2158 = vmatpush1.xpose.msra.mxu0 0.0
        %2159 = vmatprep.mubr.f32.mxu0 0.0
        %2160 = vmatmul.mubr.f32.gmra.mrb[0].mxu0 %v2090
        %v2161 = vpop.f32.mrb[0].mxu0
        %v2162 = vadd.f32 0.0, %v2161
        %v2163 = vpop.f32.mrb[0].mxu0
        %2164 = vdwg.mxu0
        %v2165 = vmul.f32 %v2162, 0.35355338
        %2167 = vset.pattern.permute.xlu0 0
        %2168 = vperm.xlu0 %2167, %v1805
        %v2169 = vpop.permute.xlu0 %2168
        %v2171 = vmul.f32 %v2165, %v2169
        %v2172 = vlaneseq
        %v2173 = vshrl.u32 %v2172, 7
        %v2174 = vsub.s32 0, %v2173
        %v2175 = vrot.slane %v2083, %v2174
        %v2176 = vadd.f32 %v2171, %v2175
        %v2177 = vsel %vm2088, %v2176, -inf
        %2178 = vmax.xlane.f32.xlu0 %v2177
        %v2179 = vpop.xlane.xlu0 %2178
        %v2180 = vsub.f32 %v2176, %v2179
        %v2181 = vmul.f32 %v2180, 1.442695
        %v2182 = vpow.pop %v2181
        %v2183 = vsel %vm2088, %v2182, 0.0
        %2184 = vadd.xlane.f32.xlu0 %v2183
        %v2185 = vpop.xlane.xlu0 %2184
        %v2186 = vrcp.pop %v2185
        %v2187 = vmul.f32 %v2182, %v2186
        %2188 = vrot.lane.b32.xlu0 %v698, 64
        %v2189 = vpop.permute.xlu0 %2188
        %v2192 = vsel %vm2088, %v2187, 0
        %2194 = vmatprep.subr.mxu0 0.0
        %2195 = vmatpush1.msra.mxu0 %v2189
        %2196 = vmatprep.subr.mxu0 0.0
        %2197 = vmatpush1.msra.mxu0 0.0
        %2198 = vmatprep.subr.mxu0 0.0
        %2199 = vmatpush1.msra.mxu0 0.0
        %2200 = vmatprep.subr.mxu0 0.0
        %2201 = vmatpush1.msra.mxu0 0.0
        %2202 = vmatprep.subr.mxu0 0.0
        %2203 = vmatpush1.msra.mxu0 0.0
        %2204 = vmatprep.subr.mxu0 0.0
        %2205 = vmatpush1.msra.mxu0 0.0
        %2206 = vmatprep.subr.mxu0 0.0
        %2207 = vmatpush1.msra.mxu0 0.0
        %2208 = vmatprep.subr.mxu0 0.0
        %2209 = vmatpush1.msra.mxu0 0.0
        %2210 = vmatprep.subr.mxu0 0.0
        %2211 = vmatpush1.msra.mxu0 0.0
        %2212 = vmatprep.subr.mxu0 0.0
        %2213 = vmatpush1.msra.mxu0 0.0
        %2214 = vmatprep.subr.mxu0 0.0
        %2215 = vmatpush1.msra.mxu0 0.0
        %2216 = vmatprep.subr.mxu0 0.0
        %2217 = vmatpush1.msra.mxu0 0.0
        %2218 = vmatprep.subr.mxu0 0.0
        %2219 = vmatpush1.msra.mxu0 0.0
        %2220 = vmatprep.subr.mxu0 0.0
        %2221 = vmatpush1.msra.mxu0 0.0
        %2222 = vmatprep.subr.mxu0 0.0
        %2223 = vmatpush1.msra.mxu0 0.0
        %2224 = vmatprep.subr.mxu0 0.0
        %2225 = vmatpush1.msra.mxu0 0.0
        %2226 = vmatprep.subr.mxu0 0.0
        %2227 = vmatpush1.msra.mxu0 0.0
        %2228 = vmatprep.subr.mxu0 0.0
        %2229 = vmatpush1.msra.mxu0 0.0
        %2230 = vmatprep.subr.mxu0 0.0
        %2231 = vmatpush1.msra.mxu0 0.0
        %2232 = vmatprep.subr.mxu0 0.0
        %2233 = vmatpush1.msra.mxu0 0.0
        %2234 = vmatprep.subr.mxu0 0.0
        %2235 = vmatpush1.msra.mxu0 0.0
        %2236 = vmatprep.subr.mxu0 0.0
        %2237 = vmatpush1.msra.mxu0 0.0
        %2238 = vmatprep.subr.mxu0 0.0
        %2239 = vmatpush1.msra.mxu0 0.0
        %2240 = vmatprep.subr.mxu0 0.0
        %2241 = vmatpush1.msra.mxu0 0.0
        %2242 = vmatprep.subr.mxu0 0.0
        %2243 = vmatpush1.msra.mxu0 0.0
        %2244 = vmatprep.subr.mxu0 0.0
        %2245 = vmatpush1.msra.mxu0 0.0
        %2246 = vmatprep.subr.mxu0 0.0
        %2247 = vmatpush1.msra.mxu0 0.0
        %2248 = vmatprep.subr.mxu0 0.0
        %2249 = vmatpush1.msra.mxu0 0.0
        %2250 = vmatprep.subr.mxu0 0.0
        %2251 = vmatpush1.msra.mxu0 0.0
        %2252 = vmatprep.subr.mxu0 0.0
        %2253 = vmatpush1.msra.mxu0 0.0
        %2254 = vmatprep.subr.mxu0 0.0
        %2255 = vmatpush1.msra.mxu0 0.0
        %2256 = vmatprep.subr.mxu0 0.0
        %2257 = vmatpush1.msra.mxu0 0.0
        %2258 = vmatprep.mubr.f32.mxu0 0.0
        %2259 = vmatmul.mubr.f32.gmra.mrb[0].mxu0 %v2192
        %v2260 = vpop.f32.mrb[0].mxu0
        %v2261 = vadd.f32 0.0, %v2260
        %v2262 = vpop.f32.mrb[0].mxu0
        %2263 = vdwg.mxu0
        %2264 = vrot.lane.b32.xlu0 %v1110, 120
        %v2265 = vpop.permute.xlu0 %2264
        %2266 = vrot.lane.b32.xlu0 %v1522, 120
        %v2267 = vpop.permute.xlu0 %2266
        %v2268 = vsel %vm2088, %v2265, 0
        %v2270 = vsel %vm2088, %v2267, 0
        %2272 = vmatprep.subr.mxu0 0.0
        %2273 = vmatpush1.xpose.msra.mxu0 %v2270
        %2274 = vmatprep.subr.mxu0 0.0
        %2275 = vmatpush1.xpose.msra.mxu0 0.0
        %2276 = vmatprep.subr.mxu0 0.0
        %2277 = vmatpush1.xpose.msra.mxu0 0.0
        %2278 = vmatprep.subr.mxu0 0.0
        %2279 = vmatpush1.xpose.msra.mxu0 0.0
        %2280 = vmatprep.subr.mxu0 0.0
        %2281 = vmatpush1.xpose.msra.mxu0 0.0
        %2282 = vmatprep.subr.mxu0 0.0
        %2283 = vmatpush1.xpose.msra.mxu0 0.0
        %2284 = vmatprep.subr.mxu0 0.0
        %2285 = vmatpush1.xpose.msra.mxu0 0.0
        %2286 = vmatprep.subr.mxu0 0.0
        %2287 = vmatpush1.xpose.msra.mxu0 0.0
        %2288 = vmatprep.subr.mxu0 0.0
        %2289 = vmatpush1.xpose.msra.mxu0 0.0
        %2290 = vmatprep.subr.mxu0 0.0
        %2291 = vmatpush1.xpose.msra.mxu0 0.0
        %2292 = vmatprep.subr.mxu0 0.0
        %2293 = vmatpush1.xpose.msra.mxu0 0.0
        %2294 = vmatprep.subr.mxu0 0.0
        %2295 = vmatpush1.xpose.msra.mxu0 0.0
        %2296 = vmatprep.subr.mxu0 0.0
        %2297 = vmatpush1.xpose.msra.mxu0 0.0
        %2298 = vmatprep.subr.mxu0 0.0
        %2299 = vmatpush1.xpose.msra.mxu0 0.0
        %2300 = vmatprep.subr.mxu0 0.0
        %2301 = vmatpush1.xpose.msra.mxu0 0.0
        %2302 = vmatprep.subr.mxu0 0.0
        %2303 = vmatpush1.xpose.msra.mxu0 0.0
        %2304 = vmatprep.subr.mxu0 0.0
        %2305 = vmatpush1.xpose.msra.mxu0 0.0
        %2306 = vmatprep.subr.mxu0 0.0
        %2307 = vmatpush1.xpose.msra.mxu0 0.0
        %2308 = vmatprep.subr.mxu0 0.0
        %2309 = vmatpush1.xpose.msra.mxu0 0.0
        %2310 = vmatprep.subr.mxu0 0.0
        %2311 = vmatpush1.xpose.msra.mxu0 0.0
        %2312 = vmatprep.subr.mxu0 0.0
        %2313 = vmatpush1.xpose.msra.mxu0 0.0
        %2314 = vmatprep.subr.mxu0 0.0
        %2315 = vmatpush1.xpose.msra.mxu0 0.0
        %2316 = vmatprep.subr.mxu0 0.0
        %2317 = vmatpush1.xpose.msra.mxu0 0.0
        %2318 = vmatprep.subr.mxu0 0.0
        %2319 = vmatpush1.xpose.msra.mxu0 0.0
        %2320 = vmatprep.subr.mxu0 0.0
        %2321 = vmatpush1.xpose.msra.mxu0 0.0
        %2322 = vmatprep.subr.mxu0 0.0
        %2323 = vmatpush1.xpose.msra.mxu0 0.0
        %2324 = vmatprep.subr.mxu0 0.0
        %2325 = vmatpush1.xpose.msra.mxu0 0.0
        %2326 = vmatprep.subr.mxu0 0.0
        %2327 = vmatpush1.xpose.msra.mxu0 0.0
        %2328 = vmatprep.subr.mxu0 0.0
        %2329 = vmatpush1.xpose.msra.mxu0 0.0
        %2330 = vmatprep.subr.mxu0 0.0
        %2331 = vmatpush1.xpose.msra.mxu0 0.0
        %2332 = vmatprep.subr.mxu0 0.0
        %2333 = vmatpush1.xpose.msra.mxu0 0.0
        %2334 = vmatprep.subr.mxu0 0.0
        %2335 = vmatpush1.xpose.msra.mxu0 0.0
        %2336 = vmatprep.mubr.f32.mxu0 0.0
        %2337 = vmatmul.mubr.f32.gmra.mrb[0].mxu0 %v2268
        %v2338 = vpop.f32.mrb[0].mxu0
        %v2339 = vadd.f32 0.0, %v2338
        %v2340 = vpop.f32.mrb[0].mxu0
        %2341 = vdwg.mxu0
        %v2342 = vmul.f32 %v2339, 0.35355338
        %2343 = vset.pattern.permute.xlu0 1
        %2344 = vperm.xlu0 %2343, %v1805
        %v2345 = vpop.permute.xlu0 %2344
        %v2347 = vmul.f32 %v2342, %v2345
        %v2348 = vlaneseq
        %v2349 = vshrl.u32 %v2348, 7
        %v2350 = vsub.s32 1, %v2349
        %v2351 = vrot.slane %v2083, %v2350
        %v2352 = vadd.f32 %v2347, %v2351
        %v2353 = vsel %vm2088, %v2352, -inf
        %2354 = vmax.xlane.f32.xlu0 %v2353
        %v2355 = vpop.xlane.xlu0 %2354
        %v2356 = vsub.f32 %v2352, %v2355
        %v2357 = vmul.f32 %v2356, 1.442695
        %v2358 = vpow.pop %v2357
        %v2359 = vsel %vm2088, %v2358, 0.0
        %2360 = vadd.xlane.f32.xlu0 %v2359
        %v2361 = vpop.xlane.xlu0 %2360
        %v2362 = vrcp.pop %v2361
        %v2363 = vmul.f32 %v2358, %v2362
        %2364 = vrot.lane.b32.xlu0 %v698, 56
        %v2365 = vpop.permute.xlu0 %2364
        %v2368 = vsel %vm2088, %v2363, 0
        %2370 = vmatprep.subr.mxu0 0.0
        %2371 = vmatpush1.msra.mxu0 %v2365
        %2372 = vmatprep.subr.mxu0 0.0
        %2373 = vmatpush1.msra.mxu0 0.0
        %2374 = vmatprep.subr.mxu0 0.0
        %2375 = vmatpush1.msra.mxu0 0.0
        %2376 = vmatprep.subr.mxu0 0.0
        %2377 = vmatpush1.msra.mxu0 0.0
        %2378 = vmatprep.subr.mxu0 0.0
        %2379 = vmatpush1.msra.mxu0 0.0
        %2380 = vmatprep.subr.mxu0 0.0
        %2381 = vmatpush1.msra.mxu0 0.0
        %2382 = vmatprep.subr.mxu0 0.0
        %2383 = vmatpush1.msra.mxu0 0.0
        %2384 = vmatprep.subr.mxu0 0.0
        %2385 = vmatpush1.msra.mxu0 0.0
        %2386 = vmatprep.subr.mxu0 0.0
        %2387 = vmatpush1.msra.mxu0 0.0
        %2388 = vmatprep.subr.mxu0 0.0
        %2389 = vmatpush1.msra.mxu0 0.0
        %2390 = vmatprep.subr.mxu0 0.0
        %2391 = vmatpush1.msra.mxu0 0.0
        %2392 = vmatprep.subr.mxu0 0.0
        %2393 = vmatpush1.msra.mxu0 0.0
        %2394 = vmatprep.subr.mxu0 0.0
        %2395 = vmatpush1.msra.mxu0 0.0
        %2396 = vmatprep.subr.mxu0 0.0
        %2397 = vmatpush1.msra.mxu0 0.0
        %2398 = vmatprep.subr.mxu0 0.0
        %2399 = vmatpush1.msra.mxu0 0.0
        %2400 = vmatprep.subr.mxu0 0.0
        %2401 = vmatpush1.msra.mxu0 0.0
        %2402 = vmatprep.subr.mxu0 0.0
        %2403 = vmatpush1.msra.mxu0 0.0
        %2404 = vmatprep.subr.mxu0 0.0
        %2405 = vmatpush1.msra.mxu0 0.0
        %2406 = vmatprep.subr.mxu0 0.0
        %2407 = vmatpush1.msra.mxu0 0.0
        %2408 = vmatprep.subr.mxu0 0.0
        %2409 = vmatpush1.msra.mxu0 0.0
        %2410 = vmatprep.subr.mxu0 0.0
        %2411 = vmatpush1.msra.mxu0 0.0
        %2412 = vmatprep.subr.mxu0 0.0
        %2413 = vmatpush1.msra.mxu0 0.0
        %2414 = vmatprep.subr.mxu0 0.0
        %2415 = vmatpush1.msra.mxu0 0.0
        %2416 = vmatprep.subr.mxu0 0.0
        %2417 = vmatpush1.msra.mxu0 0.0
        %2418 = vmatprep.subr.mxu0 0.0
        %2419 = vmatpush1.msra.mxu0 0.0
        %2420 = vmatprep.subr.mxu0 0.0
        %2421 = vmatpush1.msra.mxu0 0.0
        %2422 = vmatprep.subr.mxu0 0.0
        %2423 = vmatpush1.msra.mxu0 0.0
        %2424 = vmatprep.subr.mxu0 0.0
        %2425 = vmatpush1.msra.mxu0 0.0
        %2426 = vmatprep.subr.mxu0 0.0
        %2427 = vmatpush1.msra.mxu0 0.0
        %2428 = vmatprep.subr.mxu0 0.0
        %2429 = vmatpush1.msra.mxu0 0.0
        %2430 = vmatprep.subr.mxu0 0.0
        %2431 = vmatpush1.msra.mxu0 0.0
        %2432 = vmatprep.subr.mxu0 0.0
        %2433 = vmatpush1.msra.mxu0 0.0
        %2434 = vmatprep.mubr.f32.mxu0 0.0
        %2435 = vmatmul.mubr.f32.gmra.mrb[0].mxu0 %v2368
        %v2436 = vpop.f32.mrb[0].mxu0
        %v2437 = vadd.f32 0.0, %v2436
        %v2438 = vpop.f32.mrb[0].mxu0
        %2439 = vdwg.mxu0
        %v2441 = vsel %vm2088, %v2437, 0
        %2443 = vmatprep.subr.mxu0 0.0
        %2444 = vmatpush1.msra.mxu0 %v2085
        %2445 = vmatprep.subr.mxu0 0.0
        %2446 = vmatpush1.msra.mxu0 0.0
        %2447 = vmatprep.subr.mxu0 0.0
        %2448 = vmatpush1.msra.mxu0 0.0
        %2449 = vmatprep.subr.mxu0 0.0
        %2450 = vmatpush1.msra.mxu0 0.0
        %2451 = vmatprep.subr.mxu0 0.0
        %2452 = vmatpush1.msra.mxu0 0.0
        %2453 = vmatprep.subr.mxu0 0.0
        %2454 = vmatpush1.msra.mxu0 0.0
        %2455 = vmatprep.subr.mxu0 0.0
        %2456 = vmatpush1.msra.mxu0 0.0
        %2457 = vmatprep.subr.mxu0 0.0
        %2458 = vmatpush1.msra.mxu0 0.0
        %2459 = vmatprep.subr.mxu0 0.0
        %2460 = vmatpush1.msra.mxu0 0.0
        %2461 = vmatprep.subr.mxu0 0.0
        %2462 = vmatpush1.msra.mxu0 0.0
        %2463 = vmatprep.subr.mxu0 0.0
        %2464 = vmatpush1.msra.mxu0 0.0
        %2465 = vmatprep.subr.mxu0 0.0
        %2466 = vmatpush1.msra.mxu0 0.0
        %2467 = vmatprep.subr.mxu0 0.0
        %2468 = vmatpush1.msra.mxu0 0.0
        %2469 = vmatprep.subr.mxu0 0.0
        %2470 = vmatpush1.msra.mxu0 0.0
        %2471 = vmatprep.subr.mxu0 0.0
        %2472 = vmatpush1.msra.mxu0 0.0
        %2473 = vmatprep.subr.mxu0 0.0
        %2474 = vmatpush1.msra.mxu0 0.0
        %2475 = vmatprep.subr.mxu0 0.0
        %2476 = vmatpush1.msra.mxu0 0.0
        %2477 = vmatprep.subr.mxu0 0.0
        %2478 = vmatpush1.msra.mxu0 0.0
        %2479 = vmatprep.subr.mxu0 0.0
        %2480 = vmatpush1.msra.mxu0 0.0
        %2481 = vmatprep.subr.mxu0 0.0
        %2482 = vmatpush1.msra.mxu0 0.0
        %2483 = vmatprep.subr.mxu0 0.0
        %2484 = vmatpush1.msra.mxu0 0.0
        %2485 = vmatprep.subr.mxu0 0.0
        %2486 = vmatpush1.msra.mxu0 0.0
        %2487 = vmatprep.subr.mxu0 0.0
        %2488 = vmatpush1.msra.mxu0 0.0
        %2489 = vmatprep.subr.mxu0 0.0
        %2490 = vmatpush1.msra.mxu0 0.0
        %2491 = vmatprep.subr.mxu0 0.0
        %2492 = vmatpush1.msra.mxu0 0.0
        %2493 = vmatprep.subr.mxu0 0.0
        %2494 = vmatpush1.msra.mxu0 0.0
        %2495 = vmatprep.subr.mxu0 0.0
        %2496 = vmatpush1.msra.mxu0 0.0
        %2497 = vmatprep.subr.mxu0 0.0
        %2498 = vmatpush1.msra.mxu0 0.0
        %2499 = vmatprep.subr.mxu0 0.0
        %2500 = vmatpush1.msra.mxu0 0.0
        %2501 = vmatprep.subr.mxu0 0.0
        %2502 = vmatpush1.msra.mxu0 0.0
        %2503 = vmatprep.subr.mxu0 0.0
        %2504 = vmatpush1.msra.mxu0 0.0
        %2505 = vmatprep.subr.mxu0 0.0
        %2506 = vmatpush1.msra.mxu0 0.0
        %2507 = vmatprep.mubr.f32.mxu0 0.0
        %2508 = vmatmul.mubr.f32.gmra.mrb[0].mxu0 %v2441
        %v2509 = vpop.f32.mrb[0].mxu0
        %v2510 = vadd.f32 0.0, %v2509
        %v2511 = vpop.f32.mrb[0].mxu0
        %2512 = vdwg.mxu0
        %v2514 = vsel %vm2088, %v2261, 0
        %2516 = vmatprep.subr.mxu0 0.0
        %2517 = vmatpush1.msra.mxu0 %v2084
        %2518 = vmatprep.subr.mxu0 0.0
        %2519 = vmatpush1.msra.mxu0 0.0
        %2520 = vmatprep.subr.mxu0 0.0
        %2521 = vmatpush1.msra.mxu0 0.0
        %2522 = vmatprep.subr.mxu0 0.0
        %2523 = vmatpush1.msra.mxu0 0.0
        %2524 = vmatprep.subr.mxu0 0.0
        %2525 = vmatpush1.msra.mxu0 0.0
        %2526 = vmatprep.subr.mxu0 0.0
        %2527 = vmatpush1.msra.mxu0 0.0
        %2528 = vmatprep.subr.mxu0 0.0
        %2529 = vmatpush1.msra.mxu0 0.0
        %2530 = vmatprep.subr.mxu0 0.0
        %2531 = vmatpush1.msra.mxu0 0.0
        %2532 = vmatprep.subr.mxu0 0.0
        %2533 = vmatpush1.msra.mxu0 0.0
        %2534 = vmatprep.subr.mxu0 0.0
        %2535 = vmatpush1.msra.mxu0 0.0
        %2536 = vmatprep.subr.mxu0 0.0
        %2537 = vmatpush1.msra.mxu0 0.0
        %2538 = vmatprep.subr.mxu0 0.0
        %2539 = vmatpush1.msra.mxu0 0.0
        %2540 = vmatprep.subr.mxu0 0.0
        %2541 = vmatpush1.msra.mxu0 0.0
        %2542 = vmatprep.subr.mxu0 0.0
        %2543 = vmatpush1.msra.mxu0 0.0
        %2544 = vmatprep.subr.mxu0 0.0
        %2545 = vmatpush1.msra.mxu0 0.0
        %2546 = vmatprep.subr.mxu0 0.0
        %2547 = vmatpush1.msra.mxu0 0.0
        %2548 = vmatprep.subr.mxu0 0.0
        %2549 = vmatpush1.msra.mxu0 0.0
        %2550 = vmatprep.subr.mxu0 0.0
        %2551 = vmatpush1.msra.mxu0 0.0
        %2552 = vmatprep.subr.mxu0 0.0
        %2553 = vmatpush1.msra.mxu0 0.0
        %2554 = vmatprep.subr.mxu0 0.0
        %2555 = vmatpush1.msra.mxu0 0.0
        %2556 = vmatprep.subr.mxu0 0.0
        %2557 = vmatpush1.msra.mxu0 0.0
        %2558 = vmatprep.subr.mxu0 0.0
        %2559 = vmatpush1.msra.mxu0 0.0
        %2560 = vmatprep.subr.mxu0 0.0
        %2561 = vmatpush1.msra.mxu0 0.0
        %2562 = vmatprep.subr.mxu0 0.0
        %2563 = vmatpush1.msra.mxu0 0.0
        %2564 = vmatprep.subr.mxu0 0.0
        %2565 = vmatpush1.msra.mxu0 0.0
        %2566 = vmatprep.subr.mxu0 0.0
        %2567 = vmatpush1.msra.mxu0 0.0
        %2568 = vmatprep.subr.mxu0 0.0
        %2569 = vmatpush1.msra.mxu0 0.0
        %2570 = vmatprep.subr.mxu0 0.0
        %2571 = vmatpush1.msra.mxu0 0.0
        %2572 = vmatprep.subr.mxu0 0.0
        %2573 = vmatpush1.msra.mxu0 0.0
        %2574 = vmatprep.subr.mxu0 0.0
        %2575 = vmatpush1.msra.mxu0 0.0
        %2576 = vmatprep.subr.mxu0 0.0
        %2577 = vmatpush1.msra.mxu0 0.0
        %2578 = vmatprep.subr.mxu0 0.0
        %2579 = vmatpush1.msra.mxu0 0.0
        %2580 = vmatprep.mubr.f32.mxu0 0.0
        %2581 = vmatmul.mubr.f32.gmra.mrb[0].mxu0 %v2514
        %v2582 = vpop.f32.mrb[0].mxu0
        %v2583 = vadd.f32 %v2510, %v2582
        %v2584 = vpop.f32.mrb[0].mxu0
        %2585 = vdwg.mxu0
        %2586 = vrot.lane.b32.xlu0 %v1110, 112
        %v2587 = vpop.permute.xlu0 %2586
        %2588 = vrot.lane.b32.xlu0 %v1522, 112
        %v2589 = vpop.permute.xlu0 %2588
        %v2590 = vsel %vm2088, %v2587, 0
        %v2592 = vsel %vm2088, %v2589, 0
        %2594 = vmatprep.subr.mxu0 0.0
        %2595 = vmatpush1.xpose.msra.mxu0 %v2592
        %2596 = vmatprep.subr.mxu0 0.0
        %2597 = vmatpush1.xpose.msra.mxu0 0.0
        %2598 = vmatprep.subr.mxu0 0.0
        %2599 = vmatpush1.xpose.msra.mxu0 0.0
        %2600 = vmatprep.subr.mxu0 0.0
        %2601 = vmatpush1.xpose.msra.mxu0 0.0
        %2602 = vmatprep.subr.mxu0 0.0
        %2603 = vmatpush1.xpose.msra.mxu0 0.0
        %2604 = vmatprep.subr.mxu0 0.0
        %2605 = vmatpush1.xpose.msra.mxu0 0.0
        %2606 = vmatprep.subr.mxu0 0.0
        %2607 = vmatpush1.xpose.msra.mxu0 0.0
        %2608 = vmatprep.subr.mxu0 0.0
        %2609 = vmatpush1.xpose.msra.mxu0 0.0
        %2610 = vmatprep.subr.mxu0 0.0
        %2611 = vmatpush1.xpose.msra.mxu0 0.0
        %2612 = vmatprep.subr.mxu0 0.0
        %2613 = vmatpush1.xpose.msra.mxu0 0.0
        %2614 = vmatprep.subr.mxu0 0.0
        %2615 = vmatpush1.xpose.msra.mxu0 0.0
        %2616 = vmatprep.subr.mxu0 0.0
        %2617 = vmatpush1.xpose.msra.mxu0 0.0
        %2618 = vmatprep.subr.mxu0 0.0
        %2619 = vmatpush1.xpose.msra.mxu0 0.0
        %2620 = vmatprep.subr.mxu0 0.0
        %2621 = vmatpush1.xpose.msra.mxu0 0.0
        %2622 = vmatprep.subr.mxu0 0.0
        %2623 = vmatpush1.xpose.msra.mxu0 0.0
        %2624 = vmatprep.subr.mxu0 0.0
        %2625 = vmatpush1.xpose.msra.mxu0 0.0
        %2626 = vmatprep.subr.mxu0 0.0
        %2627 = vmatpush1.xpose.msra.mxu0 0.0
        %2628 = vmatprep.subr.mxu0 0.0
        %2629 = vmatpush1.xpose.msra.mxu0 0.0
        %2630 = vmatprep.subr.mxu0 0.0
        %2631 = vmatpush1.xpose.msra.mxu0 0.0
        %2632 = vmatprep.subr.mxu0 0.0
        %2633 = vmatpush1.xpose.msra.mxu0 0.0
        %2634 = vmatprep.subr.mxu0 0.0
        %2635 = vmatpush1.xpose.msra.mxu0 0.0
        %2636 = vmatprep.subr.mxu0 0.0
        %2637 = vmatpush1.xpose.msra.mxu0 0.0
        %2638 = vmatprep.subr.mxu0 0.0
        %2639 = vmatpush1.xpose.msra.mxu0 0.0
        %2640 = vmatprep.subr.mxu0 0.0
        %2641 = vmatpush1.xpose.msra.mxu0 0.0
        %2642 = vmatprep.subr.mxu0 0.0
        %2643 = vmatpush1.xpose.msra.mxu0 0.0
        %2644 = vmatprep.subr.mxu0 0.0
        %2645 = vmatpush1.xpose.msra.mxu0 0.0
        %2646 = vmatprep.subr.mxu0 0.0
        %2647 = vmatpush1.xpose.msra.mxu0 0.0
        %2648 = vmatprep.subr.mxu0 0.0
        %2649 = vmatpush1.xpose.msra.mxu0 0.0
        %2650 = vmatprep.subr.mxu0 0.0
        %2651 = vmatpush1.xpose.msra.mxu0 0.0
        %2652 = vmatprep.subr.mxu0 0.0
        %2653 = vmatpush1.xpose.msra.mxu0 0.0
        %2654 = vmatprep.subr.mxu0 0.0
        %2655 = vmatpush1.xpose.msra.mxu0 0.0
        %2656 = vmatprep.subr.mxu0 0.0
        %2657 = vmatpush1.xpose.msra.mxu0 0.0
        %2658 = vmatprep.mubr.f32.mxu0 0.0
        %2659 = vmatmul.mubr.f32.gmra.mrb[0].mxu0 %v2590
        %v2660 = vpop.f32.mrb[0].mxu0
        %v2661 = vadd.f32 0.0, %v2660
        %v2662 = vpop.f32.mrb[0].mxu0
        %2663 = vdwg.mxu0
        %v2664 = vmul.f32 %v2661, 0.35355338
        %2665 = vset.pattern.permute.xlu0 2
        %2666 = vperm.xlu0 %2665, %v1805
        %v2667 = vpop.permute.xlu0 %2666
        %v2669 = vmul.f32 %v2664, %v2667
        %v2670 = vlaneseq
        %v2671 = vshrl.u32 %v2670, 7
        %v2672 = vsub.s32 2, %v2671
        %v2673 = vrot.slane %v2083, %v2672
        %v2674 = vadd.f32 %v2669, %v2673
        %v2675 = vsel %vm2088, %v2674, -inf
        %2676 = vmax.xlane.f32.xlu0 %v2675
        %v2677 = vpop.xlane.xlu0 %2676
        %v2678 = vsub.f32 %v2674, %v2677
        %v2679 = vmul.f32 %v2678, 1.442695
        %v2680 = vpow.pop %v2679
        %v2681 = vsel %vm2088, %v2680, 0.0
        %2682 = vadd.xlane.f32.xlu0 %v2681
        %v2683 = vpop.xlane.xlu0 %2682
        %v2684 = vrcp.pop %v2683
        %v2685 = vmul.f32 %v2680, %v2684
        %2686 = vrot.lane.b32.xlu0 %v698, 48
        %v2687 = vpop.permute.xlu0 %2686
        %v2690 = vsel %vm2088, %v2685, 0
        %2692 = vmatprep.subr.mxu0 0.0
        %2693 = vmatpush1.msra.mxu0 %v2687
        %2694 = vmatprep.subr.mxu0 0.0
        %2695 = vmatpush1.msra.mxu0 0.0
        %2696 = vmatprep.subr.mxu0 0.0
        %2697 = vmatpush1.msra.mxu0 0.0
        %2698 = vmatprep.subr.mxu0 0.0
        %2699 = vmatpush1.msra.mxu0 0.0
        %2700 = vmatprep.subr.mxu0 0.0
        %2701 = vmatpush1.msra.mxu0 0.0
        %2702 = vmatprep.subr.mxu0 0.0
        %2703 = vmatpush1.msra.mxu0 0.0
        %2704 = vmatprep.subr.mxu0 0.0
        %2705 = vmatpush1.msra.mxu0 0.0
        %2706 = vmatprep.subr.mxu0 0.0
        %2707 = vmatpush1.msra.mxu0 0.0
        %2708 = vmatprep.subr.mxu0 0.0
        %2709 = vmatpush1.msra.mxu0 0.0
        %2710 = vmatprep.subr.mxu0 0.0
        %2711 = vmatpush1.msra.mxu0 0.0
        %2712 = vmatprep.subr.mxu0 0.0
        %2713 = vmatpush1.msra.mxu0 0.0
        %2714 = vmatprep.subr.mxu0 0.0
        %2715 = vmatpush1.msra.mxu0 0.0
        %2716 = vmatprep.subr.mxu0 0.0
        %2717 = vmatpush1.msra.mxu0 0.0
        %2718 = vmatprep.subr.mxu0 0.0
        %2719 = vmatpush1.msra.mxu0 0.0
        %2720 = vmatprep.subr.mxu0 0.0
        %2721 = vmatpush1.msra.mxu0 0.0
        %2722 = vmatprep.subr.mxu0 0.0
        %2723 = vmatpush1.msra.mxu0 0.0
        %2724 = vmatprep.subr.mxu0 0.0
        %2725 = vmatpush1.msra.mxu0 0.0
        %2726 = vmatprep.subr.mxu0 0.0
        %2727 = vmatpush1.msra.mxu0 0.0
        %2728 = vmatprep.subr.mxu0 0.0
        %2729 = vmatpush1.msra.mxu0 0.0
        %2730 = vmatprep.subr.mxu0 0.0
        %2731 = vmatpush1.msra.mxu0 0.0
        %2732 = vmatprep.subr.mxu0 0.0
        %2733 = vmatpush1.msra.mxu0 0.0
        %2734 = vmatprep.subr.mxu0 0.0
        %2735 = vmatpush1.msra.mxu0 0.0
        %2736 = vmatprep.subr.mxu0 0.0
        %2737 = vmatpush1.msra.mxu0 0.0
        %2738 = vmatprep.subr.mxu0 0.0
        %2739 = vmatpush1.msra.mxu0 0.0
        %2740 = vmatprep.subr.mxu0 0.0
        %2741 = vmatpush1.msra.mxu0 0.0
        %2742 = vmatprep.subr.mxu0 0.0
        %2743 = vmatpush1.msra.mxu0 0.0
        %2744 = vmatprep.subr.mxu0 0.0
        %2745 = vmatpush1.msra.mxu0 0.0
        %2746 = vmatprep.subr.mxu0 0.0
        %2747 = vmatpush1.msra.mxu0 0.0
        %2748 = vmatprep.subr.mxu0 0.0
        %2749 = vmatpush1.msra.mxu0 0.0
        %2750 = vmatprep.subr.mxu0 0.0
        %2751 = vmatpush1.msra.mxu0 0.0
        %2752 = vmatprep.subr.mxu0 0.0
        %2753 = vmatpush1.msra.mxu0 0.0
        %2754 = vmatprep.subr.mxu0 0.0
        %2755 = vmatpush1.msra.mxu0 0.0
        %2756 = vmatprep.mubr.f32.mxu0 0.0
        %2757 = vmatmul.mubr.f32.gmra.mrb[0].mxu0 %v2690
        %v2758 = vpop.f32.mrb[0].mxu0
        %v2759 = vadd.f32 0.0, %v2758
        %v2760 = vpop.f32.mrb[0].mxu0
        %2761 = vdwg.mxu0
        %v2763 = vsel %vm2088, %v2759, 0
        %2765 = vmatprep.subr.mxu0 0.0
        %2766 = vmatpush1.msra.mxu0 %v2086
        %2767 = vmatprep.subr.mxu0 0.0
        %2768 = vmatpush1.msra.mxu0 0.0
        %2769 = vmatprep.subr.mxu0 0.0
        %2770 = vmatpush1.msra.mxu0 0.0
        %2771 = vmatprep.subr.mxu0 0.0
        %2772 = vmatpush1.msra.mxu0 0.0
        %2773 = vmatprep.subr.mxu0 0.0
        %2774 = vmatpush1.msra.mxu0 0.0
        %2775 = vmatprep.subr.mxu0 0.0
        %2776 = vmatpush1.msra.mxu0 0.0
        %2777 = vmatprep.subr.mxu0 0.0
        %2778 = vmatpush1.msra.mxu0 0.0
        %2779 = vmatprep.subr.mxu0 0.0
        %2780 = vmatpush1.msra.mxu0 0.0
        %2781 = vmatprep.subr.mxu0 0.0
        %2782 = vmatpush1.msra.mxu0 0.0
        %2783 = vmatprep.subr.mxu0 0.0
        %2784 = vmatpush1.msra.mxu0 0.0
        %2785 = vmatprep.subr.mxu0 0.0
        %2786 = vmatpush1.msra.mxu0 0.0
        %2787 = vmatprep.subr.mxu0 0.0
        %2788 = vmatpush1.msra.mxu0 0.0
        %2789 = vmatprep.subr.mxu0 0.0
        %2790 = vmatpush1.msra.mxu0 0.0
        %2791 = vmatprep.subr.mxu0 0.0
        %2792 = vmatpush1.msra.mxu0 0.0
        %2793 = vmatprep.subr.mxu0 0.0
        %2794 = vmatpush1.msra.mxu0 0.0
        %2795 = vmatprep.subr.mxu0 0.0
        %2796 = vmatpush1.msra.mxu0 0.0
        %2797 = vmatprep.subr.mxu0 0.0
        %2798 = vmatpush1.msra.mxu0 0.0
        %2799 = vmatprep.subr.mxu0 0.0
        %2800 = vmatpush1.msra.mxu0 0.0
        %2801 = vmatprep.subr.mxu0 0.0
        %2802 = vmatpush1.msra.mxu0 0.0
        %2803 = vmatprep.subr.mxu0 0.0
        %2804 = vmatpush1.msra.mxu0 0.0
        %2805 = vmatprep.subr.mxu0 0.0
        %2806 = vmatpush1.msra.mxu0 0.0
        %2807 = vmatprep.subr.mxu0 0.0
        %2808 = vmatpush1.msra.mxu0 0.0
        %2809 = vmatprep.subr.mxu0 0.0
        %2810 = vmatpush1.msra.mxu0 0.0
        %2811 = vmatprep.subr.mxu0 0.0
        %2812 = vmatpush1.msra.mxu0 0.0
        %2813 = vmatprep.subr.mxu0 0.0
        %2814 = vmatpush1.msra.mxu0 0.0
        %2815 = vmatprep.subr.mxu0 0.0
        %2816 = vmatpush1.msra.mxu0 0.0
        %2817 = vmatprep.subr.mxu0 0.0
        %2818 = vmatpush1.msra.mxu0 0.0
        %2819 = vmatprep.subr.mxu0 0.0
        %2820 = vmatpush1.msra.mxu0 0.0
        %2821 = vmatprep.subr.mxu0 0.0
        %2822 = vmatpush1.msra.mxu0 0.0
        %2823 = vmatprep.subr.mxu0 0.0
        %2824 = vmatpush1.msra.mxu0 0.0
        %2825 = vmatprep.subr.mxu0 0.0
        %2826 = vmatpush1.msra.mxu0 0.0
        %2827 = vmatprep.subr.mxu0 0.0
        %2828 = vmatpush1.msra.mxu0 0.0
        %2829 = vmatprep.mubr.f32.mxu0 0.0
        %2830 = vmatmul.mubr.f32.gmra.mrb[0].mxu0 %v2763
        %v2831 = vpop.f32.mrb[0].mxu0
        %v2832 = vadd.f32 0.0, %v2831
        %v2833 = vpop.f32.mrb[0].mxu0
        %2834 = vdwg.mxu0
        %v2835 = vadd.f32 %v2583, %v2832
        %2836 = vrot.lane.b32.xlu0 %v1110, 104
        %v2837 = vpop.permute.xlu0 %2836
        %2838 = vrot.lane.b32.xlu0 %v1522, 104
        %v2839 = vpop.permute.xlu0 %2838
        %v2840 = vsel %vm2088, %v2837, 0
        %v2842 = vsel %vm2088, %v2839, 0
        %2844 = vmatprep.subr.mxu0 0.0
        %2845 = vmatpush1.xpose.msra.mxu0 %v2842
        %2846 = vmatprep.subr.mxu0 0.0
        %2847 = vmatpush1.xpose.msra.mxu0 0.0
        %2848 = vmatprep.subr.mxu0 0.0
        %2849 = vmatpush1.xpose.msra.mxu0 0.0
        %2850 = vmatprep.subr.mxu0 0.0
        %2851 = vmatpush1.xpose.msra.mxu0 0.0
        %2852 = vmatprep.subr.mxu0 0.0
        %2853 = vmatpush1.xpose.msra.mxu0 0.0
        %2854 = vmatprep.subr.mxu0 0.0
        %2855 = vmatpush1.xpose.msra.mxu0 0.0
        %2856 = vmatprep.subr.mxu0 0.0
        %2857 = vmatpush1.xpose.msra.mxu0 0.0
        %2858 = vmatprep.subr.mxu0 0.0
        %2859 = vmatpush1.xpose.msra.mxu0 0.0
        %2860 = vmatprep.subr.mxu0 0.0
        %2861 = vmatpush1.xpose.msra.mxu0 0.0
        %2862 = vmatprep.subr.mxu0 0.0
        %2863 = vmatpush1.xpose.msra.mxu0 0.0
        %2864 = vmatprep.subr.mxu0 0.0
        %2865 = vmatpush1.xpose.msra.mxu0 0.0
        %2866 = vmatprep.subr.mxu0 0.0
        %2867 = vmatpush1.xpose.msra.mxu0 0.0
        %2868 = vmatprep.subr.mxu0 0.0
        %2869 = vmatpush1.xpose.msra.mxu0 0.0
        %2870 = vmatprep.subr.mxu0 0.0
        %2871 = vmatpush1.xpose.msra.mxu0 0.0
        %2872 = vmatprep.subr.mxu0 0.0
        %2873 = vmatpush1.xpose.msra.mxu0 0.0
        %2874 = vmatprep.subr.mxu0 0.0
        %2875 = vmatpush1.xpose.msra.mxu0 0.0
        %2876 = vmatprep.subr.mxu0 0.0
        %2877 = vmatpush1.xpose.msra.mxu0 0.0
        %2878 = vmatprep.subr.mxu0 0.0
        %2879 = vmatpush1.xpose.msra.mxu0 0.0
        %2880 = vmatprep.subr.mxu0 0.0
        %2881 = vmatpush1.xpose.msra.mxu0 0.0
        %2882 = vmatprep.subr.mxu0 0.0
        %2883 = vmatpush1.xpose.msra.mxu0 0.0
        %2884 = vmatprep.subr.mxu0 0.0
        %2885 = vmatpush1.xpose.msra.mxu0 0.0
        %2886 = vmatprep.subr.mxu0 0.0
        %2887 = vmatpush1.xpose.msra.mxu0 0.0
        %2888 = vmatprep.subr.mxu0 0.0
        %2889 = vmatpush1.xpose.msra.mxu0 0.0
        %2890 = vmatprep.subr.mxu0 0.0
        %2891 = vmatpush1.xpose.msra.mxu0 0.0
        %2892 = vmatprep.subr.mxu0 0.0
        %2893 = vmatpush1.xpose.msra.mxu0 0.0
        %2894 = vmatprep.subr.mxu0 0.0
        %2895 = vmatpush1.xpose.msra.mxu0 0.0
        %2896 = vmatprep.subr.mxu0 0.0
        %2897 = vmatpush1.xpose.msra.mxu0 0.0
        %2898 = vmatprep.subr.mxu0 0.0
        %2899 = vmatpush1.xpose.msra.mxu0 0.0
        %2900 = vmatprep.subr.mxu0 0.0
        %2901 = vmatpush1.xpose.msra.mxu0 0.0
        %2902 = vmatprep.subr.mxu0 0.0
        %2903 = vmatpush1.xpose.msra.mxu0 0.0
        %2904 = vmatprep.subr.mxu0 0.0
        %2905 = vmatpush1.xpose.msra.mxu0 0.0
        %2906 = vmatprep.subr.mxu0 0.0
        %2907 = vmatpush1.xpose.msra.mxu0 0.0
        %2908 = vmatprep.mubr.f32.mxu0 0.0
        %2909 = vmatmul.mubr.f32.gmra.mrb[0].mxu0 %v2840
        %v2910 = vpop.f32.mrb[0].mxu0
        %v2911 = vadd.f32 0.0, %v2910
        %v2912 = vpop.f32.mrb[0].mxu0
        %2913 = vdwg.mxu0
        %v2914 = vmul.f32 %v2911, 0.35355338
        %2915 = vset.pattern.permute.xlu0 3
        %2916 = vperm.xlu0 %2915, %v1805
        %v2917 = vpop.permute.xlu0 %2916
        %v2919 = vmul.f32 %v2914, %v2917
        %v2920 = vlaneseq
        %v2921 = vshrl.u32 %v2920, 7
        %v2922 = vsub.s32 3, %v2921
        %v2923 = vrot.slane %v2083, %v2922
        %v2924 = vadd.f32 %v2919, %v2923
        %v2925 = vsel %vm2088, %v2924, -inf
        %2926 = vmax.xlane.f32.xlu0 %v2925
        %v2927 = vpop.xlane.xlu0 %2926
        %v2928 = vsub.f32 %v2924, %v2927
        %v2929 = vmul.f32 %v2928, 1.442695
        %v2930 = vpow.pop %v2929
        %v2931 = vsel %vm2088, %v2930, 0.0
        %2932 = vadd.xlane.f32.xlu0 %v2931
        %v2933 = vpop.xlane.xlu0 %2932
        %v2934 = vrcp.pop %v2933
        %v2935 = vmul.f32 %v2930, %v2934
        %2936 = vrot.lane.b32.xlu0 %v698, 40
        %v2937 = vpop.permute.xlu0 %2936
        %v2940 = vsel %vm2088, %v2935, 0
        %2942 = vmatprep.subr.mxu0 0.0
        %2943 = vmatpush1.msra.mxu0 %v2937
        %2944 = vmatprep.subr.mxu0 0.0
        %2945 = vmatpush1.msra.mxu0 0.0
        %2946 = vmatprep.subr.mxu0 0.0
        %2947 = vmatpush1.msra.mxu0 0.0
        %2948 = vmatprep.subr.mxu0 0.0
        %2949 = vmatpush1.msra.mxu0 0.0
        %2950 = vmatprep.subr.mxu0 0.0
        %2951 = vmatpush1.msra.mxu0 0.0
        %2952 = vmatprep.subr.mxu0 0.0
        %2953 = vmatpush1.msra.mxu0 0.0
        %2954 = vmatprep.subr.mxu0 0.0
        %2955 = vmatpush1.msra.mxu0 0.0
        %2956 = vmatprep.subr.mxu0 0.0
        %2957 = vmatpush1.msra.mxu0 0.0
        %2958 = vmatprep.subr.mxu0 0.0
        %2959 = vmatpush1.msra.mxu0 0.0
        %2960 = vmatprep.subr.mxu0 0.0
        %2961 = vmatpush1.msra.mxu0 0.0
        %2962 = vmatprep.subr.mxu0 0.0
        %2963 = vmatpush1.msra.mxu0 0.0
        %2964 = vmatprep.subr.mxu0 0.0
        %2965 = vmatpush1.msra.mxu0 0.0
        %2966 = vmatprep.subr.mxu0 0.0
        %2967 = vmatpush1.msra.mxu0 0.0
        %2968 = vmatprep.subr.mxu0 0.0
        %2969 = vmatpush1.msra.mxu0 0.0
        %2970 = vmatprep.subr.mxu0 0.0
        %2971 = vmatpush1.msra.mxu0 0.0
        %2972 = vmatprep.subr.mxu0 0.0
        %2973 = vmatpush1.msra.mxu0 0.0
        %2974 = vmatprep.subr.mxu0 0.0
        %2975 = vmatpush1.msra.mxu0 0.0
        %2976 = vmatprep.subr.mxu0 0.0
        %2977 = vmatpush1.msra.mxu0 0.0
        %2978 = vmatprep.subr.mxu0 0.0
        %2979 = vmatpush1.msra.mxu0 0.0
        %2980 = vmatprep.subr.mxu0 0.0
        %2981 = vmatpush1.msra.mxu0 0.0
        %2982 = vmatprep.subr.mxu0 0.0
        %2983 = vmatpush1.msra.mxu0 0.0
        %2984 = vmatprep.subr.mxu0 0.0
        %2985 = vmatpush1.msra.mxu0 0.0
        %2986 = vmatprep.subr.mxu0 0.0
        %2987 = vmatpush1.msra.mxu0 0.0
        %2988 = vmatprep.subr.mxu0 0.0
        %2989 = vmatpush1.msra.mxu0 0.0
        %2990 = vmatprep.subr.mxu0 0.0
        %2991 = vmatpush1.msra.mxu0 0.0
        %2992 = vmatprep.subr.mxu0 0.0
        %2993 = vmatpush1.msra.mxu0 0.0
        %2994 = vmatprep.subr.mxu0 0.0
        %2995 = vmatpush1.msra.mxu0 0.0
        %2996 = vmatprep.subr.mxu0 0.0
        %2997 = vmatpush1.msra.mxu0 0.0
        %2998 = vmatprep.subr.mxu0 0.0
        %2999 = vmatpush1.msra.mxu0 0.0
        %3000 = vmatprep.subr.mxu0 0.0
        %3001 = vmatpush1.msra.mxu0 0.0
        %3002 = vmatprep.subr.mxu0 0.0
        %3003 = vmatpush1.msra.mxu0 0.0
        %3004 = vmatprep.subr.mxu0 0.0
        %3005 = vmatpush1.msra.mxu0 0.0
        %3006 = vmatprep.mubr.f32.mxu0 0.0
        %3007 = vmatmul.mubr.f32.gmra.mrb[0].mxu0 %v2940
        %v3008 = vpop.f32.mrb[0].mxu0
        %v3009 = vadd.f32 0.0, %v3008
        %v3010 = vpop.f32.mrb[0].mxu0
        %3011 = vdwg.mxu0
        %v3013 = vsel %vm2088, %v3009, 0
        %3015 = vmatprep.subr.mxu0 0.0
        %3016 = vmatpush1.msra.mxu0 %v2087
        %3017 = vmatprep.subr.mxu0 0.0
        %3018 = vmatpush1.msra.mxu0 0.0
        %3019 = vmatprep.subr.mxu0 0.0
        %3020 = vmatpush1.msra.mxu0 0.0
        %3021 = vmatprep.subr.mxu0 0.0
        %3022 = vmatpush1.msra.mxu0 0.0
        %3023 = vmatprep.subr.mxu0 0.0
        %3024 = vmatpush1.msra.mxu0 0.0
        %3025 = vmatprep.subr.mxu0 0.0
        %3026 = vmatpush1.msra.mxu0 0.0
        %3027 = vmatprep.subr.mxu0 0.0
        %3028 = vmatpush1.msra.mxu0 0.0
        %3029 = vmatprep.subr.mxu0 0.0
        %3030 = vmatpush1.msra.mxu0 0.0
        %3031 = vmatprep.subr.mxu0 0.0
        %3032 = vmatpush1.msra.mxu0 0.0
        %3033 = vmatprep.subr.mxu0 0.0
        %3034 = vmatpush1.msra.mxu0 0.0
        %3035 = vmatprep.subr.mxu0 0.0
        %3036 = vmatpush1.msra.mxu0 0.0
        %3037 = vmatprep.subr.mxu0 0.0
        %3038 = vmatpush1.msra.mxu0 0.0
        %3039 = vmatprep.subr.mxu0 0.0
        %3040 = vmatpush1.msra.mxu0 0.0
        %3041 = vmatprep.subr.mxu0 0.0
        %3042 = vmatpush1.msra.mxu0 0.0
        %3043 = vmatprep.subr.mxu0 0.0
        %3044 = vmatpush1.msra.mxu0 0.0
        %3045 = vmatprep.subr.mxu0 0.0
        %3046 = vmatpush1.msra.mxu0 0.0
        %3047 = vmatprep.subr.mxu0 0.0
        %3048 = vmatpush1.msra.mxu0 0.0
        %3049 = vmatprep.subr.mxu0 0.0
        %3050 = vmatpush1.msra.mxu0 0.0
        %3051 = vmatprep.subr.mxu0 0.0
        %3052 = vmatpush1.msra.mxu0 0.0
        %3053 = vmatprep.subr.mxu0 0.0
        %3054 = vmatpush1.msra.mxu0 0.0
        %3055 = vmatprep.subr.mxu0 0.0
        %3056 = vmatpush1.msra.mxu0 0.0
        %3057 = vmatprep.subr.mxu0 0.0
        %3058 = vmatpush1.msra.mxu0 0.0
        %3059 = vmatprep.subr.mxu0 0.0
        %3060 = vmatpush1.msra.mxu0 0.0
        %3061 = vmatprep.subr.mxu0 0.0
        %3062 = vmatpush1.msra.mxu0 0.0
        %3063 = vmatprep.subr.mxu0 0.0
        %3064 = vmatpush1.msra.mxu0 0.0
        %3065 = vmatprep.subr.mxu0 0.0
        %3066 = vmatpush1.msra.mxu0 0.0
        %3067 = vmatprep.subr.mxu0 0.0
        %3068 = vmatpush1.msra.mxu0 0.0
        %3069 = vmatprep.subr.mxu0 0.0
        %3070 = vmatpush1.msra.mxu0 0.0
        %3071 = vmatprep.subr.mxu0 0.0
        %3072 = vmatpush1.msra.mxu0 0.0
        %3073 = vmatprep.subr.mxu0 0.0
        %3074 = vmatpush1.msra.mxu0 0.0
        %3075 = vmatprep.subr.mxu0 0.0
        %3076 = vmatpush1.msra.mxu0 0.0
        %3077 = vmatprep.subr.mxu0 0.0
        %3078 = vmatpush1.msra.mxu0 0.0
        %3079 = vmatprep.mubr.f32.mxu0 0.0
        %3080 = vmatmul.mubr.f32.gmra.mrb[0].mxu0 %v3013
        %v3081 = vpop.f32.mrb[0].mxu0
        %v3082 = vadd.f32 0.0, %v3081
        %v3083 = vpop.f32.mrb[0].mxu0
        %3084 = vdwg.mxu0
        %v3085 = vadd.f32 %v2835, %v3082
        %v3086 = vld [vmem:[#allocation16] sm:$0x1]
        %v3088 = vlaneseq
        %v3089 = vshrl.u32 %v3088, 7
        %v3090 = vsub.s32 0, %v3089
        %v3091 = vrot.slane %v3086, %v3090
        %v3093 = vadd.f32 %v3085, %v3091
        %3094 = vst.msk [vmem:[%s610] sm:$0xff] %vm627, %v3093
        %s3095 = sand.u32 %s362, 1
        %s3096 = scalar_lea.sflag [#allocation4], %s3095
        %s3097 = sand.u32 %s362, 1
        %s3098 = smul.addr %s3097, 8
        %s3099 = scalar_lea.vmem [#allocation17], %s3098
        // Predicated region
        $region117: #{dc_attention_forward.1} parent=79 // pred_check
          %p3100 = pneg %p372
        $region118: #{dc_attention_forward.1} parent=79 // pred_check_branch
          %3102 = sbr.rel (%p3100) target = $region120
        $region119: #{dc_attention_forward.1} parent=79 // pred_region
          %s3104 = ssub.s32 128, 128
          %3105 = vsyncadd %s3096, %s3104
          %s3106 = smul.addr %s34, 128
          %s3107 = scalar_lea.hbm %s15, %s3106
          %s3109 = sshll.u32 %s3099, 4
          %s3110 = int_to_ptr.vmem [resolvable:$true] %s3109
          %3112 = dma.vmem_to_hbm [thread:$0]  %s3110, 128, %s3107, %s3096
        $region120: #{dc_attention_forward.1} parent=79 // pred_fallthru
          _
      $region80: #{dc_attention_forward.1} parent=5 // pred_fallthru
        _
      %p3113 = scmp.le.s32.totalorder 2, %s29
      // Predicated region
      $region121: #{dc_attention_forward.1} parent=5 // pred_check
        %p3114 = pneg %p3113
      $region122: #{dc_attention_forward.1} parent=5 // pred_check_branch
        %3116 = sbr.rel (%p3114) target = $region124
      $region123: #{dc_attention_forward.1} parent=5 // pred_region
        %s3117 = ssub.s32 %s29, 2
        // Predicated region
        $region125: #{dc_attention_forward.1} parent=123 // pred_check
          %p3118 = pneg %p378
        $region126: #{dc_attention_forward.1} parent=123 // pred_check_branch
          %3120 = sbr.rel (%p3118) target = $region128
        $region127: #{dc_attention_forward.1} parent=123 // pred_region
          %s3121 = sand.u32 %s363, 1
          %s3122 = scalar_lea.sflag [#allocation4], %s3121
          %s3123 = sand.u32 %s363, 1
          %s3124 = smul.addr %s3123, 8
          %s3125 = scalar_lea.vmem [#allocation17], %s3124
          %3126 = dma.done %s3122, 128
        $region128: #{dc_attention_forward.1} parent=123 // pred_fallthru
          _
      $region124: #{dc_attention_forward.1} parent=5 // pred_fallthru
        _
    $region6: #{dc_attention_forward.1} parent=1 // loop_footer
      %s33 = sadd.s32 1, %s29
    $region7: #{dc_attention_forward.1} parent=1 // loop_footer_branch
      %28 = sbr.rel target = $region3
    $region8: #{dc_attention_forward.1} parent=1 // loop_exit
      _
    %3127 = vsyncpa [#allocation3], 1
    %s3128 = scalar_lea.sflag [#allocation3], 1
    %3129 = vsyncpa %s3128, 1
    %3130 = vsyncpa [#allocation6], 1
    %3131 = vsyncpa [#allocation9], 1
    %3132 = vsyncpa [#allocation12], 1
    %3133 = vsyncpa [#allocation15], 1
    %3134 = vsyncpa [#allocation4], 1
    %s3135 = scalar_lea.sflag [#allocation4], 1
    %3136 = vsyncpa %s3135, 1

</llo_original>
